<compile_context>
chip_gen: v7x
topology: tpu7x:2x2x1
jax: 0.10.0
libtpu: 0.0.40
codegen_flags: <defaults>
</compile_context>

<pallas_src>
import functools

import jax
import jax.numpy as jnp
from jax.experimental import pallas as pl
from jax.experimental.pallas import tpu as pltpu

BN_EPS = 1e-05
RELUP_ALPHA = 0.014

# Row-tile target for the matmul kernels on the flattened (M = N*H*W, C) activations.
# 256 keeps a double-buffered (256, 2048) f32 tile ~4 MiB.  v6e (128 MiB VMEM): raise
# to 512.  v5e: 256-512 is fine once vmem_limit is raised above its 16 MiB default.
# v7x (64 MiB VMEM): keep at 256.
M_TILE_TARGET_MATMUL = 256
# Pure-streaming kernels (final BN+residual+relup): larger tiles recover the
# 63% -> 85% HBM-roofline gap.  1024 is fine on v6e; keep <= 512 on v7x.
M_TILE_TARGET_STREAM = 512
# Fits v5e (raised from its 16 MiB scoped default), v6e and v7x (32 MiB defaults).
VMEM_LIMIT_BYTES = 32 * 1024 * 1024
# f32 accumulator budget for one row chunk of the 3x3 conv (stays in vregs).
CONV_ACC_BUDGET_BYTES = 128 * 1024
# Constant-per-grid operands are single-buffered (no point double-buffering a block
# that never changes); flip to False if a jax version rejects pl.Buffered(1).
_SINGLE_BUFFER_CONSTS = True


# ----------------------------------------------------------------------------
# Small helpers
# ----------------------------------------------------------------------------
def _round_up(x, mult):
    return ((x + mult - 1) // mult) * mult


def _tile_and_pad(m, target):
    """Pick a row tile (multiple of 16, <= target).

    Prefers an exact divisor of m (no padding).  If none exists, returns a tile and
    a zero-padded row count m_pad (multiple of the tile) — never a full-array block.
    """
    best = 0
    d = 16
    while d <= min(m, target):
        if m % d == 0:
            best = d
        d += 16
    if best:
        return best, m
    tm = min(target, _round_up(m, 16))
    return tm, _round_up(m, tm)


def _pick_row_tile(ho, wo, cout, acc_budget_bytes=CONV_ACC_BUDGET_BYTES):
    """Largest divisor of ho whose (row_tile*wo, cout) f32 accumulator fits the budget."""
    max_rows = max(1, acc_budget_bytes // (4 * max(cout, 1)))
    best = 1
    for rt in range(1, ho + 1):
        if ho % rt == 0 and rt * wo <= max_rows:
            best = rt
    return best


def _compiler_params(dims):
    return pltpu.CompilerParams(
        dimension_semantics=dims,
        vmem_limit_bytes=VMEM_LIMIT_BYTES,
    )


def _const_spec(block_shape, index_map):
    """BlockSpec for operands whose block is identical at every grid step.

    Single-buffered (pl.Buffered(1)): the block is DMA'd once and stays VMEM
    resident, so double-buffering it only wastes VMEM.
    """
    if _SINGLE_BUFFER_CONSTS:
        try:
            return pl.BlockSpec(block_shape, index_map, pipeline_mode=pl.Buffered(1))
        except Exception:  # pragma: no cover - fallback for older BlockSpec signatures
            pass
    return pl.BlockSpec(block_shape, index_map)


# ----------------------------------------------------------------------------
# Kernels: 1x1 conv (matmul) + BN partial statistics
# ----------------------------------------------------------------------------
def _matmul_stats_kernel(x_ref, w_ref, y_ref, sum_ref, ssq_ref):
    """y = x @ w (f32 MXU accumulate) + per-tile per-channel sum / sum-of-squares.

    Zero-padded input rows (awkward M) produce zero output rows, so they do not
    perturb the BN statistics (count uses the true M).
    """
    x = x_ref[...].astype(w_ref.dtype)
    y = jnp.dot(x, w_ref[...], preferred_element_type=jnp.float32)
    y_ref[...] = y.astype(y_ref.dtype)                 # single store per tile
    sum_ref[...] = jnp.sum(y, axis=0, keepdims=True)
    ssq_ref[...] = jnp.sum(y * y, axis=0, keepdims=True)


def _matmul_bn_stats_kernel(x_ref, insc_ref, insh_ref, w_ref, y_ref, sum_ref, ssq_ref,
                            *, input_clamp, tm, m_valid, m_padded):
    """y = clamp(x*scale + shift, a) @ w  + stats.

    The previous stage's BN + relup is applied in the prologue so its raw conv
    output is read from HBM exactly once.  If rows were zero-padded, the padded
    rows (which become clamp(shift) != 0 after the prologue) are masked out of the
    statistics.
    """
    xf = x_ref[...].astype(jnp.float32) * insc_ref[...] + insh_ref[...]
    xf = jnp.maximum(xf, input_clamp)
    y = jnp.dot(xf.astype(w_ref.dtype), w_ref[...], preferred_element_type=jnp.float32)
    y_ref[...] = y.astype(y_ref.dtype)
    if m_padded != m_valid:                            # static: only when padded
        row = pl.program_id(0) * tm + jax.lax.broadcasted_iota(jnp.int32, (tm, 1), 0)
        y = jnp.where(row < m_valid, y, 0.0)
    sum_ref[...] = jnp.sum(y, axis=0, keepdims=True)
    ssq_ref[...] = jnp.sum(y * y, axis=0, keepdims=True)


# ----------------------------------------------------------------------------
# Kernels: 3x3 conv (fused stage-a BN + relup + zero padding) + BN partial stats
# ----------------------------------------------------------------------------
def _accumulate_taps(tap_window, w_ref, y_ref, sum_ref, ssq_ref, *, ho, wo, cout, row_tile):
    """Row-chunked 9-tap accumulation.

    Bounds the live f32 accumulator to (row_tile*wo, cout) so it stays in vregs
    instead of spilling to VMEM between taps.  Uses lax.fori_loop so live ranges are
    bounded and per-chunk y / stats are emitted as we go.
    """
    n_chunks = ho // row_tile
    chunk_rows = row_tile * wo

    def chunk(c, carry):
        s_acc, q_acc = carry
        r0 = c * row_tile
        acc = jnp.zeros((chunk_rows, cout), jnp.float32)
        for t in range(9):                               # static: 9 MXU pushes per chunk
            win = tap_window(t, r0)                      # (row_tile, wo, cin), contiguous
            acc = acc + jnp.dot(win.reshape(chunk_rows, win.shape[-1]), w_ref[t],
                                preferred_element_type=jnp.float32)
        y_ref[pl.ds(c * chunk_rows, chunk_rows), :] = acc.astype(y_ref.dtype)
        s_acc = s_acc + jnp.sum(acc, axis=0, keepdims=True)
        q_acc = q_acc + jnp.sum(acc * acc, axis=0, keepdims=True)
        return s_acc, q_acc

    zero = jnp.zeros((1, cout), jnp.float32)
    s_tot, q_tot = jax.lax.fori_loop(0, n_chunks, chunk, (zero, zero))
    sum_ref[...] = s_tot
    ssq_ref[...] = q_tot


def _conv3x3_s1_kernel(x_ref, sc_ref, sh_ref, w_ref, y_ref, sum_ref, ssq_ref, pad_ref,
                       *, h, w, cout, row_tile, alpha):
    """Stride-1 3x3 conv on one image.

    x_ref:   (h, w, Cin) raw stage-a output (compute dtype).
    pad_ref: (h+2, w+2, Cin) VMEM scratch — zeroed, then the BN+relup'd image is
             written at offset (1, 1); the halo stays zero (the conv's zero padding).
    """
    cb = x_ref.shape[-1]
    sc = sc_ref[...].reshape(1, 1, cb)
    sh = sh_ref[...].reshape(1, 1, cb)
    pad_ref[...] = jnp.zeros_like(pad_ref)       # only the halo needs this; whole is cheap VMEM
    act = jnp.maximum(x_ref[...].astype(jnp.float32) * sc + sh, alpha)
    pad_ref[pl.ds(1, h), pl.ds(1, w), :] = act.astype(pad_ref.dtype)

    def tap_window(t, r0):
        dh, dw = divmod(t, 3)
        return pad_ref[pl.ds(r0 + dh, row_tile), pl.ds(dw, w), :]

    _accumulate_taps(tap_window, w_ref, y_ref, sum_ref, ssq_ref,
                     ho=h, wo=w, cout=cout, row_tile=row_tile)


def _conv3x3_s2_kernel(p00_ref, p01_ref, p10_ref, p11_ref, sc_ref, sh_ref, w_ref,
                       y_ref, sum_ref, ssq_ref, s00, s01, s10, s11,
                       *, ho, wo, cout, row_tile, alpha):
    """Stride-2 3x3 conv on one image, via (row, col) parity planes.

    Plane (p, q) holds padded-image coordinates with row parity p / col parity q, so
    every tap (dh, dw) is a *contiguous* window of plane (dh%2, dw%2) starting at
    (dh//2, dw//2) — no strided reads.  At stride 2 only the top row / left column
    of the padded image is ever touched, so only planes with parity 0 need a 1-row /
    1-col zero halo.
    """
    cb = p00_ref.shape[-1]
    sc = sc_ref[...].reshape(1, 1, cb)
    sh = sh_ref[...].reshape(1, 1, cb)

    def bn(v):
        return jnp.maximum(v.astype(jnp.float32) * sc + sh, alpha)

    s00[...] = jnp.zeros_like(s00)
    s01[...] = jnp.zeros_like(s01)
    s10[...] = jnp.zeros_like(s10)
    s00[pl.ds(1, ho), pl.ds(1, wo), :] = bn(p00_ref[...]).astype(s00.dtype)
    s01[pl.ds(1, ho), :, :] = bn(p01_ref[...]).astype(s01.dtype)
    s10[:, pl.ds(1, wo), :] = bn(p10_ref[...]).astype(s10.dtype)
    s11[...] = bn(p11_ref[...]).astype(s11.dtype)

    planes = {(0, 0): s00, (0, 1): s01, (1, 0): s10, (1, 1): s11}

    def tap_window(t, r0):
        dh, dw = divmod(t, 3)
        plane = planes[(dh % 2, dw % 2)]
        return plane[pl.ds(r0 + dh // 2, row_tile), pl.ds(dw // 2, wo), :]

    _accumulate_taps(tap_window, w_ref, y_ref, sum_ref, ssq_ref,
                     ho=ho, wo=wo, cout=cout, row_tile=row_tile)


# ----------------------------------------------------------------------------
# Kernels: final fused BN(+residual BN) + residual add + relup
# ----------------------------------------------------------------------------
def _bn_res_proj_kernel(y_ref, sc_ref, sh_ref, r_ref, rsc_ref, rsh_ref, o_ref, *, clamp):
    y = y_ref[...].astype(jnp.float32) * sc_ref[...] + sh_ref[...]
    r = r_ref[...].astype(jnp.float32) * rsc_ref[...] + rsh_ref[...]
    o_ref[...] = jnp.maximum(y + r, clamp).astype(o_ref.dtype)


def _bn_res_identity_kernel(y_ref, sc_ref, sh_ref, r_ref, o_ref, *, clamp):
    y = y_ref[...].astype(jnp.float32) * sc_ref[...] + sh_ref[...]
    o_ref[...] = jnp.maximum(y + r_ref[...].astype(jnp.float32), clamp).astype(o_ref.dtype)


# ----------------------------------------------------------------------------
# pallas_call wrappers
# ----------------------------------------------------------------------------
def matmul_stats(x2d, w2d, *, in_scale=None, in_shift=None, in_clamp=0.0,
                 out_dtype=None, m_tile_target=M_TILE_TARGET_MATMUL):
    m, k = x2d.shape
    n = w2d.shape[1]
    out_dtype = x2d.dtype if out_dtype is None else out_dtype
    tm, m_pad = _tile_and_pad(m, m_tile_target)
    if m_pad != m:
        x2d = jnp.pad(x2d, ((0, m_pad - m), (0, 0)))
    grid = (m_pad // tm,)

    x_spec = pl.BlockSpec((tm, k), lambda i: (i, 0))
    w_spec = _const_spec((k, n), lambda i: (0, 0))      # weight stays VMEM-resident
    if in_scale is not None:
        kernel = functools.partial(_matmul_bn_stats_kernel, input_clamp=in_clamp,
                                   tm=tm, m_valid=m, m_padded=m_pad)
        in_specs = [x_spec,
                    _const_spec((1, k), lambda i: (0, 0)),
                    _const_spec((1, k), lambda i: (0, 0)),
                    w_spec]
        operands = (x2d, in_scale, in_shift, w2d)
    else:
        kernel = _matmul_stats_kernel
        in_specs = [x_spec, w_spec]
        operands = (x2d, w2d)

    y, s, ss = pl.pallas_call(
        kernel,
        grid=grid,
        in_specs=in_specs,
        out_specs=(
            pl.BlockSpec((tm, n), lambda i: (i, 0)),
            pl.BlockSpec((None, 1, n), lambda i: (i, 0, 0)),
            pl.BlockSpec((None, 1, n), lambda i: (i, 0, 0)),
        ),
        out_shape=(
            jax.ShapeDtypeStruct((m_pad, n), out_dtype),
            jax.ShapeDtypeStruct((grid[0], 1, n), jnp.float32),
            jax.ShapeDtypeStruct((grid[0], 1, n), jnp.float32),
        ),
        compiler_params=_compiler_params(("parallel",)),
    )(*operands)
    return (y[:m] if m_pad != m else y), s, ss


def conv3x3_bn_stats(y_a, scale_a, shift_a, w9, *, stride, alpha, out_dtype):
    """Fused: BN_a + relup + zero-pad + 3x3 conv (stride) + BN partial stats."""
    n, h, w, cb = y_a.shape
    cout = w9.shape[2]
    ho = (h - 1) // stride + 1
    wo = (w - 1) // stride + 1
    row_tile = _pick_row_tile(ho, wo, cout)

    out_shape = (
        jax.ShapeDtypeStruct((n, ho * wo, cout), out_dtype),
        jax.ShapeDtypeStruct((n, 1, cout), jnp.float32),
        jax.ShapeDtypeStruct((n, 1, cout), jnp.float32),
    )
    out_specs = (
        pl.BlockSpec((None, ho * wo, cout), lambda i: (i, 0, 0)),
        pl.BlockSpec((None, 1, cout), lambda i: (i, 0, 0)),
        pl.BlockSpec((None, 1, cout), lambda i: (i, 0, 0)),
    )
    const_in = [
        _const_spec((1, cb), lambda i: (0, 0)),
        _const_spec((1, cb), lambda i: (0, 0)),
        _const_spec((9, cb, cout), lambda i: (0, 0, 0)),   # folded taps, VMEM-resident
    ]

    if stride == 1:
        kernel = functools.partial(_conv3x3_s1_kernel, h=h, w=w, cout=cout,
                                   row_tile=row_tile, alpha=alpha)
        return pl.pallas_call(
            kernel,
            grid=(n,),
            in_specs=[pl.BlockSpec((None, h, w, cb), lambda i: (i, 0, 0, 0))] + const_in,
            out_specs=out_specs,
            out_shape=out_shape,
            scratch_shapes=[pltpu.VMEM((h + 2, w + 2, cb), y_a.dtype)],
            compiler_params=_compiler_params(("parallel",)),
        )(y_a, scale_a, shift_a, w9)

    if stride == 2:
        assert h % 2 == 0 and w % 2 == 0, "stride-2 path assumes even spatial dims"
        # Parity split with cheap XLA strided slices (one HBM pass).  This replaces the
        # v2 jnp.pad + bn_apply passes and makes every in-kernel window read contiguous.
        p00 = y_a[:, 1::2, 1::2, :]
        p01 = y_a[:, 1::2, 0::2, :]
        p10 = y_a[:, 0::2, 1::2, :]
        p11 = y_a[:, 0::2, 0::2, :]
        plane_spec = pl.BlockSpec((None, ho, wo, cb), lambda i: (i, 0, 0, 0))
        kernel = functools.partial(_conv3x3_s2_kernel, ho=ho, wo=wo, cout=cout,
                                   row_tile=row_tile, alpha=alpha)
        return pl.pallas_call(
            kernel,
            grid=(n,),
            in_specs=[plane_spec, plane_spec, plane_spec, plane_spec] + const_in,
            out_specs=out_specs,
            out_shape=out_shape,
            scratch_shapes=[
                pltpu.VMEM((ho + 1, wo + 1, cb), y_a.dtype),
                pltpu.VMEM((ho + 1, wo, cb), y_a.dtype),
                pltpu.VMEM((ho, wo + 1, cb), y_a.dtype),
                pltpu.VMEM((ho, wo, cb), y_a.dtype),
            ],
            compiler_params=_compiler_params(("parallel",)),
        )(p00, p01, p10, p11, scale_a, shift_a, w9)

    raise NotImplementedError("stride must be 1 or 2")


def bn_residual(y2d, scale, shift, r2d, r_scale=None, r_shift=None, *, clamp, out_dtype,
                m_tile_target=M_TILE_TARGET_STREAM):
    """Final fused pass: BN_c apply (+ projection-BN apply) + residual add + relup."""
    m, nch = y2d.shape
    tm, m_pad = _tile_and_pad(m, m_tile_target)
    if m_pad != m:
        y2d = jnp.pad(y2d, ((0, m_pad - m), (0, 0)))
        r2d = jnp.pad(r2d, ((0, m_pad - m), (0, 0)))

    act_spec = pl.BlockSpec((tm, nch), lambda i: (i, 0))
    vec_spec = _const_spec((1, nch), lambda i: (0, 0))
    if r_scale is not None:
        kernel = functools.partial(_bn_res_proj_kernel, clamp=clamp)
        in_specs = [act_spec, vec_spec, vec_spec, act_spec, vec_spec, vec_spec]
        operands = (y2d, scale, shift, r2d, r_scale, r_shift)
    else:
        # Identity residual: no residual-BN multiply/adds, no dummy scale/shift DMAs.
        kernel = functools.partial(_bn_res_identity_kernel, clamp=clamp)
        in_specs = [act_spec, vec_spec, vec_spec, act_spec]
        operands = (y2d, scale, shift, r2d)

    out = pl.pallas_call(
        kernel,
        grid=(m_pad // tm,),
        in_specs=in_specs,
        out_specs=pl.BlockSpec((tm, nch), lambda i: (i, 0)),
        out_shape=jax.ShapeDtypeStruct((m_pad, nch), out_dtype),
        compiler_params=_compiler_params(("parallel",)),
    )(*operands)
    return out[:m] if m_pad != m else out


# ----------------------------------------------------------------------------
# Glue: weight folding and BN finalization (tiny arrays, plain JAX)
# ----------------------------------------------------------------------------
def _fold_1x1(w_oihw, dtype):
    # (Cout, Cin, 1, 1) -> (Cin, Cout)
    return jnp.transpose(w_oihw[:, :, 0, 0], (1, 0)).astype(dtype)


def _fold_3x3(w_oihw, dtype):
    # (Cout, Cin, 3, 3) -> (9, Cin, Cout); tap index = dh*3 + dw
    co, ci, kh, kw = w_oihw.shape
    return jnp.transpose(w_oihw, (2, 3, 1, 0)).reshape(kh * kw, ci, co).astype(dtype)


def _bn_scale_shift(sum_part, sumsq_part, count, gamma, beta, eps=BN_EPS):
    """Reduce per-tile partials -> fused (scale, shift) for training-mode BatchNorm.

    var = E[y^2] - mean^2 in f32; for extremely large counts a centered second pass
    would be safer (noted in review), negligible at ResNet scales.
    """
    s = jnp.sum(sum_part, axis=(0, 1))
    ss = jnp.sum(sumsq_part, axis=(0, 1))
    mean = s / count
    var = jnp.maximum(ss / count - mean * mean, 0.0)
    scale = gamma * jax.lax.rsqrt(var + eps)
    shift = beta - mean * scale
    return scale.reshape(1, -1), shift.reshape(1, -1)


# ----------------------------------------------------------------------------
# ResBlock (Pallas)
# ----------------------------------------------------------------------------
class ResBlockPallas:
    """ResBlock(w_in, w_out, stride, BottleneckTransform, w_b, num_gs=1, relup_)."""

    def __init__(self, key, w_in, w_out, stride, w_b, relup_=True,
                 compute_dtype=jnp.bfloat16, out_dtype=None, nchw_io=True):
        self.w_in, self.w_out, self.stride, self.w_b = w_in, w_out, stride, w_b
        self.proj_block = (w_in != w_out) or (stride != 1)
        self.alpha_inner = RELUP_ALPHA if relup_ else 0.0
        self.alpha_final = RELUP_ALPHA if (relup_ and w_out != 2048) else 0.0
        self.compute_dtype = compute_dtype
        # bf16 output halves the final (memory-bound) store; f32 when computing in f32.
        self.out_dtype = compute_dtype if out_dtype is None else out_dtype
        self.nchw_io = nchw_io           # False => NHWC in/out (skip transposes when chaining)

        ks = jax.random.split(key, 12)

        def winit(k, shape, fan_in):
            return jax.random.normal(k, shape, jnp.float32) * (2.0 / fan_in) ** 0.5

        def bninit(kg, kb, c):
            g = 1.0 + 0.1 * jax.random.normal(kg, (c,), jnp.float32)
            b = 0.1 * jax.random.normal(kb, (c,), jnp.float32)
            return g, b

        if self.proj_block:
            self.w_proj = winit(ks[0], (w_out, w_in, 1, 1), w_in)
            self.g_proj, self.b_proj = bninit(ks[1], ks[2], w_out)
        self.w_a = winit(ks[3], (w_b, w_in, 1, 1), w_in)
        self.g_a, self.b_a = bninit(ks[4], ks[5], w_b)
        self.w_b_ = winit(ks[6], (w_b, w_b, 3, 3), w_b * 9)
        self.g_b, self.b_b = bninit(ks[7], ks[8], w_b)
        self.w_c = winit(ks[9], (w_out, w_b, 1, 1), w_b)
        self.g_c, self.b_c = bninit(ks[10], ks[11], w_out)

    def __call__(self, x):
        cd = self.compute_dtype
        if self.nchw_io:
            x = jnp.transpose(x, (0, 2, 3, 1))        # NCHW -> NHWC (layout plumbing)
        n, h, w, cin = x.shape
        assert cin == self.w_in
        s = self.stride
        ho = (h - 1) // s + 1
        wo = (w - 1) // s + 1
        m_in = n * h * w
        m_out = n * ho * wo

        # The input is fed to the matmul kernels in its stored dtype; the cast to the
        # MXU compute dtype happens in-kernel (avoids an extra full-HBM cast pass).
        x2d = x.reshape(m_in, cin)

        # ----- f(x) stage a: 1x1 conv + BN partial stats (pass 1 of two-pass BN) -----
        y_a2d, sa, ssa = matmul_stats(x2d, _fold_1x1(self.w_a, cd), out_dtype=cd)
        scale_a, shift_a = _bn_scale_shift(sa, ssa, m_in, self.g_a, self.b_a)

        # ----- f(x) stage b: BN_a + relup + zero-pad + 3x3 conv (stride) + stats,
        #       all fused into one kernel pass over the stage-a activation -----
        y_b, sb, ssb = conv3x3_bn_stats(y_a2d.reshape(n, h, w, self.w_b),
                                        scale_a, shift_a, _fold_3x3(self.w_b_, cd),
                                        stride=s, alpha=self.alpha_inner, out_dtype=cd)
        scale_b, shift_b = _bn_scale_shift(sb, ssb, m_out, self.g_b, self.b_b)

        # ----- f(x) stage c: BN_b + relup fused into the matmul prologue, 1x1 conv + stats -----
        y_c, scc, ssc = matmul_stats(y_b.reshape(m_out, self.w_b), _fold_1x1(self.w_c, cd),
                                     in_scale=scale_b, in_shift=shift_b,
                                     in_clamp=self.alpha_inner, out_dtype=cd)
        scale_c, shift_c = _bn_scale_shift(scc, ssc, m_out, self.g_c, self.b_c)

        # ----- residual branch + final fused BN / add / relup (single store per tile) -----
        if self.proj_block:
            xs2d = x[:, ::s, ::s, :].reshape(m_out, self.w_in)
            y_p, sp, ssp = matmul_stats(xs2d, _fold_1x1(self.w_proj, cd), out_dtype=cd)
            scale_r, shift_r = _bn_scale_shift(sp, ssp, m_out, self.g_proj, self.b_proj)
            out2d = bn_residual(y_c, scale_c, shift_c, y_p, scale_r, shift_r,
                                clamp=self.alpha_final, out_dtype=self.out_dtype)
        else:
            out2d = bn_residual(y_c, scale_c, shift_c, x.reshape(m_out, self.w_out),
                                clamp=self.alpha_final, out_dtype=self.out_dtype)

        out = out2d.reshape(n, ho, wo, self.w_out)
        if self.nchw_io:
            out = jnp.transpose(out, (0, 3, 1, 2))    # NHWC -> NCHW for PyTorch parity
        return out


# ----------------------------------------------------------------------------
# Pure-JAX reference (lax.conv, NCHW) for correctness checks
# ----------------------------------------------------------------------------
def _conv(x, w, stride, pad):
    return jax.lax.conv_general_dilated(
        x, w, (stride, stride), [(pad, pad), (pad, pad)],
        dimension_numbers=('NCHW', 'OIHW', 'NCHW'))


def _bn_train(x, g, b, eps=BN_EPS):
    mean = x.mean(axis=(0, 2, 3), keepdims=True)
    var = ((x - mean) ** 2).mean(axis=(0, 2, 3), keepdims=True)
    return ((x - mean) * jax.lax.rsqrt(var + eps)
            * g.reshape(1, -1, 1, 1) + b.reshape(1, -1, 1, 1))


def resblock_ref(m: ResBlockPallas, x):
    x = x.astype(jnp.float32)
    ya = jnp.maximum(_bn_train(_conv(x, m.w_a, 1, 0), m.g_a, m.b_a), m.alpha_inner)
    yb = jnp.maximum(_bn_train(_conv(ya, m.w_b_, m.stride, 1), m.g_b, m.b_b), m.alpha_inner)
    yc = _bn_train(_conv(yb, m.w_c, 1, 0), m.g_c, m.b_c)
    if m.proj_block:
        res = _bn_train(_conv(x, m.w_proj, m.stride, 0), m.g_proj, m.b_proj)
    else:
        res = x
    return jnp.maximum(res + yc, m.alpha_final)


# ----------------------------------------------------------------------------
if __name__ == "__main__":
    key = jax.random.PRNGKey(0)
    k1, k2, kx1, kx2 = jax.random.split(key, 4)

    # Config 1: projection block (w_in != w_out, stride 2), like
    # ResBlock(4, 8, stride=2, BottleneckTransform, w_b=4, num_gs=1, relup_=True).
    x1 = jax.random.normal(kx1, (2, 4, 16, 16), jnp.float32)     # NCHW, like PyTorch

    # f32 compute path: strict check against the lax.conv reference.
    blk1_f32 = ResBlockPallas(k1, w_in=4, w_out=8, stride=2, w_b=4, relup_=True,
                              compute_dtype=jnp.float32)
    out1 = jax.block_until_ready(jax.jit(blk1_f32)(x1))
    ref1 = jax.block_until_ready(resblock_ref(blk1_f32, x1))
    assert out1.shape == (2, 8, 8, 8), out1.shape
    err1 = float(jnp.max(jnp.abs(out1 - ref1)))
    assert err1 < 5e-4, err1

    # Config 2: identity block (w_in == w_out, stride 1) — exercises the stride-1
    # conv path and the no-residual-BN final kernel.
    x2 = jax.random.normal(kx2, (2, 8, 16, 16), jnp.float32)
    blk2_f32 = ResBlockPallas(k2, w_in=8, w_out=8, stride=1, w_b=4, relup_=True,
                              compute_dtype=jnp.float32)
    out2 = jax.block_until_ready(jax.jit(blk2_f32)(x2))
    ref2 = jax.block_until_ready(resblock_ref(blk2_f32, x2))
    assert out2.shape == (2, 8, 16, 16), out2.shape
    err2 = float(jnp.max(jnp.abs(out2 - ref2)))
    assert err2 < 5e-4, err2

    # bf16 MXU / bf16 intermediate-activation path on config 1 (looser tolerance;
    # the final store is bf16 as well).
    blk1_bf16 = ResBlockPallas(k1, w_in=4, w_out=8, stride=2, w_b=4, relup_=True,
                               compute_dtype=jnp.bfloat16)
    out3 = jax.block_until_ready(jax.jit(blk1_bf16)(x1))
    assert out3.shape == (2, 8, 8, 8), out3.shape
    err3 = float(jnp.max(jnp.abs(out3.astype(jnp.float32) - ref1)))
    assert err3 < 0.3, err3

    print("KERNEL_OK")
</pallas_src>

<mosaic_0001>
module attributes {stable_mosaic.version = 11 : i64} {
  func.func @_matmul_stats_kernel(%arg0: i32, %arg1: memref<256x4xf32, #tpu.memory_space<vmem>>, %arg2: memref<4x4xf32, #tpu.memory_space<vmem>>, %arg3: memref<256x4xf32, #tpu.memory_space<vmem>>, %arg4: memref<1x1x4xf32, #tpu.memory_space<vmem>>, %arg5: memref<1x1x4xf32, #tpu.memory_space<vmem>>) attributes {dimension_semantics = [#tpu.dimension_semantics<parallel>], iteration_bounds = array<i64: 2>, scalar_prefetch = 0 : i64, scratch_operands = 0 : i64, tpu.core_type = #tpu.core_type<tc>, window_params = [{transform_indices = @transform_0, window_bounds = array<i64: 256, 4>}, {pipeline_mode = #tpu.pipeline_mode<synchronous>, transform_indices = @transform_1, window_bounds = array<i64: 4, 4>}, {transform_indices = @transform_2, window_bounds = array<i64: 256, 4>}, {transform_indices = @transform_3, window_bounds = array<i64: 1, 1, 4>}, {transform_indices = @transform_4, window_bounds = array<i64: 1, 1, 4>}]} {
    %c0 = arith.constant 0 : index
    %c0_0 = arith.constant 0 : index
    %0 = vector.load %arg1[%c0, %c0_0] : memref<256x4xf32, #tpu.memory_space<vmem>>, vector<256x4xf32>
    %c0_1 = arith.constant 0 : index
    %c0_2 = arith.constant 0 : index
    %1 = vector.load %arg2[%c0_1, %c0_2] : memref<4x4xf32, #tpu.memory_space<vmem>>, vector<4x4xf32>
    %cst = arith.constant dense<0.000000e+00> : vector<256x4xf32>
    %2 = tpu.matmul %0, %1, %cst {dimension_numbers = #tpu.dot_dimension_numbers<[1], [0], [0], [1], [0, 0, 1, 1], [], []>} : vector<256x4xf32>, vector<4x4xf32>, vector<256x4xf32> -> vector<256x4xf32>
    %c0_3 = arith.constant 0 : index
    %c0_4 = arith.constant 0 : index
    %3 = vector.load %arg3[%c0_3, %c0_4] : memref<256x4xf32, #tpu.memory_space<vmem>>, vector<256x4xf32>
    tpu.vector_store %arg3[%c0_3, %c0_4], %2 {strides = array<i32>} : memref<256x4xf32, #tpu.memory_space<vmem>>, vector<256x4xf32>,
    %cst_5 = arith.constant dense<0.000000e+00> : vector<4xf32>
    %4 = vector.multi_reduction <add>, %2, %cst_5 [0] : vector<256x4xf32> to vector<4xf32>
    %5 = vector.shape_cast %4 : vector<4xf32> to vector<1x4xf32>
    %c0_6 = arith.constant 0 : index
    %c0_7 = arith.constant 0 : index
    %c0_8 = arith.constant 0 : index
    %6 = vector.load %arg4[%c0_6, %c0_7, %c0_8] : memref<1x1x4xf32, #tpu.memory_space<vmem>>, vector<1x1x4xf32>
    %7 = vector.shape_cast %6 : vector<1x1x4xf32> to vector<1x4xf32>
    %8 = vector.shape_cast %5 : vector<1x4xf32> to vector<1x1x4xf32>
    tpu.vector_store %arg4[%c0_6, %c0_7, %c0_8], %8 {strides = array<i32>} : memref<1x1x4xf32, #tpu.memory_space<vmem>>, vector<1x1x4xf32>,
    %9 = arith.mulf %2, %2 : vector<256x4xf32>
    %cst_9 = arith.constant dense<0.000000e+00> : vector<4xf32>
    %10 = vector.multi_reduction <add>, %9, %cst_9 [0] : vector<256x4xf32> to vector<4xf32>
    %11 = vector.shape_cast %10 : vector<4xf32> to vector<1x4xf32>
    %c0_10 = arith.constant 0 : index
    %c0_11 = arith.constant 0 : index
    %c0_12 = arith.constant 0 : index
    %12 = vector.load %arg5[%c0_10, %c0_11, %c0_12] : memref<1x1x4xf32, #tpu.memory_space<vmem>>, vector<1x1x4xf32>
    %13 = vector.shape_cast %12 : vector<1x1x4xf32> to vector<1x4xf32>
    %14 = vector.shape_cast %11 : vector<1x4xf32> to vector<1x1x4xf32>
    tpu.vector_store %arg5[%c0_10, %c0_11, %c0_12], %14 {strides = array<i32>} : memref<1x1x4xf32, #tpu.memory_space<vmem>>, vector<1x1x4xf32>,
    return
  }
  func.func @transform_0(%arg0: i32) -> (i32, i32) {
    %c0_i32 = arith.constant 0 : i32
    %c0_i32_0 = arith.constant 0 : i32
    return %arg0, %c0_i32 : i32, i32
  }
  func.func @transform_1(%arg0: i32) -> (i32, i32) {
    %c0_i32 = arith.constant 0 : i32
    %c0_i32_0 = arith.constant 0 : i32
    %c0_i32_1 = arith.constant 0 : i32
    return %c0_i32, %c0_i32_0 : i32, i32
  }
  func.func @transform_2(%arg0: i32) -> (i32, i32) {
    %c0_i32 = arith.constant 0 : i32
    %c0_i32_0 = arith.constant 0 : i32
    return %arg0, %c0_i32 : i32, i32
  }
  func.func @transform_3(%arg0: i32) -> (i32, i32, i32) {
    %c0_i32 = arith.constant 0 : i32
    %c0_i32_0 = arith.constant 0 : i32
    %c0_i32_1 = arith.constant 0 : i32
    return %arg0, %c0_i32, %c0_i32_0 : i32, i32, i32
  }
  func.func @transform_4(%arg0: i32) -> (i32, i32, i32) {
    %c0_i32 = arith.constant 0 : i32
    %c0_i32_0 = arith.constant 0 : i32
    %c0_i32_1 = arith.constant 0 : i32
    return %arg0, %c0_i32, %c0_i32_0 : i32, i32, i32
  }
}

module attributes {stable_mosaic.version = 11 : i64} {
  func.func @_conv3x3_s2_kernel(%arg0: i32, %arg1: memref<1x8x8x4xf32, #tpu.memory_space<vmem>>, %arg2: memref<1x8x8x4xf32, #tpu.memory_space<vmem>>, %arg3: memref<1x8x8x4xf32, #tpu.memory_space<vmem>>, %arg4: memref<1x8x8x4xf32, #tpu.memory_space<vmem>>, %arg5: memref<1x4xf32, #tpu.memory_space<vmem>>, %arg6: memref<1x4xf32, #tpu.memory_space<vmem>>, %arg7: memref<9x4x4xf32, #tpu.memory_space<vmem>>, %arg8: memref<1x64x4xf32, #tpu.memory_space<vmem>>, %arg9: memref<1x1x4xf32, #tpu.memory_space<vmem>>, %arg10: memref<1x1x4xf32, #tpu.memory_space<vmem>>, %arg11: memref<9x9x4xf32, #tpu.memory_space<vmem>>, %arg12: memref<9x8x4xf32, #tpu.memory_space<vmem>>, %arg13: memref<8x9x4xf32, #tpu.memory_space<vmem>>, %arg14: memref<8x8x4xf32, #tpu.memory_space<vmem>>) attributes {dimension_semantics = [#tpu.dimension_semantics<parallel>], iteration_bounds = array<i64: 2>, scalar_prefetch = 0 : i64, scratch_operands = 4 : i64, tpu.core_type = #tpu.core_type<tc>, window_params = [{transform_indices = @transform_0, window_bounds = array<i64: 1, 8, 8, 4>}, {transform_indices = @transform_1, window_bounds = array<i64: 1, 8, 8, 4>}, {transform_indices = @transform_2, window_bounds = array<i64: 1, 8, 8, 4>}, {transform_indices = @transform_3, window_bounds = array<i64: 1, 8, 8, 4>}, {pipeline_mode = #tpu.pipeline_mode<synchronous>, transform_indices = @transform_4, window_bounds = array<i64: 1, 4>}, {pipeline_mode = #tpu.pipeline_mode<synchronous>, transform_indices = @transform_5, window_bounds = array<i64: 1, 4>}, {pipeline_mode = #tpu.pipeline_mode<synchronous>, transform_indices = @transform_6, window_bounds = array<i64: 9, 4, 4>}, {transform_indices = @transform_7, window_bounds = array<i64: 1, 64, 4>}, {transform_indices = @transform_8, window_bounds = array<i64: 1, 1, 4>}, {transform_indices = @transform_9, window_bounds = array<i64: 1, 1, 4>}]} {
    %c0 = arith.constant 0 : index
    %c0_0 = arith.constant 0 : index
    %0 = vector.load %arg5[%c0, %c0_0] : memref<1x4xf32, #tpu.memory_space<vmem>>, vector<1x4xf32>
    %1 = vector.shape_cast %0 : vector<1x4xf32> to vector<1x1x4xf32>
    %c0_1 = arith.constant 0 : index
    %c0_2 = arith.constant 0 : index
    %2 = vector.load %arg6[%c0_1, %c0_2] : memref<1x4xf32, #tpu.memory_space<vmem>>, vector<1x4xf32>
    %3 = vector.shape_cast %2 : vector<1x4xf32> to vector<1x1x4xf32>
    %cst = arith.constant 0.000000e+00 : f32
    %4 = vector.broadcast %cst : f32 to vector<9x9x4xf32>
    %c0_3 = arith.constant 0 : index
    %c0_4 = arith.constant 0 : index
    %c0_5 = arith.constant 0 : index
    %5 = vector.load %arg11[%c0_3, %c0_4, %c0_5] : memref<9x9x4xf32, #tpu.memory_space<vmem>>, vector<9x9x4xf32>
    tpu.vector_store %arg11[%c0_3, %c0_4, %c0_5], %4 {strides = array<i32>} : memref<9x9x4xf32, #tpu.memory_space<vmem>>, vector<9x9x4xf32>,
    %cst_6 = arith.constant 0.000000e+00 : f32
    %6 = vector.broadcast %cst_6 : f32 to vector<9x8x4xf32>
    %c0_7 = arith.constant 0 : index
    %c0_8 = arith.constant 0 : index
    %c0_9 = arith.constant 0 : index
    %7 = vector.load %arg12[%c0_7, %c0_8, %c0_9] : memref<9x8x4xf32, #tpu.memory_space<vmem>>, vector<9x8x4xf32>
    tpu.vector_store %arg12[%c0_7, %c0_8, %c0_9], %6 {strides = array<i32>} : memref<9x8x4xf32, #tpu.memory_space<vmem>>, vector<9x8x4xf32>,
    %cst_10 = arith.constant 0.000000e+00 : f32
    %8 = vector.broadcast %cst_10 : f32 to vector<8x9x4xf32>
    %c0_11 = arith.constant 0 : index
    %c0_12 = arith.constant 0 : index
    %c0_13 = arith.constant 0 : index
    %9 = vector.load %arg13[%c0_11, %c0_12, %c0_13] : memref<8x9x4xf32, #tpu.memory_space<vmem>>, vector<8x9x4xf32>
    tpu.vector_store %arg13[%c0_11, %c0_12, %c0_13], %8 {strides = array<i32>} : memref<8x9x4xf32, #tpu.memory_space<vmem>>, vector<8x9x4xf32>,
    %c0_14 = arith.constant 0 : index
    %c0_15 = arith.constant 0 : index
    %c0_16 = arith.constant 0 : index
    %c0_17 = arith.constant 0 : index
    %10 = vector.load %arg1[%c0_14, %c0_15, %c0_16, %c0_17] : memref<1x8x8x4xf32, #tpu.memory_space<vmem>>, vector<1x8x8x4xf32>
    %11 = vector.shape_cast %10 : vector<1x8x8x4xf32> to vector<8x8x4xf32>
    %12 = vector.broadcast %1 : vector<1x1x4xf32> to vector<8x8x4xf32>
    %13 = arith.mulf %11, %12 : vector<8x8x4xf32>
    %14 = vector.broadcast %3 : vector<1x1x4xf32> to vector<8x8x4xf32>
    %15 = arith.addf %13, %14 : vector<8x8x4xf32>
    %cst_18 = arith.constant 1.400000e-02 : f32
    %16 = vector.broadcast %cst_18 : f32 to vector<8x8x4xf32>
    %17 = arith.maximumf %15, %16 : vector<8x8x4xf32>
    %c1 = arith.constant 1 : index
    %c1_19 = arith.constant 1 : index
    %c0_20 = arith.constant 0 : index
    %18 = vector.load %arg11[%c1, %c1_19, %c0_20] : memref<9x9x4xf32, #tpu.memory_space<vmem>>, vector<8x8x4xf32>
    tpu.vector_store %arg11[%c1, %c1_19, %c0_20], %17 {strides = array<i32>} : memref<9x9x4xf32, #tpu.memory_space<vmem>>, vector<8x8x4xf32>,
    %c0_21 = arith.constant 0 : index
    %c0_22 = arith.constant 0 : index
    %c0_23 = arith.constant 0 : index
    %c0_24 = arith.constant 0 : index
    %19 = vector.load %arg2[%c0_21, %c0_22, %c0_23, %c0_24] : memref<1x8x8x4xf32, #tpu.memory_space<vmem>>, vector<1x8x8x4xf32>
    %20 = vector.shape_cast %19 : vector<1x8x8x4xf32> to vector<8x8x4xf32>
    %21 = vector.broadcast %1 : vector<1x1x4xf32> to vector<8x8x4xf32>
    %22 = arith.mulf %20, %21 : vector<8x8x4xf32>
    %23 = vector.broadcast %3 : vector<1x1x4xf32> to vector<8x8x4xf32>
    %24 = arith.addf %22, %23 : vector<8x8x4xf32>
    %cst_25 = arith.constant 1.400000e-02 : f32
    %25 = vector.broadcast %cst_25 : f32 to vector<8x8x4xf32>
    %26 = arith.maximumf %24, %25 : vector<8x8x4xf32>
    %c1_26 = arith.constant 1 : index
    %c0_27 = arith.constant 0 : index
    %c0_28 = arith.constant 0 : index
    %27 = vector.load %arg12[%c1_26, %c0_27, %c0_28] : memref<9x8x4xf32, #tpu.memory_space<vmem>>, vector<8x8x4xf32>
    tpu.vector_store %arg12[%c1_26, %c0_27, %c0_28], %26 {strides = array<i32>} : memref<9x8x4xf32, #tpu.memory_space<vmem>>, vector<8x8x4xf32>,
    %c0_29 = arith.constant 0 : index
    %c0_30 = arith.constant 0 : index
    %c0_31 = arith.constant 0 : index
    %c0_32 = arith.constant 0 : index
    %28 = vector.load %arg3[%c0_29, %c0_30, %c0_31, %c0_32] : memref<1x8x8x4xf32, #tpu.memory_space<vmem>>, vector<1x8x8x4xf32>
    %29 = vector.shape_cast %28 : vector<1x8x8x4xf32> to vector<8x8x4xf32>
    %30 = vector.broadcast %1 : vector<1x1x4xf32> to vector<8x8x4xf32>
    %31 = arith.mulf %29, %30 : vector<8x8x4xf32>
    %32 = vector.broadcast %3 : vector<1x1x4xf32> to vector<8x8x4xf32>
    %33 = arith.addf %31, %32 : vector<8x8x4xf32>
    %cst_33 = arith.constant 1.400000e-02 : f32
    %34 = vector.broadcast %cst_33 : f32 to vector<8x8x4xf32>
    %35 = arith.maximumf %33, %34 : vector<8x8x4xf32>
    %c0_34 = arith.constant 0 : index
    %c1_35 = arith.constant 1 : index
    %c0_36 = arith.constant 0 : index
    %36 = vector.load %arg13[%c0_34, %c1_35, %c0_36] : memref<8x9x4xf32, #tpu.memory_space<vmem>>, vector<8x8x4xf32>
    tpu.vector_store %arg13[%c0_34, %c1_35, %c0_36], %35 {strides = array<i32>} : memref<8x9x4xf32, #tpu.memory_space<vmem>>, vector<8x8x4xf32>,
    %c0_37 = arith.constant 0 : index
    %c0_38 = arith.constant 0 : index
    %c0_39 = arith.constant 0 : index
    %c0_40 = arith.constant 0 : index
    %37 = vector.load %arg4[%c0_37, %c0_38, %c0_39, %c0_40] : memref<1x8x8x4xf32, #tpu.memory_space<vmem>>, vector<1x8x8x4xf32>
    %38 = vector.shape_cast %37 : vector<1x8x8x4xf32> to vector<8x8x4xf32>
    %39 = vector.broadcast %1 : vector<1x1x4xf32> to vector<8x8x4xf32>
    %40 = arith.mulf %38, %39 : vector<8x8x4xf32>
    %41 = vector.broadcast %3 : vector<1x1x4xf32> to vector<8x8x4xf32>
    %42 = arith.addf %40, %41 : vector<8x8x4xf32>
    %cst_41 = arith.constant 1.400000e-02 : f32
    %43 = vector.broadcast %cst_41 : f32 to vector<8x8x4xf32>
    %44 = arith.maximumf %42, %43 : vector<8x8x4xf32>
    %c0_42 = arith.constant 0 : index
    %c0_43 = arith.constant 0 : index
    %c0_44 = arith.constant 0 : index
    %45 = vector.load %arg14[%c0_42, %c0_43, %c0_44] : memref<8x8x4xf32, #tpu.memory_space<vmem>>, vector<8x8x4xf32>
    tpu.vector_store %arg14[%c0_42, %c0_43, %c0_44], %44 {strides = array<i32>} : memref<8x8x4xf32, #tpu.memory_space<vmem>>, vector<8x8x4xf32>,
    %cst_45 = arith.constant 0.000000e+00 : f32
    %46 = vector.broadcast %cst_45 : f32 to vector<1x4xf32>
    %c0_i32 = arith.constant 0 : i32
    %c8_i32 = arith.constant 8 : i32
    %47 = arith.muli %c0_i32, %c8_i32 : i32
    %cst_46 = arith.constant 0.000000e+00 : f32
    %48 = vector.broadcast %cst_46 : f32 to vector<64x4xf32>
    %c0_i32_47 = arith.constant 0 : i32
    %49 = arith.addi %47, %c0_i32_47 : i32
    %50 = arith.index_cast %49 : i32 to index
    %c0_48 = arith.constant 0 : index
    %c0_49 = arith.constant 0 : index
    %51 = vector.load %arg11[%50, %c0_48, %c0_49] : memref<9x9x4xf32, #tpu.memory_space<vmem>>, vector<8x8x4xf32>
    %52 = vector.shape_cast %51 : vector<8x8x4xf32> to vector<64x4xf32>
    %c0_50 = arith.constant 0 : index
    %c0_51 = arith.constant 0 : index
    %c0_52 = arith.constant 0 : index
    %53 = vector.load %arg7[%c0_50, %c0_51, %c0_52] : memref<9x4x4xf32, #tpu.memory_space<vmem>>, vector<1x4x4xf32>
    %54 = vector.shape_cast %53 : vector<1x4x4xf32> to vector<4x4xf32>
    %cst_53 = arith.constant dense<0.000000e+00> : vector<64x4xf32>
    %55 = tpu.matmul %52, %54, %cst_53 {dimension_numbers = #tpu.dot_dimension_numbers<[1], [0], [0], [1], [0, 0, 1, 1], [], []>} : vector<64x4xf32>, vector<4x4xf32>, vector<64x4xf32> -> vector<64x4xf32>
    %56 = arith.addf %48, %55 : vector<64x4xf32>
    %c0_i32_54 = arith.constant 0 : i32
    %57 = arith.addi %47, %c0_i32_54 : i32
    %58 = arith.index_cast %57 : i32 to index
    %c0_55 = arith.constant 0 : index
    %c0_56 = arith.constant 0 : index
    %59 = vector.load %arg12[%58, %c0_55, %c0_56] : memref<9x8x4xf32, #tpu.memory_space<vmem>>, vector<8x8x4xf32>
    %60 = vector.shape_cast %59 : vector<8x8x4xf32> to vector<64x4xf32>
    %c1_57 = arith.constant 1 : index
    %c0_58 = arith.constant 0 : index
    %c0_59 = arith.constant 0 : index
    %61 = vector.load %arg7[%c1_57, %c0_58, %c0_59] : memref<9x4x4xf32, #tpu.memory_space<vmem>>, vector<1x4x4xf32>
    %62 = vector.shape_cast %61 : vector<1x4x4xf32> to vector<4x4xf32>
    %cst_60 = arith.constant dense<0.000000e+00> : vector<64x4xf32>
    %63 = tpu.matmul %60, %62, %cst_60 {dimension_numbers = #tpu.dot_dimension_numbers<[1], [0], [0], [1], [0, 0, 1, 1], [], []>} : vector<64x4xf32>, vector<4x4xf32>, vector<64x4xf32> -> vector<64x4xf32>
    %64 = arith.addf %56, %63 : vector<64x4xf32>
    %c0_i32_61 = arith.constant 0 : i32
    %65 = arith.addi %47, %c0_i32_61 : i32
    %66 = arith.index_cast %65 : i32 to index
    %c1_62 = arith.constant 1 : index
    %c0_63 = arith.constant 0 : index
    %67 = vector.load %arg11[%66, %c1_62, %c0_63] : memref<9x9x4xf32, #tpu.memory_space<vmem>>, vector<8x8x4xf32>
    %68 = vector.shape_cast %67 : vector<8x8x4xf32> to vector<64x4xf32>
    %c2 = arith.constant 2 : index
    %c0_64 = arith.constant 0 : index
    %c0_65 = arith.constant 0 : index
    %69 = vector.load %arg7[%c2, %c0_64, %c0_65] : memref<9x4x4xf32, #tpu.memory_space<vmem>>, vector<1x4x4xf32>
    %70 = vector.shape_cast %69 : vector<1x4x4xf32> to vector<4x4xf32>
    %cst_66 = arith.constant dense<0.000000e+00> : vector<64x4xf32>
    %71 = tpu.matmul %68, %70, %cst_66 {dimension_numbers = #tpu.dot_dimension_numbers<[1], [0], [0], [1], [0, 0, 1, 1], [], []>} : vector<64x4xf32>, vector<4x4xf32>, vector<64x4xf32> -> vector<64x4xf32>
    %72 = arith.addf %64, %71 : vector<64x4xf32>
    %c0_i32_67 = arith.constant 0 : i32
    %73 = arith.addi %47, %c0_i32_67 : i32
    %74 = arith.index_cast %73 : i32 to index
    %c0_68 = arith.constant 0 : index
    %c0_69 = arith.constant 0 : index
    %75 = vector.load %arg13[%74, %c0_68, %c0_69] : memref<8x9x4xf32, #tpu.memory_space<vmem>>, vector<8x8x4xf32>
    %76 = vector.shape_cast %75 : vector<8x8x4xf32> to vector<64x4xf32>
    %c3 = arith.constant 3 : index
    %c0_70 = arith.constant 0 : index
    %c0_71 = arith.constant 0 : index
    %77 = vector.load %arg7[%c3, %c0_70, %c0_71] : memref<9x4x4xf32, #tpu.memory_space<vmem>>, vector<1x4x4xf32>
    %78 = vector.shape_cast %77 : vector<1x4x4xf32> to vector<4x4xf32>
    %cst_72 = arith.constant dense<0.000000e+00> : vector<64x4xf32>
    %79 = tpu.matmul %76, %78, %cst_72 {dimension_numbers = #tpu.dot_dimension_numbers<[1], [0], [0], [1], [0, 0, 1, 1], [], []>} : vector<64x4xf32>, vector<4x4xf32>, vector<64x4xf32> -> vector<64x4xf32>
    %80 = arith.addf %72, %79 : vector<64x4xf32>
    %c0_i32_73 = arith.constant 0 : i32
    %81 = arith.addi %47, %c0_i32_73 : i32
    %82 = arith.index_cast %81 : i32 to index
    %c0_74 = arith.constant 0 : index
    %c0_75 = arith.constant 0 : index
    %83 = vector.load %arg14[%82, %c0_74, %c0_75] : memref<8x8x4xf32, #tpu.memory_space<vmem>>, vector<8x8x4xf32>
    %84 = vector.shape_cast %83 : vector<8x8x4xf32> to vector<64x4xf32>
    %c4 = arith.constant 4 : index
    %c0_76 = arith.constant 0 : index
    %c0_77 = arith.constant 0 : index
    %85 = vector.load %arg7[%c4, %c0_76, %c0_77] : memref<9x4x4xf32, #tpu.memory_space<vmem>>, vector<1x4x4xf32>
    %86 = vector.shape_cast %85 : vector<1x4x4xf32> to vector<4x4xf32>
    %cst_78 = arith.constant dense<0.000000e+00> : vector<64x4xf32>
    %87 = tpu.matmul %84, %86, %cst_78 {dimension_numbers = #tpu.dot_dimension_numbers<[1], [0], [0], [1], [0, 0, 1, 1], [], []>} : vector<64x4xf32>, vector<4x4xf32>, vector<64x4xf32> -> vector<64x4xf32>
    %88 = arith.addf %80, %87 : vector<64x4xf32>
    %c0_i32_79 = arith.constant 0 : i32
    %89 = arith.addi %47, %c0_i32_79 : i32
    %90 = arith.index_cast %89 : i32 to index
    %c1_80 = arith.constant 1 : index
    %c0_81 = arith.constant 0 : index
    %91 = vector.load %arg13[%90, %c1_80, %c0_81] : memref<8x9x4xf32, #tpu.memory_space<vmem>>, vector<8x8x4xf32>
    %92 = vector.shape_cast %91 : vector<8x8x4xf32> to vector<64x4xf32>
    %c5 = arith.constant 5 : index
    %c0_82 = arith.constant 0 : index
    %c0_83 = arith.constant 0 : index
    %93 = vector.load %arg7[%c5, %c0_82, %c0_83] : memref<9x4x4xf32, #tpu.memory_space<vmem>>, vector<1x4x4xf32>
    %94 = vector.shape_cast %93 : vector<1x4x4xf32> to vector<4x4xf32>
    %cst_84 = arith.constant dense<0.000000e+00> : vector<64x4xf32>
    %95 = tpu.matmul %92, %94, %cst_84 {dimension_numbers = #tpu.dot_dimension_numbers<[1], [0], [0], [1], [0, 0, 1, 1], [], []>} : vector<64x4xf32>, vector<4x4xf32>, vector<64x4xf32> -> vector<64x4xf32>
    %96 = arith.addf %88, %95 : vector<64x4xf32>
    %c1_i32 = arith.constant 1 : i32
    %97 = arith.addi %47, %c1_i32 : i32
    %98 = arith.index_cast %97 : i32 to index
    %c0_85 = arith.constant 0 : index
    %c0_86 = arith.constant 0 : index
    %99 = vector.load %arg11[%98, %c0_85, %c0_86] : memref<9x9x4xf32, #tpu.memory_space<vmem>>, vector<8x8x4xf32>
    %100 = vector.shape_cast %99 : vector<8x8x4xf32> to vector<64x4xf32>
    %c6 = arith.constant 6 : index
    %c0_87 = arith.constant 0 : index
    %c0_88 = arith.constant 0 : index
    %101 = vector.load %arg7[%c6, %c0_87, %c0_88] : memref<9x4x4xf32, #tpu.memory_space<vmem>>, vector<1x4x4xf32>
    %102 = vector.shape_cast %101 : vector<1x4x4xf32> to vector<4x4xf32>
    %cst_89 = arith.constant dense<0.000000e+00> : vector<64x4xf32>
    %103 = tpu.matmul %100, %102, %cst_89 {dimension_numbers = #tpu.dot_dimension_numbers<[1], [0], [0], [1], [0, 0, 1, 1], [], []>} : vector<64x4xf32>, vector<4x4xf32>, vector<64x4xf32> -> vector<64x4xf32>
    %104 = arith.addf %96, %103 : vector<64x4xf32>
    %c1_i32_90 = arith.constant 1 : i32
    %105 = arith.addi %47, %c1_i32_90 : i32
    %106 = arith.index_cast %105 : i32 to index
    %c0_91 = arith.constant 0 : index
    %c0_92 = arith.constant 0 : index
    %107 = vector.load %arg12[%106, %c0_91, %c0_92] : memref<9x8x4xf32, #tpu.memory_space<vmem>>, vector<8x8x4xf32>
    %108 = vector.shape_cast %107 : vector<8x8x4xf32> to vector<64x4xf32>
    %c7 = arith.constant 7 : index
    %c0_93 = arith.constant 0 : index
    %c0_94 = arith.constant 0 : index
    %109 = vector.load %arg7[%c7, %c0_93, %c0_94] : memref<9x4x4xf32, #tpu.memory_space<vmem>>, vector<1x4x4xf32>
    %110 = vector.shape_cast %109 : vector<1x4x4xf32> to vector<4x4xf32>
    %cst_95 = arith.constant dense<0.000000e+00> : vector<64x4xf32>
    %111 = tpu.matmul %108, %110, %cst_95 {dimension_numbers = #tpu.dot_dimension_numbers<[1], [0], [0], [1], [0, 0, 1, 1], [], []>} : vector<64x4xf32>, vector<4x4xf32>, vector<64x4xf32> -> vector<64x4xf32>
    %112 = arith.addf %104, %111 : vector<64x4xf32>
    %c1_i32_96 = arith.constant 1 : i32
    %113 = arith.addi %47, %c1_i32_96 : i32
    %114 = arith.index_cast %113 : i32 to index
    %c1_97 = arith.constant 1 : index
    %c0_98 = arith.constant 0 : index
    %115 = vector.load %arg11[%114, %c1_97, %c0_98] : memref<9x9x4xf32, #tpu.memory_space<vmem>>, vector<8x8x4xf32>
    %116 = vector.shape_cast %115 : vector<8x8x4xf32> to vector<64x4xf32>
    %c8 = arith.constant 8 : index
    %c0_99 = arith.constant 0 : index
    %c0_100 = arith.constant 0 : index
    %117 = vector.load %arg7[%c8, %c0_99, %c0_100] : memref<9x4x4xf32, #tpu.memory_space<vmem>>, vector<1x4x4xf32>
    %118 = vector.shape_cast %117 : vector<1x4x4xf32> to vector<4x4xf32>
    %cst_101 = arith.constant dense<0.000000e+00> : vector<64x4xf32>
    %119 = tpu.matmul %116, %118, %cst_101 {dimension_numbers = #tpu.dot_dimension_numbers<[1], [0], [0], [1], [0, 0, 1, 1], [], []>} : vector<64x4xf32>, vector<4x4xf32>, vector<64x4xf32> -> vector<64x4xf32>
    %120 = arith.addf %112, %119 : vector<64x4xf32>
    %c64_i32 = arith.constant 64 : i32
    %121 = arith.muli %c0_i32, %c64_i32 : i32
    %c0_102 = arith.constant 0 : index
    %122 = arith.index_cast %121 : i32 to index
    %c0_103 = arith.constant 0 : index
    %123 = vector.load %arg8[%c0_102, %122, %c0_103] : memref<1x64x4xf32, #tpu.memory_space<vmem>>, vector<1x64x4xf32>
    %124 = vector.shape_cast %123 : vector<1x64x4xf32> to vector<64x4xf32>
    %125 = vector.shape_cast %120 : vector<64x4xf32> to vector<1x64x4xf32>
    tpu.vector_store %arg8[%c0_102, %122, %c0_103], %125 {strides = array<i32>} : memref<1x64x4xf32, #tpu.memory_space<vmem>>, vector<1x64x4xf32>,
    %cst_104 = arith.constant dense<0.000000e+00> : vector<4xf32>
    %126 = vector.multi_reduction <add>, %120, %cst_104 [0] : vector<64x4xf32> to vector<4xf32>
    %127 = vector.shape_cast %126 : vector<4xf32> to vector<1x4xf32>
    %128 = arith.addf %46, %127 : vector<1x4xf32>
    %129 = arith.mulf %120, %120 : vector<64x4xf32>
    %cst_105 = arith.constant dense<0.000000e+00> : vector<4xf32>
    %130 = vector.multi_reduction <add>, %129, %cst_105 [0] : vector<64x4xf32> to vector<4xf32>
    %131 = vector.shape_cast %130 : vector<4xf32> to vector<1x4xf32>
    %132 = arith.addf %46, %131 : vector<1x4xf32>
    %c1_i32_106 = arith.constant 1 : i32
    %c0_107 = arith.constant 0 : index
    %c0_108 = arith.constant 0 : index
    %c0_109 = arith.constant 0 : index
    %133 = vector.load %arg9[%c0_107, %c0_108, %c0_109] : memref<1x1x4xf32, #tpu.memory_space<vmem>>, vector<1x1x4xf32>
    %134 = vector.shape_cast %133 : vector<1x1x4xf32> to vector<1x4xf32>
    %135 = vector.shape_cast %128 : vector<1x4xf32> to vector<1x1x4xf32>
    tpu.vector_store %arg9[%c0_107, %c0_108, %c0_109], %135 {strides = array<i32>} : memref<1x1x4xf32, #tpu.memory_space<vmem>>, vector<1x1x4xf32>,
    %c0_110 = arith.constant 0 : index
    %c0_111 = arith.constant 0 : index
    %c0_112 = arith.constant 0 : index
    %136 = vector.load %arg10[%c0_110, %c0_111, %c0_112] : memref<1x1x4xf32, #tpu.memory_space<vmem>>, vector<1x1x4xf32>
    %137 = vector.shape_cast %136 : vector<1x1x4xf32> to vector<1x4xf32>
    %138 = vector.shape_cast %132 : vector<1x4xf32> to vector<1x1x4xf32>
    tpu.vector_store %arg10[%c0_110, %c0_111, %c0_112], %138 {strides = array<i32>} : memref<1x1x4xf32, #tpu.memory_space<vmem>>, vector<1x1x4xf32>,
    return
  }
  func.func @transform_0(%arg0: i32) -> (i32, i32, i32, i32) {
    %c0_i32 = arith.constant 0 : i32
    %c0_i32_0 = arith.constant 0 : i32
    %c0_i32_1 = arith.constant 0 : i32
    %c0_i32_2 = arith.constant 0 : i32
    return %arg0, %c0_i32, %c0_i32_0, %c0_i32_1 : i32, i32, i32, i32
  }
  func.func @transform_1(%arg0: i32) -> (i32, i32, i32, i32) {
    %c0_i32 = arith.constant 0 : i32
    %c0_i32_0 = arith.constant 0 : i32
    %c0_i32_1 = arith.constant 0 : i32
    %c0_i32_2 = arith.constant 0 : i32
    return %arg0, %c0_i32, %c0_i32_0, %c0_i32_1 : i32, i32, i32, i32
  }
  func.func @transform_2(%arg0: i32) -> (i32, i32, i32, i32) {
    %c0_i32 = arith.constant 0 : i32
    %c0_i32_0 = arith.constant 0 : i32
    %c0_i32_1 = arith.constant 0 : i32
    %c0_i32_2 = arith.constant 0 : i32
    return %arg0, %c0_i32, %c0_i32_0, %c0_i32_1 : i32, i32, i32, i32
  }
  func.func @transform_3(%arg0: i32) -> (i32, i32, i32, i32) {
    %c0_i32 = arith.constant 0 : i32
    %c0_i32_0 = arith.constant 0 : i32
    %c0_i32_1 = arith.constant 0 : i32
    %c0_i32_2 = arith.constant 0 : i32
    return %arg0, %c0_i32, %c0_i32_0, %c0_i32_1 : i32, i32, i32, i32
  }
  func.func @transform_4(%arg0: i32) -> (i32, i32) {
    %c0_i32 = arith.constant 0 : i32
    %c0_i32_0 = arith.constant 0 : i32
    %c0_i32_1 = arith.constant 0 : i32
    return %c0_i32, %c0_i32_0 : i32, i32
  }
  func.func @transform_5(%arg0: i32) -> (i32, i32) {
    %c0_i32 = arith.constant 0 : i32
    %c0_i32_0 = arith.constant 0 : i32
    %c0_i32_1 = arith.constant 0 : i32
    return %c0_i32, %c0_i32_0 : i32, i32
  }
  func.func @transform_6(%arg0: i32) -> (i32, i32, i32) {
    %c0_i32 = arith.constant 0 : i32
    %c0_i32_0 = arith.constant 0 : i32
    %c0_i32_1 = arith.constant 0 : i32
    %c0_i32_2 = arith.constant 0 : i32
    return %c0_i32, %c0_i32_0, %c0_i32_1 : i32, i32, i32
  }
  func.func @transform_7(%arg0: i32) -> (i32, i32, i32) {
    %c0_i32 = arith.constant 0 : i32
    %c0_i32_0 = arith.constant 0 : i32
    %c0_i32_1 = arith.constant 0 : i32
    return %arg0, %c0_i32, %c0_i32_0 : i32, i32, i32
  }
  func.func @transform_8(%arg0: i32) -> (i32, i32, i32) {
    %c0_i32 = arith.constant 0 : i32
    %c0_i32_0 = arith.constant 0 : i32
    %c0_i32_1 = arith.constant 0 : i32
    return %arg0, %c0_i32, %c0_i32_0 : i32, i32, i32
  }
  func.func @transform_9(%arg0: i32) -> (i32, i32, i32) {
    %c0_i32 = arith.constant 0 : i32
    %c0_i32_0 = arith.constant 0 : i32
    %c0_i32_1 = arith.constant 0 : i32
    return %arg0, %c0_i32, %c0_i32_0 : i32, i32, i32
  }
}

module attributes {stable_mosaic.version = 11 : i64} {
  func.func @_matmul_bn_stats_kernel(%arg0: i32, %arg1: memref<128x4xf32, #tpu.memory_space<vmem>>, %arg2: memref<1x4xf32, #tpu.memory_space<vmem>>, %arg3: memref<1x4xf32, #tpu.memory_space<vmem>>, %arg4: memref<4x8xf32, #tpu.memory_space<vmem>>, %arg5: memref<128x8xf32, #tpu.memory_space<vmem>>, %arg6: memref<1x1x8xf32, #tpu.memory_space<vmem>>, %arg7: memref<1x1x8xf32, #tpu.memory_space<vmem>>) attributes {dimension_semantics = [#tpu.dimension_semantics<parallel>], iteration_bounds = array<i64: 1>, scalar_prefetch = 0 : i64, scratch_operands = 0 : i64, tpu.core_type = #tpu.core_type<tc>, window_params = [{transform_indices = @transform_0, window_bounds = array<i64: 128, 4>}, {pipeline_mode = #tpu.pipeline_mode<synchronous>, transform_indices = @transform_1, window_bounds = array<i64: 1, 4>}, {pipeline_mode = #tpu.pipeline_mode<synchronous>, transform_indices = @transform_2, window_bounds = array<i64: 1, 4>}, {pipeline_mode = #tpu.pipeline_mode<synchronous>, transform_indices = @transform_3, window_bounds = array<i64: 4, 8>}, {transform_indices = @transform_4, window_bounds = array<i64: 128, 8>}, {transform_indices = @transform_5, window_bounds = array<i64: 1, 1, 8>}, {transform_indices = @transform_6, window_bounds = array<i64: 1, 1, 8>}]} {
    %c0 = arith.constant 0 : index
    %c0_0 = arith.constant 0 : index
    %0 = vector.load %arg1[%c0, %c0_0] : memref<128x4xf32, #tpu.memory_space<vmem>>, vector<128x4xf32>
    %c0_1 = arith.constant 0 : index
    %c0_2 = arith.constant 0 : index
    %1 = vector.load %arg2[%c0_1, %c0_2] : memref<1x4xf32, #tpu.memory_space<vmem>>, vector<1x4xf32>
    %2 = vector.broadcast %1 : vector<1x4xf32> to vector<128x4xf32>
    %3 = arith.mulf %0, %2 : vector<128x4xf32>
    %c0_3 = arith.constant 0 : index
    %c0_4 = arith.constant 0 : index
    %4 = vector.load %arg3[%c0_3, %c0_4] : memref<1x4xf32, #tpu.memory_space<vmem>>, vector<1x4xf32>
    %5 = vector.broadcast %4 : vector<1x4xf32> to vector<128x4xf32>
    %6 = arith.addf %3, %5 : vector<128x4xf32>
    %cst = arith.constant 1.400000e-02 : f32
    %7 = vector.broadcast %cst : f32 to vector<128x4xf32>
    %8 = arith.maximumf %6, %7 : vector<128x4xf32>
    %c0_5 = arith.constant 0 : index
    %c0_6 = arith.constant 0 : index
    %9 = vector.load %arg4[%c0_5, %c0_6] : memref<4x8xf32, #tpu.memory_space<vmem>>, vector<4x8xf32>
    %cst_7 = arith.constant dense<0.000000e+00> : vector<128x8xf32>
    %10 = tpu.matmul %8, %9, %cst_7 {dimension_numbers = #tpu.dot_dimension_numbers<[1], [0], [0], [1], [0, 0, 1, 1], [], []>} : vector<128x4xf32>, vector<4x8xf32>, vector<128x8xf32> -> vector<128x8xf32>
    %c0_8 = arith.constant 0 : index
    %c0_9 = arith.constant 0 : index
    %11 = vector.load %arg5[%c0_8, %c0_9] : memref<128x8xf32, #tpu.memory_space<vmem>>, vector<128x8xf32>
    tpu.vector_store %arg5[%c0_8, %c0_9], %10 {strides = array<i32>} : memref<128x8xf32, #tpu.memory_space<vmem>>, vector<128x8xf32>,
    %cst_10 = arith.constant dense<0.000000e+00> : vector<8xf32>
    %12 = vector.multi_reduction <add>, %10, %cst_10 [0] : vector<128x8xf32> to vector<8xf32>
    %13 = vector.shape_cast %12 : vector<8xf32> to vector<1x8xf32>
    %c0_11 = arith.constant 0 : index
    %c0_12 = arith.constant 0 : index
    %c0_13 = arith.constant 0 : index
    %14 = vector.load %arg6[%c0_11, %c0_12, %c0_13] : memref<1x1x8xf32, #tpu.memory_space<vmem>>, vector<1x1x8xf32>
    %15 = vector.shape_cast %14 : vector<1x1x8xf32> to vector<1x8xf32>
    %16 = vector.shape_cast %13 : vector<1x8xf32> to vector<1x1x8xf32>
    tpu.vector_store %arg6[%c0_11, %c0_12, %c0_13], %16 {strides = array<i32>} : memref<1x1x8xf32, #tpu.memory_space<vmem>>, vector<1x1x8xf32>,
    %17 = arith.mulf %10, %10 : vector<128x8xf32>
    %cst_14 = arith.constant dense<0.000000e+00> : vector<8xf32>
    %18 = vector.multi_reduction <add>, %17, %cst_14 [0] : vector<128x8xf32> to vector<8xf32>
    %19 = vector.shape_cast %18 : vector<8xf32> to vector<1x8xf32>
    %c0_15 = arith.constant 0 : index
    %c0_16 = arith.constant 0 : index
    %c0_17 = arith.constant 0 : index
    %20 = vector.load %arg7[%c0_15, %c0_16, %c0_17] : memref<1x1x8xf32, #tpu.memory_space<vmem>>, vector<1x1x8xf32>
    %21 = vector.shape_cast %20 : vector<1x1x8xf32> to vector<1x8xf32>
    %22 = vector.shape_cast %19 : vector<1x8xf32> to vector<1x1x8xf32>
    tpu.vector_store %arg7[%c0_15, %c0_16, %c0_17], %22 {strides = array<i32>} : memref<1x1x8xf32, #tpu.memory_space<vmem>>, vector<1x1x8xf32>,
    return
  }
  func.func @transform_0(%arg0: i32) -> (i32, i32) {
    %c0_i32 = arith.constant 0 : i32
    %c0_i32_0 = arith.constant 0 : i32
    return %arg0, %c0_i32 : i32, i32
  }
  func.func @transform_1(%arg0: i32) -> (i32, i32) {
    %c0_i32 = arith.constant 0 : i32
    %c0_i32_0 = arith.constant 0 : i32
    %c0_i32_1 = arith.constant 0 : i32
    return %c0_i32, %c0_i32_0 : i32, i32
  }
  func.func @transform_2(%arg0: i32) -> (i32, i32) {
    %c0_i32 = arith.constant 0 : i32
    %c0_i32_0 = arith.constant 0 : i32
    %c0_i32_1 = arith.constant 0 : i32
    return %c0_i32, %c0_i32_0 : i32, i32
  }
  func.func @transform_3(%arg0: i32) -> (i32, i32) {
    %c0_i32 = arith.constant 0 : i32
    %c0_i32_0 = arith.constant 0 : i32
    %c0_i32_1 = arith.constant 0 : i32
    return %c0_i32, %c0_i32_0 : i32, i32
  }
  func.func @transform_4(%arg0: i32) -> (i32, i32) {
    %c0_i32 = arith.constant 0 : i32
    %c0_i32_0 = arith.constant 0 : i32
    return %arg0, %c0_i32 : i32, i32
  }
  func.func @transform_5(%arg0: i32) -> (i32, i32, i32) {
    %c0_i32 = arith.constant 0 : i32
    %c0_i32_0 = arith.constant 0 : i32
    %c0_i32_1 = arith.constant 0 : i32
    return %arg0, %c0_i32, %c0_i32_0 : i32, i32, i32
  }
  func.func @transform_6(%arg0: i32) -> (i32, i32, i32) {
    %c0_i32 = arith.constant 0 : i32
    %c0_i32_0 = arith.constant 0 : i32
    %c0_i32_1 = arith.constant 0 : i32
    return %arg0, %c0_i32, %c0_i32_0 : i32, i32, i32
  }
}

module attributes {stable_mosaic.version = 11 : i64} {
  func.func @_matmul_stats_kernel(%arg0: i32, %arg1: memref<128x4xf32, #tpu.memory_space<vmem>>, %arg2: memref<4x8xf32, #tpu.memory_space<vmem>>, %arg3: memref<128x8xf32, #tpu.memory_space<vmem>>, %arg4: memref<1x1x8xf32, #tpu.memory_space<vmem>>, %arg5: memref<1x1x8xf32, #tpu.memory_space<vmem>>) attributes {dimension_semantics = [#tpu.dimension_semantics<parallel>], iteration_bounds = array<i64: 1>, scalar_prefetch = 0 : i64, scratch_operands = 0 : i64, tpu.core_type = #tpu.core_type<tc>, window_params = [{transform_indices = @transform_0, window_bounds = array<i64: 128, 4>}, {pipeline_mode = #tpu.pipeline_mode<synchronous>, transform_indices = @transform_1, window_bounds = array<i64: 4, 8>}, {transform_indices = @transform_2, window_bounds = array<i64: 128, 8>}, {transform_indices = @transform_3, window_bounds = array<i64: 1, 1, 8>}, {transform_indices = @transform_4, window_bounds = array<i64: 1, 1, 8>}]} {
    %c0 = arith.constant 0 : index
    %c0_0 = arith.constant 0 : index
    %0 = vector.load %arg1[%c0, %c0_0] : memref<128x4xf32, #tpu.memory_space<vmem>>, vector<128x4xf32>
    %c0_1 = arith.constant 0 : index
    %c0_2 = arith.constant 0 : index
    %1 = vector.load %arg2[%c0_1, %c0_2] : memref<4x8xf32, #tpu.memory_space<vmem>>, vector<4x8xf32>
    %cst = arith.constant dense<0.000000e+00> : vector<128x8xf32>
    %2 = tpu.matmul %0, %1, %cst {dimension_numbers = #tpu.dot_dimension_numbers<[1], [0], [0], [1], [0, 0, 1, 1], [], []>} : vector<128x4xf32>, vector<4x8xf32>, vector<128x8xf32> -> vector<128x8xf32>
    %c0_3 = arith.constant 0 : index
    %c0_4 = arith.constant 0 : index
    %3 = vector.load %arg3[%c0_3, %c0_4] : memref<128x8xf32, #tpu.memory_space<vmem>>, vector<128x8xf32>
    tpu.vector_store %arg3[%c0_3, %c0_4], %2 {strides = array<i32>} : memref<128x8xf32, #tpu.memory_space<vmem>>, vector<128x8xf32>,
    %cst_5 = arith.constant dense<0.000000e+00> : vector<8xf32>
    %4 = vector.multi_reduction <add>, %2, %cst_5 [0] : vector<128x8xf32> to vector<8xf32>
    %5 = vector.shape_cast %4 : vector<8xf32> to vector<1x8xf32>
    %c0_6 = arith.constant 0 : index
    %c0_7 = arith.constant 0 : index
    %c0_8 = arith.constant 0 : index
    %6 = vector.load %arg4[%c0_6, %c0_7, %c0_8] : memref<1x1x8xf32, #tpu.memory_space<vmem>>, vector<1x1x8xf32>
    %7 = vector.shape_cast %6 : vector<1x1x8xf32> to vector<1x8xf32>
    %8 = vector.shape_cast %5 : vector<1x8xf32> to vector<1x1x8xf32>
    tpu.vector_store %arg4[%c0_6, %c0_7, %c0_8], %8 {strides = array<i32>} : memref<1x1x8xf32, #tpu.memory_space<vmem>>, vector<1x1x8xf32>,
    %9 = arith.mulf %2, %2 : vector<128x8xf32>
    %cst_9 = arith.constant dense<0.000000e+00> : vector<8xf32>
    %10 = vector.multi_reduction <add>, %9, %cst_9 [0] : vector<128x8xf32> to vector<8xf32>
    %11 = vector.shape_cast %10 : vector<8xf32> to vector<1x8xf32>
    %c0_10 = arith.constant 0 : index
    %c0_11 = arith.constant 0 : index
    %c0_12 = arith.constant 0 : index
    %12 = vector.load %arg5[%c0_10, %c0_11, %c0_12] : memref<1x1x8xf32, #tpu.memory_space<vmem>>, vector<1x1x8xf32>
    %13 = vector.shape_cast %12 : vector<1x1x8xf32> to vector<1x8xf32>
    %14 = vector.shape_cast %11 : vector<1x8xf32> to vector<1x1x8xf32>
    tpu.vector_store %arg5[%c0_10, %c0_11, %c0_12], %14 {strides = array<i32>} : memref<1x1x8xf32, #tpu.memory_space<vmem>>, vector<1x1x8xf32>,
    return
  }
  func.func @transform_0(%arg0: i32) -> (i32, i32) {
    %c0_i32 = arith.constant 0 : i32
    %c0_i32_0 = arith.constant 0 : i32
    return %arg0, %c0_i32 : i32, i32
  }
  func.func @transform_1(%arg0: i32) -> (i32, i32) {
    %c0_i32 = arith.constant 0 : i32
    %c0_i32_0 = arith.constant 0 : i32
    %c0_i32_1 = arith.constant 0 : i32
    return %c0_i32, %c0_i32_0 : i32, i32
  }
  func.func @transform_2(%arg0: i32) -> (i32, i32) {
    %c0_i32 = arith.constant 0 : i32
    %c0_i32_0 = arith.constant 0 : i32
    return %arg0, %c0_i32 : i32, i32
  }
  func.func @transform_3(%arg0: i32) -> (i32, i32, i32) {
    %c0_i32 = arith.constant 0 : i32
    %c0_i32_0 = arith.constant 0 : i32
    %c0_i32_1 = arith.constant 0 : i32
    return %arg0, %c0_i32, %c0_i32_0 : i32, i32, i32
  }
  func.func @transform_4(%arg0: i32) -> (i32, i32, i32) {
    %c0_i32 = arith.constant 0 : i32
    %c0_i32_0 = arith.constant 0 : i32
    %c0_i32_1 = arith.constant 0 : i32
    return %arg0, %c0_i32, %c0_i32_0 : i32, i32, i32
  }
}

module attributes {stable_mosaic.version = 11 : i64} {
  func.func @_bn_res_proj_kernel(%arg0: i32, %arg1: memref<128x8xf32, #tpu.memory_space<vmem>>, %arg2: memref<1x8xf32, #tpu.memory_space<vmem>>, %arg3: memref<1x8xf32, #tpu.memory_space<vmem>>, %arg4: memref<128x8xf32, #tpu.memory_space<vmem>>, %arg5: memref<1x8xf32, #tpu.memory_space<vmem>>, %arg6: memref<1x8xf32, #tpu.memory_space<vmem>>, %arg7: memref<128x8xf32, #tpu.memory_space<vmem>>) attributes {dimension_semantics = [#tpu.dimension_semantics<parallel>], iteration_bounds = array<i64: 1>, scalar_prefetch = 0 : i64, scratch_operands = 0 : i64, tpu.core_type = #tpu.core_type<tc>, window_params = [{transform_indices = @transform_0, window_bounds = array<i64: 128, 8>}, {pipeline_mode = #tpu.pipeline_mode<synchronous>, transform_indices = @transform_1, window_bounds = array<i64: 1, 8>}, {pipeline_mode = #tpu.pipeline_mode<synchronous>, transform_indices = @transform_2, window_bounds = array<i64: 1, 8>}, {transform_indices = @transform_3, window_bounds = array<i64: 128, 8>}, {pipeline_mode = #tpu.pipeline_mode<synchronous>, transform_indices = @transform_4, window_bounds = array<i64: 1, 8>}, {pipeline_mode = #tpu.pipeline_mode<synchronous>, transform_indices = @transform_5, window_bounds = array<i64: 1, 8>}, {transform_indices = @transform_6, window_bounds = array<i64: 128, 8>}]} {
    %c0 = arith.constant 0 : index
    %c0_0 = arith.constant 0 : index
    %0 = vector.load %arg1[%c0, %c0_0] : memref<128x8xf32, #tpu.memory_space<vmem>>, vector<128x8xf32>
    %c0_1 = arith.constant 0 : index
    %c0_2 = arith.constant 0 : index
    %1 = vector.load %arg2[%c0_1, %c0_2] : memref<1x8xf32, #tpu.memory_space<vmem>>, vector<1x8xf32>
    %2 = vector.broadcast %1 : vector<1x8xf32> to vector<128x8xf32>
    %3 = arith.mulf %0, %2 : vector<128x8xf32>
    %c0_3 = arith.constant 0 : index
    %c0_4 = arith.constant 0 : index
    %4 = vector.load %arg3[%c0_3, %c0_4] : memref<1x8xf32, #tpu.memory_space<vmem>>, vector<1x8xf32>
    %5 = vector.broadcast %4 : vector<1x8xf32> to vector<128x8xf32>
    %6 = arith.addf %3, %5 : vector<128x8xf32>
    %c0_5 = arith.constant 0 : index
    %c0_6 = arith.constant 0 : index
    %7 = vector.load %arg4[%c0_5, %c0_6] : memref<128x8xf32, #tpu.memory_space<vmem>>, vector<128x8xf32>
    %c0_7 = arith.constant 0 : index
    %c0_8 = arith.constant 0 : index
    %8 = vector.load %arg5[%c0_7, %c0_8] : memref<1x8xf32, #tpu.memory_space<vmem>>, vector<1x8xf32>
    %9 = vector.broadcast %8 : vector<1x8xf32> to vector<128x8xf32>
    %10 = arith.mulf %7, %9 : vector<128x8xf32>
    %c0_9 = arith.constant 0 : index
    %c0_10 = arith.constant 0 : index
    %11 = vector.load %arg6[%c0_9, %c0_10] : memref<1x8xf32, #tpu.memory_space<vmem>>, vector<1x8xf32>
    %12 = vector.broadcast %11 : vector<1x8xf32> to vector<128x8xf32>
    %13 = arith.addf %10, %12 : vector<128x8xf32>
    %14 = arith.addf %6, %13 : vector<128x8xf32>
    %cst = arith.constant 1.400000e-02 : f32
    %15 = vector.broadcast %cst : f32 to vector<128x8xf32>
    %16 = arith.maximumf %14, %15 : vector<128x8xf32>
    %c0_11 = arith.constant 0 : index
    %c0_12 = arith.constant 0 : index
    %17 = vector.load %arg7[%c0_11, %c0_12] : memref<128x8xf32, #tpu.memory_space<vmem>>, vector<128x8xf32>
    tpu.vector_store %arg7[%c0_11, %c0_12], %16 {strides = array<i32>} : memref<128x8xf32, #tpu.memory_space<vmem>>, vector<128x8xf32>,
    return
  }
  func.func @transform_0(%arg0: i32) -> (i32, i32) {
    %c0_i32 = arith.constant 0 : i32
    %c0_i32_0 = arith.constant 0 : i32
    return %arg0, %c0_i32 : i32, i32
  }
  func.func @transform_1(%arg0: i32) -> (i32, i32) {
    %c0_i32 = arith.constant 0 : i32
    %c0_i32_0 = arith.constant 0 : i32
    %c0_i32_1 = arith.constant 0 : i32
    return %c0_i32, %c0_i32_0 : i32, i32
  }
  func.func @transform_2(%arg0: i32) -> (i32, i32) {
    %c0_i32 = arith.constant 0 : i32
    %c0_i32_0 = arith.constant 0 : i32
    %c0_i32_1 = arith.constant 0 : i32
    return %c0_i32, %c0_i32_0 : i32, i32
  }
  func.func @transform_3(%arg0: i32) -> (i32, i32) {
    %c0_i32 = arith.constant 0 : i32
    %c0_i32_0 = arith.constant 0 : i32
    return %arg0, %c0_i32 : i32, i32
  }
  func.func @transform_4(%arg0: i32) -> (i32, i32) {
    %c0_i32 = arith.constant 0 : i32
    %c0_i32_0 = arith.constant 0 : i32
    %c0_i32_1 = arith.constant 0 : i32
    return %c0_i32, %c0_i32_0 : i32, i32
  }
  func.func @transform_5(%arg0: i32) -> (i32, i32) {
    %c0_i32 = arith.constant 0 : i32
    %c0_i32_0 = arith.constant 0 : i32
    %c0_i32_1 = arith.constant 0 : i32
    return %c0_i32, %c0_i32_0 : i32, i32
  }
  func.func @transform_6(%arg0: i32) -> (i32, i32) {
    %c0_i32 = arith.constant 0 : i32
    %c0_i32_0 = arith.constant 0 : i32
    return %arg0, %c0_i32 : i32, i32
  }
}

</mosaic_0001>

<llo_original>
// kernel: _unnamed_function_.5
$region0: #{_unnamed_function_.5}
  #allocation0 [shape = 'u32[]', space=smem, size = 0x4, offset = 0x4, fixed_abs, tag = 'smem constant byte address 0x4 - core index']
  #allocation1 [shape = 'u32[144,128]{1,0:T(1,128)}', space=vmem, size = 0x12000, scoped, tag = 'internal scratch']
  %s0 = inlined_call_operand.vmem [shape: f32[512,4], index: 0, kind: input, shape index: {}]
  %s1 = inlined_call_operand.vmem [shape: f32[4,4], index: 1, kind: input, shape index: {}]
  %s2 = inlined_call_operand.vmem [shape: f32[512,4], index: 2, kind: output, shape index: {0}]
  %s3 = inlined_call_operand.vmem [shape: f32[2,1,4], index: 3, kind: output, shape index: {1}]
  %s4 = inlined_call_operand.vmem [shape: f32[2,1,4], index: 4, kind: output, shape index: {2}]
  %5 = xla_tuple %s2, %s3, %s4
  %s6 = sld [smem:[#allocation0]]
  $region57: #{_unnamed_function_.5} parent=0
    _
  %s8 = ssub.s32 1, %s6
  %s9 = scalar_select 0, %s8, %s6
  loop: start=0, step=1, limit=4
  $region2: #{_unnamed_function_.5} parent=0 // loop_pre_header
    _
  $region3: #{_unnamed_function_.5} parent=0 // loop_header
    %s11 = sphi 0, %s15
    %p12 = scmp.ge.s32.totalorder %s11, 4
    %s21 = sphi 0, %s23
    %s24 = sphi 0, %s21
    %s25 = sphi 0, %s24
    %s41 = sphi 0, %s25
    %s45 = sphi 0, %s45
    %s47 = sphi 0, %s45
    %s48 = sphi 0, %s47
    %s62 = sphi 0, %s48
    %s68 = sphi 0, %s70
    %s71 = sphi 0, %s68
    %s72 = sphi 0, %s71
    %s88 = sphi 0, %s72
    %s94 = sphi 0, %s96
    %s97 = sphi 0, %s94
    %s98 = sphi 0, %s97
    %s114 = sphi 0, %s98
    %s120 = sphi 0, %s122
    %s123 = sphi 0, %s120
    %s124 = sphi 0, %s123
    %s140 = sphi 0, %s124
  $region4: #{_unnamed_function_.5} parent=0 // loop_header_branch
    %14 = sbr.rel (%p12) target = $region8
  $region5: #{_unnamed_function_.5} parent=0 // loop_body
    %s16 = ssub.s32 %s11, 1
    %s17 = ssub.s32 %s11, 2
    %s18 = sadd.s32 %s11, 1
    %s19 = ssub.s32 %s11, %s18
    %p20 = scmp.eq.s32.totalorder %s19, 0
    %s22 = sadd.s32 %s21, 1
    %s23 = scalar_select %p20, %s21, %s22
    %p26 = pneg %p20
    %p27 = scmp.eq.s32.totalorder %s11, 1
    %p28 = por %p26, %p27
    %p29 = scmp.ne.s32.totalorder %s21, %s24
    %p30 = scmp.eq.s32.totalorder %s11, 0
    %p31 = por %p29, %p30
    %p32 = scmp.ne.s32.totalorder %s21, %s24
    %p33 = scmp.eq.s32.totalorder %s16, 1
    %p34 = por %p32, %p33
    %p35 = scmp.ne.s32.totalorder %s24, %s25
    %p36 = scmp.eq.s32.totalorder %s16, 0
    %p37 = por %p35, %p36
    %p38 = scmp.ne.s32.totalorder %s24, %s25
    %p39 = scmp.eq.s32.totalorder %s17, 1
    %p40 = por %p38, %p39
    %p42 = scmp.ne.s32.totalorder %s25, %s41
    %p43 = scmp.eq.s32.totalorder %s17, 0
    %p44 = por %p42, %p43
    %s46 = sadd.s32 %s45, 1
    %p49 = scmp.eq.s32.totalorder %s11, 1
    %p50 = scmp.ne.s32.totalorder %s45, %s47
    %p51 = scmp.eq.s32.totalorder %s11, 0
    %p52 = por %p50, %p51
    %p53 = scmp.ne.s32.totalorder %s45, %s47
    %p54 = scmp.eq.s32.totalorder %s16, 1
    %p55 = por %p53, %p54
    %p56 = scmp.ne.s32.totalorder %s47, %s48
    %p57 = scmp.eq.s32.totalorder %s16, 0
    %p58 = por %p56, %p57
    %p59 = scmp.ne.s32.totalorder %s47, %s48
    %p60 = scmp.eq.s32.totalorder %s17, 1
    %p61 = por %p59, %p60
    %p63 = scmp.ne.s32.totalorder %s48, %s62
    %p64 = scmp.eq.s32.totalorder %s17, 0
    %p65 = por %p63, %p64
    %s66 = ssub.s32 %s11, %s18
    %p67 = scmp.eq.s32.totalorder %s66, 0
    %s69 = sadd.s32 %s68, 1
    %s70 = scalar_select %p67, %s68, %s69
    %p73 = pneg %p67
    %p74 = scmp.eq.s32.totalorder %s11, 1
    %p75 = por %p73, %p74
    %p76 = scmp.ne.s32.totalorder %s68, %s71
    %p77 = scmp.eq.s32.totalorder %s11, 0
    %p78 = por %p76, %p77
    %p79 = scmp.ne.s32.totalorder %s68, %s71
    %p80 = scmp.eq.s32.totalorder %s16, 1
    %p81 = por %p79, %p80
    %p82 = scmp.ne.s32.totalorder %s71, %s72
    %p83 = scmp.eq.s32.totalorder %s16, 0
    %p84 = por %p82, %p83
    %p85 = scmp.ne.s32.totalorder %s71, %s72
    %p86 = scmp.eq.s32.totalorder %s17, 1
    %p87 = por %p85, %p86
    %p89 = scmp.ne.s32.totalorder %s72, %s88
    %p90 = scmp.eq.s32.totalorder %s17, 0
    %p91 = por %p89, %p90
    %s92 = ssub.s32 %s11, %s18
    %p93 = scmp.eq.s32.totalorder %s92, 0
    %s95 = sadd.s32 %s94, 1
    %s96 = scalar_select %p93, %s94, %s95
    %p99 = pneg %p93
    %p100 = scmp.eq.s32.totalorder %s11, 1
    %p101 = por %p99, %p100
    %p102 = scmp.ne.s32.totalorder %s94, %s97
    %p103 = scmp.eq.s32.totalorder %s11, 0
    %p104 = por %p102, %p103
    %p105 = scmp.ne.s32.totalorder %s94, %s97
    %p106 = scmp.eq.s32.totalorder %s16, 1
    %p107 = por %p105, %p106
    %p108 = scmp.ne.s32.totalorder %s97, %s98
    %p109 = scmp.eq.s32.totalorder %s16, 0
    %p110 = por %p108, %p109
    %p111 = scmp.ne.s32.totalorder %s97, %s98
    %p112 = scmp.eq.s32.totalorder %s17, 1
    %p113 = por %p111, %p112
    %p115 = scmp.ne.s32.totalorder %s98, %s114
    %p116 = scmp.eq.s32.totalorder %s17, 0
    %p117 = por %p115, %p116
    %s118 = ssub.s32 %s11, %s18
    %p119 = scmp.eq.s32.totalorder %s118, 0
    %s121 = sadd.s32 %s120, 1
    %s122 = scalar_select %p119, %s120, %s121
    %p125 = pneg %p119
    %p126 = scmp.eq.s32.totalorder %s11, 1
    %p127 = por %p125, %p126
    %p128 = scmp.ne.s32.totalorder %s120, %s123
    %p129 = scmp.eq.s32.totalorder %s11, 0
    %p130 = por %p128, %p129
    %p131 = scmp.ne.s32.totalorder %s120, %s123
    %p132 = scmp.eq.s32.totalorder %s16, 1
    %p133 = por %p131, %p132
    %p134 = scmp.ne.s32.totalorder %s123, %s124
    %p135 = scmp.eq.s32.totalorder %s16, 0
    %p136 = por %p134, %p135
    %p137 = scmp.ne.s32.totalorder %s123, %s124
    %p138 = scmp.eq.s32.totalorder %s17, 1
    %p139 = por %p137, %p138
    %p141 = scmp.ne.s32.totalorder %s124, %s140
    %p142 = scmp.eq.s32.totalorder %s17, 0
    %p143 = por %p141, %p142
    %p144 = scmp.le.s32.totalorder 1, %s11
    %p145 = scmp.lt.s32.totalorder %s11, 3
    %p146 = pnand %p144, %p145
    %p147 = pneg %p146
    // Predicated region
    $region9: #{_unnamed_function_.5} parent=5 // pred_check
      _
    $region10: #{_unnamed_function_.5} parent=5 // pred_check_branch
      %149 = sbr.rel (%p146) target = $region12
    $region11: #{_unnamed_function_.5} parent=5 // pred_region
      %s150 = ssub.s32 %s11, 1
      // Predicated region
      $region13: #{_unnamed_function_.5} parent=11 // pred_check
        %p151 = pneg %p58
      $region14: #{_unnamed_function_.5} parent=11 // pred_check_branch
        %153 = sbr.rel (%p151) target = $region16
      $region15: #{_unnamed_function_.5} parent=11 // pred_region
        _
      $region16: #{_unnamed_function_.5} parent=11 // pred_fallthru
        _
    $region12: #{_unnamed_function_.5} parent=5 // pred_fallthru
      _
    %p154 = scmp.lt.s32.totalorder %s11, 2
    // Predicated region
    $region17: #{_unnamed_function_.5} parent=5 // pred_check
      %p155 = pneg %p154
    $region18: #{_unnamed_function_.5} parent=5 // pred_check_branch
      %157 = sbr.rel (%p155) target = $region20
    $region19: #{_unnamed_function_.5} parent=5 // pred_region
      // Predicated region
      $region21: #{_unnamed_function_.5} parent=19 // pred_check
        %p158 = pneg %p31
      $region22: #{_unnamed_function_.5} parent=19 // pred_check_branch
        %160 = sbr.rel (%p158) target = $region24
      $region23: #{_unnamed_function_.5} parent=19 // pred_region
        %s161 = smul.u32 32, %s11
        %p162 = scmp.lt.s32.totalorder %s161, 63
        %s163 = scalar_select %p162, %s161, 63
        %s164 = smul.addr %s163, 8
        %s165 = scalar_lea.vmem %s0, %s164
        %s166 = smul.u32 32, %s11
      $region24: #{_unnamed_function_.5} parent=19 // pred_fallthru
        _
    $region20: #{_unnamed_function_.5} parent=5 // pred_fallthru
      _
    %p167 = scmp.le.s32.totalorder 1, %s11
    %p168 = scmp.lt.s32.totalorder %s11, 3
    %p169 = pnand %p167, %p168
    %p170 = pneg %p169
    // Predicated region
    $region25: #{_unnamed_function_.5} parent=5 // pred_check
      _
    $region26: #{_unnamed_function_.5} parent=5 // pred_check_branch
      %172 = sbr.rel (%p169) target = $region28
    $region27: #{_unnamed_function_.5} parent=5 // pred_region
      %s173 = ssub.s32 %s11, 1
      %s174 = smul.u32 32, %s16
      %p175 = scmp.lt.s32.totalorder %s174, 63
      %s176 = scalar_select %p175, %s174, 63
      %s177 = smul.addr %s176, 8
      %s178 = scalar_lea.vmem %s0, %s177
      %p179 = pneg %p37
      %p180 = pneg %p34
      %p181 = pneg %p58
      %p182 = pneg %p55
      %p183 = pneg %p84
      %p184 = pneg %p81
      %s185 = smul.u32 32, %s16
      %p186 = scmp.lt.s32.totalorder %s185, 63
      %s187 = scalar_select %p186, %s185, 63
      %s188 = smul.addr %s187, 8
      %s189 = scalar_lea.vmem %s2, %s188
      %p190 = pneg %p110
      %p191 = pneg %p107
      %p192 = scmp.lt.s32.totalorder %s16, 1
      %s193 = scalar_select %p192, %s16, 1
      %s194 = scalar_lea.vmem %s3, %s193
      %p195 = pneg %p136
      %p196 = pneg %p133
      %p197 = scmp.lt.s32.totalorder %s16, 1
      %s198 = scalar_select %p197, %s16, 1
      %s199 = scalar_lea.vmem %s4, %s198
      %s200 = smul.u32 32, %s16
      %p201 = scmp.lt.s32.totalorder %s200, 63
      %s202 = scalar_select %p201, %s200, 63
      %s203 = smul.addr %s202, 8
      %s204 = scalar_lea.vmem %s0, %s203
      %s205 = smul.u32 32, %s16
      %s206 = smul.u32 32, %s16
      %p207 = scmp.lt.s32.totalorder %s206, 63
      %s208 = scalar_select %p207, %s206, 63
      %s209 = smul.addr %s208, 8
      %s210 = scalar_lea.vmem %s2, %s209
      %s211 = smul.u32 32, %s16
      %p212 = scmp.lt.s32.totalorder %s16, 1
      %s213 = scalar_select %p212, %s16, 1
      %s214 = scalar_lea.vmem %s3, %s213
      %p215 = scmp.lt.s32.totalorder %s16, 1
      %s216 = scalar_select %p215, %s16, 1
      %s217 = scalar_lea.vmem %s4, %s216
      %v218 = vld [vmem:[%s204] sm:$0xff]
      %v219 = vld [vmem:[%s204 + $0x8] sm:$0xff]
      %v220 = vld [vmem:[%s204 + $0x10] sm:$0xff]
      %v221 = vld [vmem:[%s204 + $0x18] sm:$0xff]
      %v222 = vld [vmem:[%s204 + $0x20] sm:$0xff]
      %v223 = vld [vmem:[%s204 + $0x28] sm:$0xff]
      %v224 = vld [vmem:[%s204 + $0x30] sm:$0xff]
      %v225 = vld [vmem:[%s204 + $0x38] sm:$0xff]
      %v226 = vld [vmem:[%s204 + $0x40] sm:$0xff]
      %v227 = vld [vmem:[%s204 + $0x48] sm:$0xff]
      %v228 = vld [vmem:[%s204 + $0x50] sm:$0xff]
      %v229 = vld [vmem:[%s204 + $0x58] sm:$0xff]
      %v230 = vld [vmem:[%s204 + $0x60] sm:$0xff]
      %v231 = vld [vmem:[%s204 + $0x68] sm:$0xff]
      %v232 = vld [vmem:[%s204 + $0x70] sm:$0xff]
      %v233 = vld [vmem:[%s204 + $0x78] sm:$0xff]
      %v234 = vld [vmem:[%s204 + $0x80] sm:$0xff]
      %v235 = vld [vmem:[%s204 + $0x88] sm:$0xff]
      %v236 = vld [vmem:[%s204 + $0x90] sm:$0xff]
      %v237 = vld [vmem:[%s204 + $0x98] sm:$0xff]
      %v238 = vld [vmem:[%s204 + $0xa0] sm:$0xff]
      %v239 = vld [vmem:[%s204 + $0xa8] sm:$0xff]
      %v240 = vld [vmem:[%s204 + $0xb0] sm:$0xff]
      %v241 = vld [vmem:[%s204 + $0xb8] sm:$0xff]
      %v242 = vld [vmem:[%s204 + $0xc0] sm:$0xff]
      %v243 = vld [vmem:[%s204 + $0xc8] sm:$0xff]
      %v244 = vld [vmem:[%s204 + $0xd0] sm:$0xff]
      %v245 = vld [vmem:[%s204 + $0xd8] sm:$0xff]
      %v246 = vld [vmem:[%s204 + $0xe0] sm:$0xff]
      %v247 = vld [vmem:[%s204 + $0xe8] sm:$0xff]
      %v248 = vld [vmem:[%s204 + $0xf0] sm:$0xff]
      %v249 = vld [vmem:[%s204 + $0xf8] sm:$0xff]
      %v250 = vld [vmem:[%s1] sm:$0xf]
      %vm251 = vcmask 31744
      %v253 = vsel %vm251, %v218, 0
      %v256 = vsel %vm251, %v219, 0
      %v259 = vsel %vm251, %v220, 0
      %v262 = vsel %vm251, %v221, 0
      %v265 = vsel %vm251, %v222, 0
      %v268 = vsel %vm251, %v223, 0
      %v271 = vsel %vm251, %v224, 0
      %v274 = vsel %vm251, %v225, 0
      %v277 = vsel %vm251, %v226, 0
      %v280 = vsel %vm251, %v227, 0
      %v283 = vsel %vm251, %v228, 0
      %v286 = vsel %vm251, %v229, 0
      %v289 = vsel %vm251, %v230, 0
      %v292 = vsel %vm251, %v231, 0
      %v295 = vsel %vm251, %v232, 0
      %v298 = vsel %vm251, %v233, 0
      %v301 = vsel %vm251, %v234, 0
      %v304 = vsel %vm251, %v235, 0
      %v307 = vsel %vm251, %v236, 0
      %v310 = vsel %vm251, %v237, 0
      %v313 = vsel %vm251, %v238, 0
      %v316 = vsel %vm251, %v239, 0
      %v319 = vsel %vm251, %v240, 0
      %v322 = vsel %vm251, %v241, 0
      %v325 = vsel %vm251, %v242, 0
      %v328 = vsel %vm251, %v243, 0
      %v331 = vsel %vm251, %v244, 0
      %v334 = vsel %vm251, %v245, 0
      %v337 = vsel %vm251, %v246, 0
      %v340 = vsel %vm251, %v247, 0
      %v343 = vsel %vm251, %v248, 0
      %v346 = vsel %vm251, %v249, 0
      %vm348 = vcmask 1043456
      %v350 = vsel %vm348, %v250, 0
      %352 = vmatprep.subr.mxu0 0.0
      %353 = vmatpush1.msra.mxu0 %v350
      %354 = vmatprep.subr.mxu0 0.0
      %355 = vmatpush1.msra.mxu0 0.0
      %356 = vmatprep.subr.mxu0 0.0
      %357 = vmatpush1.msra.mxu0 0.0
      %358 = vmatprep.subr.mxu0 0.0
      %359 = vmatpush1.msra.mxu0 0.0
      %360 = vmatprep.subr.mxu0 0.0
      %361 = vmatpush1.msra.mxu0 0.0
      %362 = vmatprep.subr.mxu0 0.0
      %363 = vmatpush1.msra.mxu0 0.0
      %364 = vmatprep.subr.mxu0 0.0
      %365 = vmatpush1.msra.mxu0 0.0
      %366 = vmatprep.subr.mxu0 0.0
      %367 = vmatpush1.msra.mxu0 0.0
      %368 = vmatprep.subr.mxu0 0.0
      %369 = vmatpush1.msra.mxu0 0.0
      %370 = vmatprep.subr.mxu0 0.0
      %371 = vmatpush1.msra.mxu0 0.0
      %372 = vmatprep.subr.mxu0 0.0
      %373 = vmatpush1.msra.mxu0 0.0
      %374 = vmatprep.subr.mxu0 0.0
      %375 = vmatpush1.msra.mxu0 0.0
      %376 = vmatprep.subr.mxu0 0.0
      %377 = vmatpush1.msra.mxu0 0.0
      %378 = vmatprep.subr.mxu0 0.0
      %379 = vmatpush1.msra.mxu0 0.0
      %380 = vmatprep.subr.mxu0 0.0
      %381 = vmatpush1.msra.mxu0 0.0
      %382 = vmatprep.subr.mxu0 0.0
      %383 = vmatpush1.msra.mxu0 0.0
      %384 = vmatprep.subr.mxu0 0.0
      %385 = vmatpush1.msra.mxu0 0.0
      %386 = vmatprep.subr.mxu0 0.0
      %387 = vmatpush1.msra.mxu0 0.0
      %388 = vmatprep.subr.mxu0 0.0
      %389 = vmatpush1.msra.mxu0 0.0
      %390 = vmatprep.subr.mxu0 0.0
      %391 = vmatpush1.msra.mxu0 0.0
      %392 = vmatprep.subr.mxu0 0.0
      %393 = vmatpush1.msra.mxu0 0.0
      %394 = vmatprep.subr.mxu0 0.0
      %395 = vmatpush1.msra.mxu0 0.0
      %396 = vmatprep.subr.mxu0 0.0
      %397 = vmatpush1.msra.mxu0 0.0
      %398 = vmatprep.subr.mxu0 0.0
      %399 = vmatpush1.msra.mxu0 0.0
      %400 = vmatprep.subr.mxu0 0.0
      %401 = vmatpush1.msra.mxu0 0.0
      %402 = vmatprep.subr.mxu0 0.0
      %403 = vmatpush1.msra.mxu0 0.0
      %404 = vmatprep.subr.mxu0 0.0
      %405 = vmatpush1.msra.mxu0 0.0
      %406 = vmatprep.subr.mxu0 0.0
      %407 = vmatpush1.msra.mxu0 0.0
      %408 = vmatprep.subr.mxu0 0.0
      %409 = vmatpush1.msra.mxu0 0.0
      %410 = vmatprep.subr.mxu0 0.0
      %411 = vmatpush1.msra.mxu0 0.0
      %412 = vmatprep.subr.mxu0 0.0
      %413 = vmatpush1.msra.mxu0 0.0
      %414 = vmatprep.subr.mxu0 0.0
      %415 = vmatpush1.msra.mxu0 0.0
      %416 = vmatprep.mubr.f32.mxu0 0.0
      %417 = vmatmul.mubr.f32.gmra.mrb[0].mxu0 %v253
      %v418 = vpop.f32.mrb[0].mxu0
      %v419 = vadd.f32 0.0, %v418
      %v420 = vpop.f32.mrb[0].mxu0
      %421 = vmatprep.mubr.f32.mxu0 0.0
      %422 = vmatmul.mubr.f32.gmra.mrb[0].mxu0 %v256
      %v423 = vpop.f32.mrb[0].mxu0
      %v424 = vadd.f32 0.0, %v423
      %v425 = vpop.f32.mrb[0].mxu0
      %426 = vmatprep.mubr.f32.mxu0 0.0
      %427 = vmatmul.mubr.f32.gmra.mrb[0].mxu0 %v259
      %v428 = vpop.f32.mrb[0].mxu0
      %v429 = vadd.f32 0.0, %v428
      %v430 = vpop.f32.mrb[0].mxu0
      %431 = vmatprep.mubr.f32.mxu0 0.0
      %432 = vmatmul.mubr.f32.gmra.mrb[0].mxu0 %v262
      %v433 = vpop.f32.mrb[0].mxu0
      %v434 = vadd.f32 0.0, %v433
      %v435 = vpop.f32.mrb[0].mxu0
      %436 = vmatprep.mubr.f32.mxu0 0.0
      %437 = vmatmul.mubr.f32.gmra.mrb[0].mxu0 %v265
      %v438 = vpop.f32.mrb[0].mxu0
      %v439 = vadd.f32 0.0, %v438
      %v440 = vpop.f32.mrb[0].mxu0
      %441 = vmatprep.mubr.f32.mxu0 0.0
      %442 = vmatmul.mubr.f32.gmra.mrb[0].mxu0 %v268
      %v443 = vpop.f32.mrb[0].mxu0
      %v444 = vadd.f32 0.0, %v443
      %v445 = vpop.f32.mrb[0].mxu0
      %446 = vmatprep.mubr.f32.mxu0 0.0
      %447 = vmatmul.mubr.f32.gmra.mrb[0].mxu0 %v271
      %v448 = vpop.f32.mrb[0].mxu0
      %v449 = vadd.f32 0.0, %v448
      %v450 = vpop.f32.mrb[0].mxu0
      %451 = vmatprep.mubr.f32.mxu0 0.0
      %452 = vmatmul.mubr.f32.gmra.mrb[0].mxu0 %v274
      %v453 = vpop.f32.mrb[0].mxu0
      %v454 = vadd.f32 0.0, %v453
      %v455 = vpop.f32.mrb[0].mxu0
      %456 = vmatprep.mubr.f32.mxu0 0.0
      %457 = vmatmul.mubr.f32.gmra.mrb[0].mxu0 %v277
      %v458 = vpop.f32.mrb[0].mxu0
      %v459 = vadd.f32 0.0, %v458
      %v460 = vpop.f32.mrb[0].mxu0
      %461 = vmatprep.mubr.f32.mxu0 0.0
      %462 = vmatmul.mubr.f32.gmra.mrb[0].mxu0 %v280
      %v463 = vpop.f32.mrb[0].mxu0
      %v464 = vadd.f32 0.0, %v463
      %v465 = vpop.f32.mrb[0].mxu0
      %466 = vmatprep.mubr.f32.mxu0 0.0
      %467 = vmatmul.mubr.f32.gmra.mrb[0].mxu0 %v283
      %v468 = vpop.f32.mrb[0].mxu0
      %v469 = vadd.f32 0.0, %v468
      %v470 = vpop.f32.mrb[0].mxu0
      %471 = vmatprep.mubr.f32.mxu0 0.0
      %472 = vmatmul.mubr.f32.gmra.mrb[0].mxu0 %v286
      %v473 = vpop.f32.mrb[0].mxu0
      %v474 = vadd.f32 0.0, %v473
      %v475 = vpop.f32.mrb[0].mxu0
      %476 = vmatprep.mubr.f32.mxu0 0.0
      %477 = vmatmul.mubr.f32.gmra.mrb[0].mxu0 %v289
      %v478 = vpop.f32.mrb[0].mxu0
      %v479 = vadd.f32 0.0, %v478
      %v480 = vpop.f32.mrb[0].mxu0
      %481 = vmatprep.mubr.f32.mxu0 0.0
      %482 = vmatmul.mubr.f32.gmra.mrb[0].mxu0 %v292
      %v483 = vpop.f32.mrb[0].mxu0
      %v484 = vadd.f32 0.0, %v483
      %v485 = vpop.f32.mrb[0].mxu0
      %486 = vmatprep.mubr.f32.mxu0 0.0
      %487 = vmatmul.mubr.f32.gmra.mrb[0].mxu0 %v295
      %v488 = vpop.f32.mrb[0].mxu0
      %v489 = vadd.f32 0.0, %v488
      %v490 = vpop.f32.mrb[0].mxu0
      %491 = vmatprep.mubr.f32.mxu0 0.0
      %492 = vmatmul.mubr.f32.gmra.mrb[0].mxu0 %v298
      %v493 = vpop.f32.mrb[0].mxu0
      %v494 = vadd.f32 0.0, %v493
      %v495 = vpop.f32.mrb[0].mxu0
      %496 = vmatprep.mubr.f32.mxu0 0.0
      %497 = vmatmul.mubr.f32.gmra.mrb[0].mxu0 %v301
      %v498 = vpop.f32.mrb[0].mxu0
      %v499 = vadd.f32 0.0, %v498
      %v500 = vpop.f32.mrb[0].mxu0
      %501 = vmatprep.mubr.f32.mxu0 0.0
      %502 = vmatmul.mubr.f32.gmra.mrb[0].mxu0 %v304
      %v503 = vpop.f32.mrb[0].mxu0
      %v504 = vadd.f32 0.0, %v503
      %v505 = vpop.f32.mrb[0].mxu0
      %506 = vmatprep.mubr.f32.mxu0 0.0
      %507 = vmatmul.mubr.f32.gmra.mrb[0].mxu0 %v307
      %v508 = vpop.f32.mrb[0].mxu0
      %v509 = vadd.f32 0.0, %v508
      %v510 = vpop.f32.mrb[0].mxu0
      %511 = vmatprep.mubr.f32.mxu0 0.0
      %512 = vmatmul.mubr.f32.gmra.mrb[0].mxu0 %v310
      %v513 = vpop.f32.mrb[0].mxu0
      %v514 = vadd.f32 0.0, %v513
      %v515 = vpop.f32.mrb[0].mxu0
      %516 = vmatprep.mubr.f32.mxu0 0.0
      %517 = vmatmul.mubr.f32.gmra.mrb[0].mxu0 %v313
      %v518 = vpop.f32.mrb[0].mxu0
      %v519 = vadd.f32 0.0, %v518
      %v520 = vpop.f32.mrb[0].mxu0
      %521 = vmatprep.mubr.f32.mxu0 0.0
      %522 = vmatmul.mubr.f32.gmra.mrb[0].mxu0 %v316
      %v523 = vpop.f32.mrb[0].mxu0
      %v524 = vadd.f32 0.0, %v523
      %v525 = vpop.f32.mrb[0].mxu0
      %526 = vmatprep.mubr.f32.mxu0 0.0
      %527 = vmatmul.mubr.f32.gmra.mrb[0].mxu0 %v319
      %v528 = vpop.f32.mrb[0].mxu0
      %v529 = vadd.f32 0.0, %v528
      %v530 = vpop.f32.mrb[0].mxu0
      %531 = vmatprep.mubr.f32.mxu0 0.0
      %532 = vmatmul.mubr.f32.gmra.mrb[0].mxu0 %v322
      %v533 = vpop.f32.mrb[0].mxu0
      %v534 = vadd.f32 0.0, %v533
      %v535 = vpop.f32.mrb[0].mxu0
      %536 = vmatprep.mubr.f32.mxu0 0.0
      %537 = vmatmul.mubr.f32.gmra.mrb[0].mxu0 %v325
      %v538 = vpop.f32.mrb[0].mxu0
      %v539 = vadd.f32 0.0, %v538
      %v540 = vpop.f32.mrb[0].mxu0
      %541 = vmatprep.mubr.f32.mxu0 0.0
      %542 = vmatmul.mubr.f32.gmra.mrb[0].mxu0 %v328
      %v543 = vpop.f32.mrb[0].mxu0
      %v544 = vadd.f32 0.0, %v543
      %v545 = vpop.f32.mrb[0].mxu0
      %546 = vmatprep.mubr.f32.mxu0 0.0
      %547 = vmatmul.mubr.f32.gmra.mrb[0].mxu0 %v331
      %v548 = vpop.f32.mrb[0].mxu0
      %v549 = vadd.f32 0.0, %v548
      %v550 = vpop.f32.mrb[0].mxu0
      %551 = vmatprep.mubr.f32.mxu0 0.0
      %552 = vmatmul.mubr.f32.gmra.mrb[0].mxu0 %v334
      %v553 = vpop.f32.mrb[0].mxu0
      %v554 = vadd.f32 0.0, %v553
      %v555 = vpop.f32.mrb[0].mxu0
      %556 = vmatprep.mubr.f32.mxu0 0.0
      %557 = vmatmul.mubr.f32.gmra.mrb[0].mxu0 %v337
      %v558 = vpop.f32.mrb[0].mxu0
      %v559 = vadd.f32 0.0, %v558
      %v560 = vpop.f32.mrb[0].mxu0
      %561 = vmatprep.mubr.f32.mxu0 0.0
      %562 = vmatmul.mubr.f32.gmra.mrb[0].mxu0 %v340
      %v563 = vpop.f32.mrb[0].mxu0
      %v564 = vadd.f32 0.0, %v563
      %v565 = vpop.f32.mrb[0].mxu0
      %566 = vmatprep.mubr.f32.mxu0 0.0
      %567 = vmatmul.mubr.f32.gmra.mrb[0].mxu0 %v343
      %v568 = vpop.f32.mrb[0].mxu0
      %v569 = vadd.f32 0.0, %v568
      %v570 = vpop.f32.mrb[0].mxu0
      %571 = vmatprep.mubr.f32.mxu0 0.0
      %572 = vmatmul.mubr.f32.gmra.mrb[0].mxu0 %v346
      %v573 = vpop.f32.mrb[0].mxu0
      %v574 = vadd.f32 0.0, %v573
      %v575 = vpop.f32.mrb[0].mxu0
      %576 = vdwg.mxu0
      %577 = vst.msk [vmem:[%s210] sm:$0xff] %vm251, %v419
      %578 = vst.msk [vmem:[%s210 + $0x8] sm:$0xff] %vm251, %v424
      %579 = vst.msk [vmem:[%s210 + $0x10] sm:$0xff] %vm251, %v429
      %580 = vst.msk [vmem:[%s210 + $0x18] sm:$0xff] %vm251, %v434
      %581 = vst.msk [vmem:[%s210 + $0x20] sm:$0xff] %vm251, %v439
      %582 = vst.msk [vmem:[%s210 + $0x28] sm:$0xff] %vm251, %v444
      %583 = vst.msk [vmem:[%s210 + $0x30] sm:$0xff] %vm251, %v449
      %584 = vst.msk [vmem:[%s210 + $0x38] sm:$0xff] %vm251, %v454
      %585 = vst.msk [vmem:[%s210 + $0x40] sm:$0xff] %vm251, %v459
      %586 = vst.msk [vmem:[%s210 + $0x48] sm:$0xff] %vm251, %v464
      %587 = vst.msk [vmem:[%s210 + $0x50] sm:$0xff] %vm251, %v469
      %588 = vst.msk [vmem:[%s210 + $0x58] sm:$0xff] %vm251, %v474
      %589 = vst.msk [vmem:[%s210 + $0x60] sm:$0xff] %vm251, %v479
      %590 = vst.msk [vmem:[%s210 + $0x68] sm:$0xff] %vm251, %v484
      %591 = vst.msk [vmem:[%s210 + $0x70] sm:$0xff] %vm251, %v489
      %592 = vst.msk [vmem:[%s210 + $0x78] sm:$0xff] %vm251, %v494
      %593 = vst.msk [vmem:[%s210 + $0x80] sm:$0xff] %vm251, %v499
      %594 = vst.msk [vmem:[%s210 + $0x88] sm:$0xff] %vm251, %v504
      %595 = vst.msk [vmem:[%s210 + $0x90] sm:$0xff] %vm251, %v509
      %596 = vst.msk [vmem:[%s210 + $0x98] sm:$0xff] %vm251, %v514
      %597 = vst.msk [vmem:[%s210 + $0xa0] sm:$0xff] %vm251, %v519
      %598 = vst.msk [vmem:[%s210 + $0xa8] sm:$0xff] %vm251, %v524
      %599 = vst.msk [vmem:[%s210 + $0xb0] sm:$0xff] %vm251, %v529
      %600 = vst.msk [vmem:[%s210 + $0xb8] sm:$0xff] %vm251, %v534
      %601 = vst.msk [vmem:[%s210 + $0xc0] sm:$0xff] %vm251, %v539
      %602 = vst.msk [vmem:[%s210 + $0xc8] sm:$0xff] %vm251, %v544
      %603 = vst.msk [vmem:[%s210 + $0xd0] sm:$0xff] %vm251, %v549
      %604 = vst.msk [vmem:[%s210 + $0xd8] sm:$0xff] %vm251, %v554
      %605 = vst.msk [vmem:[%s210 + $0xe0] sm:$0xff] %vm251, %v559
      %606 = vst.msk [vmem:[%s210 + $0xe8] sm:$0xff] %vm251, %v564
      %607 = vst.msk [vmem:[%s210 + $0xf0] sm:$0xff] %vm251, %v569
      %608 = vst.msk [vmem:[%s210 + $0xf8] sm:$0xff] %vm251, %v574
      %v609 = vsel %vm251, %v419, 0.0
      %v610 = vsel %vm251, %v424, 0.0
      %v611 = vadd.f32 %v609, %v610
      %v612 = vsel %vm251, %v429, 0.0
      %v613 = vadd.f32 %v611, %v612
      %v614 = vsel %vm251, %v434, 0.0
      %v615 = vadd.f32 %v613, %v614
      %v616 = vsel %vm251, %v439, 0.0
      %v617 = vadd.f32 %v615, %v616
      %v618 = vsel %vm251, %v444, 0.0
      %v619 = vadd.f32 %v617, %v618
      %v620 = vsel %vm251, %v449, 0.0
      %v621 = vadd.f32 %v619, %v620
      %v622 = vsel %vm251, %v454, 0.0
      %v623 = vadd.f32 %v621, %v622
      %v624 = vsel %vm251, %v459, 0.0
      %v625 = vadd.f32 %v623, %v624
      %v626 = vsel %vm251, %v464, 0.0
      %v627 = vadd.f32 %v625, %v626
      %v628 = vsel %vm251, %v469, 0.0
      %v629 = vadd.f32 %v627, %v628
      %v630 = vsel %vm251, %v474, 0.0
      %v631 = vadd.f32 %v629, %v630
      %v632 = vsel %vm251, %v479, 0.0
      %v633 = vadd.f32 %v631, %v632
      %v634 = vsel %vm251, %v484, 0.0
      %v635 = vadd.f32 %v633, %v634
      %v636 = vsel %vm251, %v489, 0.0
      %v637 = vadd.f32 %v635, %v636
      %v638 = vsel %vm251, %v494, 0.0
      %v639 = vadd.f32 %v637, %v638
      %v640 = vsel %vm251, %v499, 0.0
      %v641 = vadd.f32 %v639, %v640
      %v642 = vsel %vm251, %v504, 0.0
      %v643 = vadd.f32 %v641, %v642
      %v644 = vsel %vm251, %v509, 0.0
      %v645 = vadd.f32 %v643, %v644
      %v646 = vsel %vm251, %v514, 0.0
      %v647 = vadd.f32 %v645, %v646
      %v648 = vsel %vm251, %v519, 0.0
      %v649 = vadd.f32 %v647, %v648
      %v650 = vsel %vm251, %v524, 0.0
      %v651 = vadd.f32 %v649, %v650
      %v652 = vsel %vm251, %v529, 0.0
      %v653 = vadd.f32 %v651, %v652
      %v654 = vsel %vm251, %v534, 0.0
      %v655 = vadd.f32 %v653, %v654
      %v656 = vsel %vm251, %v539, 0.0
      %v657 = vadd.f32 %v655, %v656
      %v658 = vsel %vm251, %v544, 0.0
      %v659 = vadd.f32 %v657, %v658
      %v660 = vsel %vm251, %v549, 0.0
      %v661 = vadd.f32 %v659, %v660
      %v662 = vsel %vm251, %v554, 0.0
      %v663 = vadd.f32 %v661, %v662
      %v664 = vsel %vm251, %v559, 0.0
      %v665 = vadd.f32 %v663, %v664
      %v666 = vsel %vm251, %v564, 0.0
      %v667 = vadd.f32 %v665, %v666
      %v668 = vsel %vm251, %v569, 0.0
      %v669 = vadd.f32 %v667, %v668
      %v670 = vsel %vm251, %v574, 0.0
      %v671 = vadd.f32 %v669, %v670
      %v672 = vrot.slane %v671, 4
      %v673 = vadd.f32 %v671, %v672
      %v674 = vrot.slane %v673, 2
      %v675 = vadd.f32 %v673, %v674
      %v676 = vrot.slane %v675, 1
      %v677 = vadd.f32 %v675, %v676
      %vm678 = vcmask 24576
      %679 = vst.msk [vmem:[%s214] sm:$0x1] %vm678, %v677
      %v680 = vmul.f32 %v419, %v419
      %v681 = vmul.f32 %v424, %v424
      %v682 = vmul.f32 %v429, %v429
      %v683 = vmul.f32 %v434, %v434
      %v684 = vmul.f32 %v439, %v439
      %v685 = vmul.f32 %v444, %v444
      %v686 = vmul.f32 %v449, %v449
      %v687 = vmul.f32 %v454, %v454
      %v688 = vmul.f32 %v459, %v459
      %v689 = vmul.f32 %v464, %v464
      %v690 = vmul.f32 %v469, %v469
      %v691 = vmul.f32 %v474, %v474
      %v692 = vmul.f32 %v479, %v479
      %v693 = vmul.f32 %v484, %v484
      %v694 = vmul.f32 %v489, %v489
      %v695 = vmul.f32 %v494, %v494
      %v696 = vmul.f32 %v499, %v499
      %v697 = vmul.f32 %v504, %v504
      %v698 = vmul.f32 %v509, %v509
      %v699 = vmul.f32 %v514, %v514
      %v700 = vmul.f32 %v519, %v519
      %v701 = vmul.f32 %v524, %v524
      %v702 = vmul.f32 %v529, %v529
      %v703 = vmul.f32 %v534, %v534
      %v704 = vmul.f32 %v539, %v539
      %v705 = vmul.f32 %v544, %v544
      %v706 = vmul.f32 %v549, %v549
      %v707 = vmul.f32 %v554, %v554
      %v708 = vmul.f32 %v559, %v559
      %v709 = vmul.f32 %v564, %v564
      %v710 = vmul.f32 %v569, %v569
      %v711 = vmul.f32 %v574, %v574
      %v712 = vsel %vm251, %v680, 0.0
      %v713 = vsel %vm251, %v681, 0.0
      %v714 = vadd.f32 %v712, %v713
      %v715 = vsel %vm251, %v682, 0.0
      %v716 = vadd.f32 %v714, %v715
      %v717 = vsel %vm251, %v683, 0.0
      %v718 = vadd.f32 %v716, %v717
      %v719 = vsel %vm251, %v684, 0.0
      %v720 = vadd.f32 %v718, %v719
      %v721 = vsel %vm251, %v685, 0.0
      %v722 = vadd.f32 %v720, %v721
      %v723 = vsel %vm251, %v686, 0.0
      %v724 = vadd.f32 %v722, %v723
      %v725 = vsel %vm251, %v687, 0.0
      %v726 = vadd.f32 %v724, %v725
      %v727 = vsel %vm251, %v688, 0.0
      %v728 = vadd.f32 %v726, %v727
      %v729 = vsel %vm251, %v689, 0.0
      %v730 = vadd.f32 %v728, %v729
      %v731 = vsel %vm251, %v690, 0.0
      %v732 = vadd.f32 %v730, %v731
      %v733 = vsel %vm251, %v691, 0.0
      %v734 = vadd.f32 %v732, %v733
      %v735 = vsel %vm251, %v692, 0.0
      %v736 = vadd.f32 %v734, %v735
      %v737 = vsel %vm251, %v693, 0.0
      %v738 = vadd.f32 %v736, %v737
      %v739 = vsel %vm251, %v694, 0.0
      %v740 = vadd.f32 %v738, %v739
      %v741 = vsel %vm251, %v695, 0.0
      %v742 = vadd.f32 %v740, %v741
      %v743 = vsel %vm251, %v696, 0.0
      %v744 = vadd.f32 %v742, %v743
      %v745 = vsel %vm251, %v697, 0.0
      %v746 = vadd.f32 %v744, %v745
      %v747 = vsel %vm251, %v698, 0.0
      %v748 = vadd.f32 %v746, %v747
      %v749 = vsel %vm251, %v699, 0.0
      %v750 = vadd.f32 %v748, %v749
      %v751 = vsel %vm251, %v700, 0.0
      %v752 = vadd.f32 %v750, %v751
      %v753 = vsel %vm251, %v701, 0.0
      %v754 = vadd.f32 %v752, %v753
      %v755 = vsel %vm251, %v702, 0.0
      %v756 = vadd.f32 %v754, %v755
      %v757 = vsel %vm251, %v703, 0.0
      %v758 = vadd.f32 %v756, %v757
      %v759 = vsel %vm251, %v704, 0.0
      %v760 = vadd.f32 %v758, %v759
      %v761 = vsel %vm251, %v705, 0.0
      %v762 = vadd.f32 %v760, %v761
      %v763 = vsel %vm251, %v706, 0.0
      %v764 = vadd.f32 %v762, %v763
      %v765 = vsel %vm251, %v707, 0.0
      %v766 = vadd.f32 %v764, %v765
      %v767 = vsel %vm251, %v708, 0.0
      %v768 = vadd.f32 %v766, %v767
      %v769 = vsel %vm251, %v709, 0.0
      %v770 = vadd.f32 %v768, %v769
      %v771 = vsel %vm251, %v710, 0.0
      %v772 = vadd.f32 %v770, %v771
      %v773 = vsel %vm251, %v711, 0.0
      %v774 = vadd.f32 %v772, %v773
      %v775 = vrot.slane %v774, 4
      %v776 = vadd.f32 %v774, %v775
      %v777 = vrot.slane %v776, 2
      %v778 = vadd.f32 %v776, %v777
      %v779 = vrot.slane %v778, 1
      %v780 = vadd.f32 %v778, %v779
      %781 = vst.msk [vmem:[%s217] sm:$0x1] %vm678, %v780
      %s782 = smul.u32 32, %s16
      %p783 = scmp.lt.s32.totalorder %s782, 63
      %s784 = scalar_select %p783, %s782, 63
      %s785 = smul.addr %s784, 8
      %s786 = scalar_lea.vmem %s2, %s785
      %p787 = scmp.lt.s32.totalorder %s16, 1
      %s788 = scalar_select %p787, %s16, 1
      %s789 = scalar_lea.vmem %s3, %s788
      %p790 = scmp.lt.s32.totalorder %s16, 1
      %s791 = scalar_select %p790, %s16, 1
      %s792 = scalar_lea.vmem %s4, %s791
      // Predicated region
      $region29: #{_unnamed_function_.5} parent=27 // pred_check
        %p793 = pneg %p81
      $region30: #{_unnamed_function_.5} parent=27 // pred_check_branch
        %795 = sbr.rel (%p793) target = $region32
      $region31: #{_unnamed_function_.5} parent=27 // pred_region
        %s796 = smul.u32 32, %s16
      $region32: #{_unnamed_function_.5} parent=27 // pred_fallthru
        _
      // Predicated region
      $region33: #{_unnamed_function_.5} parent=27 // pred_check
        %p797 = pneg %p107
      $region34: #{_unnamed_function_.5} parent=27 // pred_check_branch
        %799 = sbr.rel (%p797) target = $region36
      $region35: #{_unnamed_function_.5} parent=27 // pred_region
        _
      $region36: #{_unnamed_function_.5} parent=27 // pred_fallthru
        _
      // Predicated region
      $region37: #{_unnamed_function_.5} parent=27 // pred_check
        %p800 = pneg %p133
      $region38: #{_unnamed_function_.5} parent=27 // pred_check_branch
        %802 = sbr.rel (%p800) target = $region40
      $region39: #{_unnamed_function_.5} parent=27 // pred_region
        _
      $region40: #{_unnamed_function_.5} parent=27 // pred_fallthru
        _
    $region28: #{_unnamed_function_.5} parent=5 // pred_fallthru
      _
    %p803 = scmp.le.s32.totalorder 2, %s11
    // Predicated region
    $region41: #{_unnamed_function_.5} parent=5 // pred_check
      %p804 = pneg %p803
    $region42: #{_unnamed_function_.5} parent=5 // pred_check_branch
      %806 = sbr.rel (%p804) target = $region44
    $region43: #{_unnamed_function_.5} parent=5 // pred_region
      %s807 = ssub.s32 %s11, 2
      // Predicated region
      $region45: #{_unnamed_function_.5} parent=43 // pred_check
        %p808 = pneg %p87
      $region46: #{_unnamed_function_.5} parent=43 // pred_check_branch
        %810 = sbr.rel (%p808) target = $region48
      $region47: #{_unnamed_function_.5} parent=43 // pred_region
        %s811 = smul.u32 32, %s17
        %p812 = scmp.lt.s32.totalorder %s811, 63
        %s813 = scalar_select %p812, %s811, 63
        %s814 = smul.addr %s813, 8
        %s815 = scalar_lea.vmem %s2, %s814
      $region48: #{_unnamed_function_.5} parent=43 // pred_fallthru
        _
      // Predicated region
      $region49: #{_unnamed_function_.5} parent=43 // pred_check
        %p816 = pneg %p113
      $region50: #{_unnamed_function_.5} parent=43 // pred_check_branch
        %818 = sbr.rel (%p816) target = $region52
      $region51: #{_unnamed_function_.5} parent=43 // pred_region
        %p819 = scmp.lt.s32.totalorder %s17, 1
        %s820 = scalar_select %p819, %s17, 1
        %s821 = scalar_lea.vmem %s3, %s820
      $region52: #{_unnamed_function_.5} parent=43 // pred_fallthru
        _
      // Predicated region
      $region53: #{_unnamed_function_.5} parent=43 // pred_check
        %p822 = pneg %p139
      $region54: #{_unnamed_function_.5} parent=43 // pred_check_branch
        %824 = sbr.rel (%p822) target = $region56
      $region55: #{_unnamed_function_.5} parent=43 // pred_region
        %p825 = scmp.lt.s32.totalorder %s17, 1
        %s826 = scalar_select %p825, %s17, 1
        %s827 = scalar_lea.vmem %s4, %s826
      $region56: #{_unnamed_function_.5} parent=43 // pred_fallthru
        _
    $region44: #{_unnamed_function_.5} parent=5 // pred_fallthru
      _
  $region6: #{_unnamed_function_.5} parent=0 // loop_footer
    %s15 = sadd.s32 1, %s11
  $region7: #{_unnamed_function_.5} parent=0 // loop_footer_branch
    %10 = sbr.rel target = $region3
  $region8: #{_unnamed_function_.5} parent=0 // loop_exit
    _

// kernel: _unnamed_function_.7
$region0: #{_unnamed_function_.7}
  #allocation0 [shape = 'u32[]', space=smem, size = 0x4, offset = 0x4, fixed_abs, tag = 'smem constant byte address 0x4 - core index']
  #allocation1 [shape = 'u32[144,128]{1,0:T(1,128)}', space=vmem, size = 0x12000, scoped, tag = 'internal scratch']
  %s0 = inlined_call_operand.vmem [shape: f32[128,4], index: 0, kind: input, shape index: {}]
  %s1 = inlined_call_operand.vmem [shape: f32[1,4], index: 1, kind: input, shape index: {}]
  %s2 = inlined_call_operand.vmem [shape: f32[1,4], index: 2, kind: input, shape index: {}]
  %s3 = inlined_call_operand.vmem [shape: f32[4,8], index: 3, kind: input, shape index: {}]
  %s4 = inlined_call_operand.vmem [shape: f32[128,8], index: 4, kind: output, shape index: {0}]
  %s5 = inlined_call_operand.vmem [shape: f32[1,1,8], index: 5, kind: output, shape index: {1}]
  %s6 = inlined_call_operand.vmem [shape: f32[1,1,8], index: 6, kind: output, shape index: {2}]
  %7 = xla_tuple %s4, %s5, %s6
  %s8 = sld [smem:[#allocation0]]
  $region42: #{_unnamed_function_.7} parent=0
    _
  %s10 = ssub.s32 1, %s8
  %s11 = scalar_select 0, %s10, %s8
  // Predicated region
  $region2: #{_unnamed_function_.7} parent=0 // pred_check
    _
  $region3: #{_unnamed_function_.7} parent=0 // pred_check_branch
    %13 = sbr.rel (0) target = $region5
  $region4: #{_unnamed_function_.7} parent=0 // pred_region
    _
  $region5: #{_unnamed_function_.7} parent=0 // pred_fallthru
    _
  // Predicated region
  $region6: #{_unnamed_function_.7} parent=0 // pred_check
    _
  $region7: #{_unnamed_function_.7} parent=0 // pred_check_branch
    %15 = sbr.rel (0) target = $region9
  $region8: #{_unnamed_function_.7} parent=0 // pred_region
    _
  $region9: #{_unnamed_function_.7} parent=0 // pred_fallthru
    _
  // Predicated region
  $region10: #{_unnamed_function_.7} parent=0 // pred_check
    _
  $region11: #{_unnamed_function_.7} parent=0 // pred_check_branch
    %17 = sbr.rel (0) target = $region13
  $region12: #{_unnamed_function_.7} parent=0 // pred_region
    _
  $region13: #{_unnamed_function_.7} parent=0 // pred_fallthru
    _
  // Predicated region
  $region14: #{_unnamed_function_.7} parent=0 // pred_check
    _
  $region15: #{_unnamed_function_.7} parent=0 // pred_check_branch
    %19 = sbr.rel (0) target = $region17
  $region16: #{_unnamed_function_.7} parent=0 // pred_region
    _
  $region17: #{_unnamed_function_.7} parent=0 // pred_fallthru
    _
  %v20 = vld [vmem:[%s0] sm:$0xff]
  %v21 = vld [vmem:[%s0 + $0x8] sm:$0xff]
  %v22 = vld [vmem:[%s0 + $0x10] sm:$0xff]
  %v23 = vld [vmem:[%s0 + $0x18] sm:$0xff]
  %v24 = vld [vmem:[%s0 + $0x20] sm:$0xff]
  %v25 = vld [vmem:[%s0 + $0x28] sm:$0xff]
  %v26 = vld [vmem:[%s0 + $0x30] sm:$0xff]
  %v27 = vld [vmem:[%s0 + $0x38] sm:$0xff]
  %v28 = vld [vmem:[%s0 + $0x40] sm:$0xff]
  %v29 = vld [vmem:[%s0 + $0x48] sm:$0xff]
  %v30 = vld [vmem:[%s0 + $0x50] sm:$0xff]
  %v31 = vld [vmem:[%s0 + $0x58] sm:$0xff]
  %v32 = vld [vmem:[%s0 + $0x60] sm:$0xff]
  %v33 = vld [vmem:[%s0 + $0x68] sm:$0xff]
  %v34 = vld [vmem:[%s0 + $0x70] sm:$0xff]
  %v35 = vld [vmem:[%s0 + $0x78] sm:$0xff]
  %v36 = vld [vmem:[%s1] sm:$0x1]
  %v38 = vlaneseq
  %v39 = vshrl.u32 %v38, 7
  %v40 = vsub.s32 0, %v39
  %v41 = vrot.slane %v36, %v40
  %v43 = vmul.f32 %v20, %v41
  %v44 = vmul.f32 %v21, %v41
  %v45 = vmul.f32 %v22, %v41
  %v46 = vmul.f32 %v23, %v41
  %v47 = vmul.f32 %v24, %v41
  %v48 = vmul.f32 %v25, %v41
  %v49 = vmul.f32 %v26, %v41
  %v50 = vmul.f32 %v27, %v41
  %v51 = vmul.f32 %v28, %v41
  %v52 = vmul.f32 %v29, %v41
  %v53 = vmul.f32 %v30, %v41
  %v54 = vmul.f32 %v31, %v41
  %v55 = vmul.f32 %v32, %v41
  %v56 = vmul.f32 %v33, %v41
  %v57 = vmul.f32 %v34, %v41
  %v58 = vmul.f32 %v35, %v41
  %v59 = vld [vmem:[%s2] sm:$0x1]
  %v61 = vlaneseq
  %v62 = vshrl.u32 %v61, 7
  %v63 = vsub.s32 0, %v62
  %v64 = vrot.slane %v59, %v63
  %v66 = vadd.f32 %v43, %v64
  %v67 = vadd.f32 %v44, %v64
  %v68 = vadd.f32 %v45, %v64
  %v69 = vadd.f32 %v46, %v64
  %v70 = vadd.f32 %v47, %v64
  %v71 = vadd.f32 %v48, %v64
  %v72 = vadd.f32 %v49, %v64
  %v73 = vadd.f32 %v50, %v64
  %v74 = vadd.f32 %v51, %v64
  %v75 = vadd.f32 %v52, %v64
  %v76 = vadd.f32 %v53, %v64
  %v77 = vadd.f32 %v54, %v64
  %v78 = vadd.f32 %v55, %v64
  %v79 = vadd.f32 %v56, %v64
  %v80 = vadd.f32 %v57, %v64
  %v81 = vadd.f32 %v58, %v64
  %v82 = vmax.f32 %v66, 0.014
  %v83 = vmax.f32 %v67, 0.014
  %v84 = vmax.f32 %v68, 0.014
  %v85 = vmax.f32 %v69, 0.014
  %v86 = vmax.f32 %v70, 0.014
  %v87 = vmax.f32 %v71, 0.014
  %v88 = vmax.f32 %v72, 0.014
  %v89 = vmax.f32 %v73, 0.014
  %v90 = vmax.f32 %v74, 0.014
  %v91 = vmax.f32 %v75, 0.014
  %v92 = vmax.f32 %v76, 0.014
  %v93 = vmax.f32 %v77, 0.014
  %v94 = vmax.f32 %v78, 0.014
  %v95 = vmax.f32 %v79, 0.014
  %v96 = vmax.f32 %v80, 0.014
  %v97 = vmax.f32 %v81, 0.014
  %v98 = vld [vmem:[%s3] sm:$0xf]
  %vm99 = vcmask 31744
  %v101 = vsel %vm99, %v82, 0
  %v104 = vsel %vm99, %v83, 0
  %v107 = vsel %vm99, %v84, 0
  %v110 = vsel %vm99, %v85, 0
  %v113 = vsel %vm99, %v86, 0
  %v116 = vsel %vm99, %v87, 0
  %v119 = vsel %vm99, %v88, 0
  %v122 = vsel %vm99, %v89, 0
  %v125 = vsel %vm99, %v90, 0
  %v128 = vsel %vm99, %v91, 0
  %v131 = vsel %vm99, %v92, 0
  %v134 = vsel %vm99, %v93, 0
  %v137 = vsel %vm99, %v94, 0
  %v140 = vsel %vm99, %v95, 0
  %v143 = vsel %vm99, %v96, 0
  %v146 = vsel %vm99, %v97, 0
  %vm148 = vcmask 1043456
  %v150 = vsel %vm148, %v98, 0
  %152 = vmatprep.subr.mxu0 0.0
  %153 = vmatpush1.msra.mxu0 %v150
  %154 = vmatprep.subr.mxu0 0.0
  %155 = vmatpush1.msra.mxu0 0.0
  %156 = vmatprep.subr.mxu0 0.0
  %157 = vmatpush1.msra.mxu0 0.0
  %158 = vmatprep.subr.mxu0 0.0
  %159 = vmatpush1.msra.mxu0 0.0
  %160 = vmatprep.subr.mxu0 0.0
  %161 = vmatpush1.msra.mxu0 0.0
  %162 = vmatprep.subr.mxu0 0.0
  %163 = vmatpush1.msra.mxu0 0.0
  %164 = vmatprep.subr.mxu0 0.0
  %165 = vmatpush1.msra.mxu0 0.0
  %166 = vmatprep.subr.mxu0 0.0
  %167 = vmatpush1.msra.mxu0 0.0
  %168 = vmatprep.subr.mxu0 0.0
  %169 = vmatpush1.msra.mxu0 0.0
  %170 = vmatprep.subr.mxu0 0.0
  %171 = vmatpush1.msra.mxu0 0.0
  %172 = vmatprep.subr.mxu0 0.0
  %173 = vmatpush1.msra.mxu0 0.0
  %174 = vmatprep.subr.mxu0 0.0
  %175 = vmatpush1.msra.mxu0 0.0
  %176 = vmatprep.subr.mxu0 0.0
  %177 = vmatpush1.msra.mxu0 0.0
  %178 = vmatprep.subr.mxu0 0.0
  %179 = vmatpush1.msra.mxu0 0.0
  %180 = vmatprep.subr.mxu0 0.0
  %181 = vmatpush1.msra.mxu0 0.0
  %182 = vmatprep.subr.mxu0 0.0
  %183 = vmatpush1.msra.mxu0 0.0
  %184 = vmatprep.subr.mxu0 0.0
  %185 = vmatpush1.msra.mxu0 0.0
  %186 = vmatprep.subr.mxu0 0.0
  %187 = vmatpush1.msra.mxu0 0.0
  %188 = vmatprep.subr.mxu0 0.0
  %189 = vmatpush1.msra.mxu0 0.0
  %190 = vmatprep.subr.mxu0 0.0
  %191 = vmatpush1.msra.mxu0 0.0
  %192 = vmatprep.subr.mxu0 0.0
  %193 = vmatpush1.msra.mxu0 0.0
  %194 = vmatprep.subr.mxu0 0.0
  %195 = vmatpush1.msra.mxu0 0.0
  %196 = vmatprep.subr.mxu0 0.0
  %197 = vmatpush1.msra.mxu0 0.0
  %198 = vmatprep.subr.mxu0 0.0
  %199 = vmatpush1.msra.mxu0 0.0
  %200 = vmatprep.subr.mxu0 0.0
  %201 = vmatpush1.msra.mxu0 0.0
  %202 = vmatprep.subr.mxu0 0.0
  %203 = vmatpush1.msra.mxu0 0.0
  %204 = vmatprep.subr.mxu0 0.0
  %205 = vmatpush1.msra.mxu0 0.0
  %206 = vmatprep.subr.mxu0 0.0
  %207 = vmatpush1.msra.mxu0 0.0
  %208 = vmatprep.subr.mxu0 0.0
  %209 = vmatpush1.msra.mxu0 0.0
  %210 = vmatprep.subr.mxu0 0.0
  %211 = vmatpush1.msra.mxu0 0.0
  %212 = vmatprep.subr.mxu0 0.0
  %213 = vmatpush1.msra.mxu0 0.0
  %214 = vmatprep.subr.mxu0 0.0
  %215 = vmatpush1.msra.mxu0 0.0
  %216 = vmatprep.mubr.f32.mxu0 0.0
  %217 = vmatmul.mubr.f32.gmra.mrb[0].mxu0 %v101
  %v218 = vpop.f32.mrb[0].mxu0
  %v219 = vadd.f32 0.0, %v218
  %v220 = vpop.f32.mrb[0].mxu0
  %221 = vmatprep.mubr.f32.mxu0 0.0
  %222 = vmatmul.mubr.f32.gmra.mrb[0].mxu0 %v104
  %v223 = vpop.f32.mrb[0].mxu0
  %v224 = vadd.f32 0.0, %v223
  %v225 = vpop.f32.mrb[0].mxu0
  %226 = vmatprep.mubr.f32.mxu0 0.0
  %227 = vmatmul.mubr.f32.gmra.mrb[0].mxu0 %v107
  %v228 = vpop.f32.mrb[0].mxu0
  %v229 = vadd.f32 0.0, %v228
  %v230 = vpop.f32.mrb[0].mxu0
  %231 = vmatprep.mubr.f32.mxu0 0.0
  %232 = vmatmul.mubr.f32.gmra.mrb[0].mxu0 %v110
  %v233 = vpop.f32.mrb[0].mxu0
  %v234 = vadd.f32 0.0, %v233
  %v235 = vpop.f32.mrb[0].mxu0
  %236 = vmatprep.mubr.f32.mxu0 0.0
  %237 = vmatmul.mubr.f32.gmra.mrb[0].mxu0 %v113
  %v238 = vpop.f32.mrb[0].mxu0
  %v239 = vadd.f32 0.0, %v238
  %v240 = vpop.f32.mrb[0].mxu0
  %241 = vmatprep.mubr.f32.mxu0 0.0
  %242 = vmatmul.mubr.f32.gmra.mrb[0].mxu0 %v116
  %v243 = vpop.f32.mrb[0].mxu0
  %v244 = vadd.f32 0.0, %v243
  %v245 = vpop.f32.mrb[0].mxu0
  %246 = vmatprep.mubr.f32.mxu0 0.0
  %247 = vmatmul.mubr.f32.gmra.mrb[0].mxu0 %v119
  %v248 = vpop.f32.mrb[0].mxu0
  %v249 = vadd.f32 0.0, %v248
  %v250 = vpop.f32.mrb[0].mxu0
  %251 = vmatprep.mubr.f32.mxu0 0.0
  %252 = vmatmul.mubr.f32.gmra.mrb[0].mxu0 %v122
  %v253 = vpop.f32.mrb[0].mxu0
  %v254 = vadd.f32 0.0, %v253
  %v255 = vpop.f32.mrb[0].mxu0
  %256 = vmatprep.mubr.f32.mxu0 0.0
  %257 = vmatmul.mubr.f32.gmra.mrb[0].mxu0 %v125
  %v258 = vpop.f32.mrb[0].mxu0
  %v259 = vadd.f32 0.0, %v258
  %v260 = vpop.f32.mrb[0].mxu0
  %261 = vmatprep.mubr.f32.mxu0 0.0
  %262 = vmatmul.mubr.f32.gmra.mrb[0].mxu0 %v128
  %v263 = vpop.f32.mrb[0].mxu0
  %v264 = vadd.f32 0.0, %v263
  %v265 = vpop.f32.mrb[0].mxu0
  %266 = vmatprep.mubr.f32.mxu0 0.0
  %267 = vmatmul.mubr.f32.gmra.mrb[0].mxu0 %v131
  %v268 = vpop.f32.mrb[0].mxu0
  %v269 = vadd.f32 0.0, %v268
  %v270 = vpop.f32.mrb[0].mxu0
  %271 = vmatprep.mubr.f32.mxu0 0.0
  %272 = vmatmul.mubr.f32.gmra.mrb[0].mxu0 %v134
  %v273 = vpop.f32.mrb[0].mxu0
  %v274 = vadd.f32 0.0, %v273
  %v275 = vpop.f32.mrb[0].mxu0
  %276 = vmatprep.mubr.f32.mxu0 0.0
  %277 = vmatmul.mubr.f32.gmra.mrb[0].mxu0 %v137
  %v278 = vpop.f32.mrb[0].mxu0
  %v279 = vadd.f32 0.0, %v278
  %v280 = vpop.f32.mrb[0].mxu0
  %281 = vmatprep.mubr.f32.mxu0 0.0
  %282 = vmatmul.mubr.f32.gmra.mrb[0].mxu0 %v140
  %v283 = vpop.f32.mrb[0].mxu0
  %v284 = vadd.f32 0.0, %v283
  %v285 = vpop.f32.mrb[0].mxu0
  %286 = vmatprep.mubr.f32.mxu0 0.0
  %287 = vmatmul.mubr.f32.gmra.mrb[0].mxu0 %v143
  %v288 = vpop.f32.mrb[0].mxu0
  %v289 = vadd.f32 0.0, %v288
  %v290 = vpop.f32.mrb[0].mxu0
  %291 = vmatprep.mubr.f32.mxu0 0.0
  %292 = vmatmul.mubr.f32.gmra.mrb[0].mxu0 %v146
  %v293 = vpop.f32.mrb[0].mxu0
  %v294 = vadd.f32 0.0, %v293
  %v295 = vpop.f32.mrb[0].mxu0
  %296 = vdwg.mxu0
  %vm297 = vcmask 64512
  %298 = vst.msk [vmem:[%s4] sm:$0xff] %vm297, %v219
  %299 = vst.msk [vmem:[%s4 + $0x8] sm:$0xff] %vm297, %v224
  %300 = vst.msk [vmem:[%s4 + $0x10] sm:$0xff] %vm297, %v229
  %301 = vst.msk [vmem:[%s4 + $0x18] sm:$0xff] %vm297, %v234
  %302 = vst.msk [vmem:[%s4 + $0x20] sm:$0xff] %vm297, %v239
  %303 = vst.msk [vmem:[%s4 + $0x28] sm:$0xff] %vm297, %v244
  %304 = vst.msk [vmem:[%s4 + $0x30] sm:$0xff] %vm297, %v249
  %305 = vst.msk [vmem:[%s4 + $0x38] sm:$0xff] %vm297, %v254
  %306 = vst.msk [vmem:[%s4 + $0x40] sm:$0xff] %vm297, %v259
  %307 = vst.msk [vmem:[%s4 + $0x48] sm:$0xff] %vm297, %v264
  %308 = vst.msk [vmem:[%s4 + $0x50] sm:$0xff] %vm297, %v269
  %309 = vst.msk [vmem:[%s4 + $0x58] sm:$0xff] %vm297, %v274
  %310 = vst.msk [vmem:[%s4 + $0x60] sm:$0xff] %vm297, %v279
  %311 = vst.msk [vmem:[%s4 + $0x68] sm:$0xff] %vm297, %v284
  %312 = vst.msk [vmem:[%s4 + $0x70] sm:$0xff] %vm297, %v289
  %313 = vst.msk [vmem:[%s4 + $0x78] sm:$0xff] %vm297, %v294
  %v314 = vsel %vm297, %v219, 0.0
  %v315 = vsel %vm297, %v224, 0.0
  %v316 = vadd.f32 %v314, %v315
  %v317 = vsel %vm297, %v229, 0.0
  %v318 = vadd.f32 %v316, %v317
  %v319 = vsel %vm297, %v234, 0.0
  %v320 = vadd.f32 %v318, %v319
  %v321 = vsel %vm297, %v239, 0.0
  %v322 = vadd.f32 %v320, %v321
  %v323 = vsel %vm297, %v244, 0.0
  %v324 = vadd.f32 %v322, %v323
  %v325 = vsel %vm297, %v249, 0.0
  %v326 = vadd.f32 %v324, %v325
  %v327 = vsel %vm297, %v254, 0.0
  %v328 = vadd.f32 %v326, %v327
  %v329 = vsel %vm297, %v259, 0.0
  %v330 = vadd.f32 %v328, %v329
  %v331 = vsel %vm297, %v264, 0.0
  %v332 = vadd.f32 %v330, %v331
  %v333 = vsel %vm297, %v269, 0.0
  %v334 = vadd.f32 %v332, %v333
  %v335 = vsel %vm297, %v274, 0.0
  %v336 = vadd.f32 %v334, %v335
  %v337 = vsel %vm297, %v279, 0.0
  %v338 = vadd.f32 %v336, %v337
  %v339 = vsel %vm297, %v284, 0.0
  %v340 = vadd.f32 %v338, %v339
  %v341 = vsel %vm297, %v289, 0.0
  %v342 = vadd.f32 %v340, %v341
  %v343 = vsel %vm297, %v294, 0.0
  %v344 = vadd.f32 %v342, %v343
  %v345 = vrot.slane %v344, 4
  %v346 = vadd.f32 %v344, %v345
  %v347 = vrot.slane %v346, 2
  %v348 = vadd.f32 %v346, %v347
  %v349 = vrot.slane %v348, 1
  %v350 = vadd.f32 %v348, %v349
  %vm351 = vcmask 57344
  %352 = vst.msk [vmem:[%s5] sm:$0x1] %vm351, %v350
  %v353 = vmul.f32 %v219, %v219
  %v354 = vmul.f32 %v224, %v224
  %v355 = vmul.f32 %v229, %v229
  %v356 = vmul.f32 %v234, %v234
  %v357 = vmul.f32 %v239, %v239
  %v358 = vmul.f32 %v244, %v244
  %v359 = vmul.f32 %v249, %v249
  %v360 = vmul.f32 %v254, %v254
  %v361 = vmul.f32 %v259, %v259
  %v362 = vmul.f32 %v264, %v264
  %v363 = vmul.f32 %v269, %v269
  %v364 = vmul.f32 %v274, %v274
  %v365 = vmul.f32 %v279, %v279
  %v366 = vmul.f32 %v284, %v284
  %v367 = vmul.f32 %v289, %v289
  %v368 = vmul.f32 %v294, %v294
  %v369 = vsel %vm297, %v353, 0.0
  %v370 = vsel %vm297, %v354, 0.0
  %v371 = vadd.f32 %v369, %v370
  %v372 = vsel %vm297, %v355, 0.0
  %v373 = vadd.f32 %v371, %v372
  %v374 = vsel %vm297, %v356, 0.0
  %v375 = vadd.f32 %v373, %v374
  %v376 = vsel %vm297, %v357, 0.0
  %v377 = vadd.f32 %v375, %v376
  %v378 = vsel %vm297, %v358, 0.0
  %v379 = vadd.f32 %v377, %v378
  %v380 = vsel %vm297, %v359, 0.0
  %v381 = vadd.f32 %v379, %v380
  %v382 = vsel %vm297, %v360, 0.0
  %v383 = vadd.f32 %v381, %v382
  %v384 = vsel %vm297, %v361, 0.0
  %v385 = vadd.f32 %v383, %v384
  %v386 = vsel %vm297, %v362, 0.0
  %v387 = vadd.f32 %v385, %v386
  %v388 = vsel %vm297, %v363, 0.0
  %v389 = vadd.f32 %v387, %v388
  %v390 = vsel %vm297, %v364, 0.0
  %v391 = vadd.f32 %v389, %v390
  %v392 = vsel %vm297, %v365, 0.0
  %v393 = vadd.f32 %v391, %v392
  %v394 = vsel %vm297, %v366, 0.0
  %v395 = vadd.f32 %v393, %v394
  %v396 = vsel %vm297, %v367, 0.0
  %v397 = vadd.f32 %v395, %v396
  %v398 = vsel %vm297, %v368, 0.0
  %v399 = vadd.f32 %v397, %v398
  %v400 = vrot.slane %v399, 4
  %v401 = vadd.f32 %v399, %v400
  %v402 = vrot.slane %v401, 2
  %v403 = vadd.f32 %v401, %v402
  %v404 = vrot.slane %v403, 1
  %v405 = vadd.f32 %v403, %v404
  %406 = vst.msk [vmem:[%s6] sm:$0x1] %vm351, %v405
  // Predicated region
  $region18: #{_unnamed_function_.7} parent=0 // pred_check
    _
  $region19: #{_unnamed_function_.7} parent=0 // pred_check_branch
    %408 = sbr.rel (0) target = $region21
  $region20: #{_unnamed_function_.7} parent=0 // pred_region
    _
  $region21: #{_unnamed_function_.7} parent=0 // pred_fallthru
    _
  // Predicated region
  $region22: #{_unnamed_function_.7} parent=0 // pred_check
    _
  $region23: #{_unnamed_function_.7} parent=0 // pred_check_branch
    %410 = sbr.rel (0) target = $region25
  $region24: #{_unnamed_function_.7} parent=0 // pred_region
    _
  $region25: #{_unnamed_function_.7} parent=0 // pred_fallthru
    _
  // Predicated region
  $region26: #{_unnamed_function_.7} parent=0 // pred_check
    _
  $region27: #{_unnamed_function_.7} parent=0 // pred_check_branch
    %412 = sbr.rel (0) target = $region29
  $region28: #{_unnamed_function_.7} parent=0 // pred_region
    _
  $region29: #{_unnamed_function_.7} parent=0 // pred_fallthru
    _
  // Predicated region
  $region30: #{_unnamed_function_.7} parent=0 // pred_check
    _
  $region31: #{_unnamed_function_.7} parent=0 // pred_check_branch
    %414 = sbr.rel (0) target = $region33
  $region32: #{_unnamed_function_.7} parent=0 // pred_region
    _
  $region33: #{_unnamed_function_.7} parent=0 // pred_fallthru
    _
  // Predicated region
  $region34: #{_unnamed_function_.7} parent=0 // pred_check
    _
  $region35: #{_unnamed_function_.7} parent=0 // pred_check_branch
    %416 = sbr.rel (0) target = $region37
  $region36: #{_unnamed_function_.7} parent=0 // pred_region
    _
  $region37: #{_unnamed_function_.7} parent=0 // pred_fallthru
    _
  // Predicated region
  $region38: #{_unnamed_function_.7} parent=0 // pred_check
    _
  $region39: #{_unnamed_function_.7} parent=0 // pred_check_branch
    %418 = sbr.rel (0) target = $region41
  $region40: #{_unnamed_function_.7} parent=0 // pred_region
    _
  $region41: #{_unnamed_function_.7} parent=0 // pred_fallthru
    _

// kernel: _unnamed_function_.8
$region0: #{_unnamed_function_.8}
  #allocation0 [shape = 'u32[]', space=smem, size = 0x4, offset = 0x4, fixed_abs, tag = 'smem constant byte address 0x4 - core index']
  #allocation1 [shape = 'u32[144,128]{1,0:T(1,128)}', space=vmem, size = 0x12000, scoped, tag = 'internal scratch']
  %s0 = inlined_call_operand.vmem [shape: f32[128,4], index: 0, kind: input, shape index: {}]
  %s1 = inlined_call_operand.vmem [shape: f32[4,8], index: 1, kind: input, shape index: {}]
  %s2 = inlined_call_operand.vmem [shape: f32[128,8], index: 2, kind: output, shape index: {0}]
  %s3 = inlined_call_operand.vmem [shape: f32[1,1,8], index: 3, kind: output, shape index: {1}]
  %s4 = inlined_call_operand.vmem [shape: f32[1,1,8], index: 4, kind: output, shape index: {2}]
  %5 = xla_tuple %s2, %s3, %s4
  %s6 = sld [smem:[#allocation0]]
  $region34: #{_unnamed_function_.8} parent=0
    _
  %s8 = ssub.s32 1, %s6
  %s9 = scalar_select 0, %s8, %s6
  // Predicated region
  $region2: #{_unnamed_function_.8} parent=0 // pred_check
    _
  $region3: #{_unnamed_function_.8} parent=0 // pred_check_branch
    %11 = sbr.rel (0) target = $region5
  $region4: #{_unnamed_function_.8} parent=0 // pred_region
    _
  $region5: #{_unnamed_function_.8} parent=0 // pred_fallthru
    _
  // Predicated region
  $region6: #{_unnamed_function_.8} parent=0 // pred_check
    _
  $region7: #{_unnamed_function_.8} parent=0 // pred_check_branch
    %13 = sbr.rel (0) target = $region9
  $region8: #{_unnamed_function_.8} parent=0 // pred_region
    _
  $region9: #{_unnamed_function_.8} parent=0 // pred_fallthru
    _
  %v14 = vld [vmem:[%s0] sm:$0xff]
  %v15 = vld [vmem:[%s0 + $0x8] sm:$0xff]
  %v16 = vld [vmem:[%s0 + $0x10] sm:$0xff]
  %v17 = vld [vmem:[%s0 + $0x18] sm:$0xff]
  %v18 = vld [vmem:[%s0 + $0x20] sm:$0xff]
  %v19 = vld [vmem:[%s0 + $0x28] sm:$0xff]
  %v20 = vld [vmem:[%s0 + $0x30] sm:$0xff]
  %v21 = vld [vmem:[%s0 + $0x38] sm:$0xff]
  %v22 = vld [vmem:[%s0 + $0x40] sm:$0xff]
  %v23 = vld [vmem:[%s0 + $0x48] sm:$0xff]
  %v24 = vld [vmem:[%s0 + $0x50] sm:$0xff]
  %v25 = vld [vmem:[%s0 + $0x58] sm:$0xff]
  %v26 = vld [vmem:[%s0 + $0x60] sm:$0xff]
  %v27 = vld [vmem:[%s0 + $0x68] sm:$0xff]
  %v28 = vld [vmem:[%s0 + $0x70] sm:$0xff]
  %v29 = vld [vmem:[%s0 + $0x78] sm:$0xff]
  %v30 = vld [vmem:[%s1] sm:$0xf]
  %vm31 = vcmask 31744
  %v33 = vsel %vm31, %v14, 0
  %v36 = vsel %vm31, %v15, 0
  %v39 = vsel %vm31, %v16, 0
  %v42 = vsel %vm31, %v17, 0
  %v45 = vsel %vm31, %v18, 0
  %v48 = vsel %vm31, %v19, 0
  %v51 = vsel %vm31, %v20, 0
  %v54 = vsel %vm31, %v21, 0
  %v57 = vsel %vm31, %v22, 0
  %v60 = vsel %vm31, %v23, 0
  %v63 = vsel %vm31, %v24, 0
  %v66 = vsel %vm31, %v25, 0
  %v69 = vsel %vm31, %v26, 0
  %v72 = vsel %vm31, %v27, 0
  %v75 = vsel %vm31, %v28, 0
  %v78 = vsel %vm31, %v29, 0
  %vm80 = vcmask 1043456
  %v82 = vsel %vm80, %v30, 0
  %84 = vmatprep.subr.mxu0 0.0
  %85 = vmatpush1.msra.mxu0 %v82
  %86 = vmatprep.subr.mxu0 0.0
  %87 = vmatpush1.msra.mxu0 0.0
  %88 = vmatprep.subr.mxu0 0.0
  %89 = vmatpush1.msra.mxu0 0.0
  %90 = vmatprep.subr.mxu0 0.0
  %91 = vmatpush1.msra.mxu0 0.0
  %92 = vmatprep.subr.mxu0 0.0
  %93 = vmatpush1.msra.mxu0 0.0
  %94 = vmatprep.subr.mxu0 0.0
  %95 = vmatpush1.msra.mxu0 0.0
  %96 = vmatprep.subr.mxu0 0.0
  %97 = vmatpush1.msra.mxu0 0.0
  %98 = vmatprep.subr.mxu0 0.0
  %99 = vmatpush1.msra.mxu0 0.0
  %100 = vmatprep.subr.mxu0 0.0
  %101 = vmatpush1.msra.mxu0 0.0
  %102 = vmatprep.subr.mxu0 0.0
  %103 = vmatpush1.msra.mxu0 0.0
  %104 = vmatprep.subr.mxu0 0.0
  %105 = vmatpush1.msra.mxu0 0.0
  %106 = vmatprep.subr.mxu0 0.0
  %107 = vmatpush1.msra.mxu0 0.0
  %108 = vmatprep.subr.mxu0 0.0
  %109 = vmatpush1.msra.mxu0 0.0
  %110 = vmatprep.subr.mxu0 0.0
  %111 = vmatpush1.msra.mxu0 0.0
  %112 = vmatprep.subr.mxu0 0.0
  %113 = vmatpush1.msra.mxu0 0.0
  %114 = vmatprep.subr.mxu0 0.0
  %115 = vmatpush1.msra.mxu0 0.0
  %116 = vmatprep.subr.mxu0 0.0
  %117 = vmatpush1.msra.mxu0 0.0
  %118 = vmatprep.subr.mxu0 0.0
  %119 = vmatpush1.msra.mxu0 0.0
  %120 = vmatprep.subr.mxu0 0.0
  %121 = vmatpush1.msra.mxu0 0.0
  %122 = vmatprep.subr.mxu0 0.0
  %123 = vmatpush1.msra.mxu0 0.0
  %124 = vmatprep.subr.mxu0 0.0
  %125 = vmatpush1.msra.mxu0 0.0
  %126 = vmatprep.subr.mxu0 0.0
  %127 = vmatpush1.msra.mxu0 0.0
  %128 = vmatprep.subr.mxu0 0.0
  %129 = vmatpush1.msra.mxu0 0.0
  %130 = vmatprep.subr.mxu0 0.0
  %131 = vmatpush1.msra.mxu0 0.0
  %132 = vmatprep.subr.mxu0 0.0
  %133 = vmatpush1.msra.mxu0 0.0
  %134 = vmatprep.subr.mxu0 0.0
  %135 = vmatpush1.msra.mxu0 0.0
  %136 = vmatprep.subr.mxu0 0.0
  %137 = vmatpush1.msra.mxu0 0.0
  %138 = vmatprep.subr.mxu0 0.0
  %139 = vmatpush1.msra.mxu0 0.0
  %140 = vmatprep.subr.mxu0 0.0
  %141 = vmatpush1.msra.mxu0 0.0
  %142 = vmatprep.subr.mxu0 0.0
  %143 = vmatpush1.msra.mxu0 0.0
  %144 = vmatprep.subr.mxu0 0.0
  %145 = vmatpush1.msra.mxu0 0.0
  %146 = vmatprep.subr.mxu0 0.0
  %147 = vmatpush1.msra.mxu0 0.0
  %148 = vmatprep.mubr.f32.mxu0 0.0
  %149 = vmatmul.mubr.f32.gmra.mrb[0].mxu0 %v33
  %v150 = vpop.f32.mrb[0].mxu0
  %v151 = vadd.f32 0.0, %v150
  %v152 = vpop.f32.mrb[0].mxu0
  %153 = vmatprep.mubr.f32.mxu0 0.0
  %154 = vmatmul.mubr.f32.gmra.mrb[0].mxu0 %v36
  %v155 = vpop.f32.mrb[0].mxu0
  %v156 = vadd.f32 0.0, %v155
  %v157 = vpop.f32.mrb[0].mxu0
  %158 = vmatprep.mubr.f32.mxu0 0.0
  %159 = vmatmul.mubr.f32.gmra.mrb[0].mxu0 %v39
  %v160 = vpop.f32.mrb[0].mxu0
  %v161 = vadd.f32 0.0, %v160
  %v162 = vpop.f32.mrb[0].mxu0
  %163 = vmatprep.mubr.f32.mxu0 0.0
  %164 = vmatmul.mubr.f32.gmra.mrb[0].mxu0 %v42
  %v165 = vpop.f32.mrb[0].mxu0
  %v166 = vadd.f32 0.0, %v165
  %v167 = vpop.f32.mrb[0].mxu0
  %168 = vmatprep.mubr.f32.mxu0 0.0
  %169 = vmatmul.mubr.f32.gmra.mrb[0].mxu0 %v45
  %v170 = vpop.f32.mrb[0].mxu0
  %v171 = vadd.f32 0.0, %v170
  %v172 = vpop.f32.mrb[0].mxu0
  %173 = vmatprep.mubr.f32.mxu0 0.0
  %174 = vmatmul.mubr.f32.gmra.mrb[0].mxu0 %v48
  %v175 = vpop.f32.mrb[0].mxu0
  %v176 = vadd.f32 0.0, %v175
  %v177 = vpop.f32.mrb[0].mxu0
  %178 = vmatprep.mubr.f32.mxu0 0.0
  %179 = vmatmul.mubr.f32.gmra.mrb[0].mxu0 %v51
  %v180 = vpop.f32.mrb[0].mxu0
  %v181 = vadd.f32 0.0, %v180
  %v182 = vpop.f32.mrb[0].mxu0
  %183 = vmatprep.mubr.f32.mxu0 0.0
  %184 = vmatmul.mubr.f32.gmra.mrb[0].mxu0 %v54
  %v185 = vpop.f32.mrb[0].mxu0
  %v186 = vadd.f32 0.0, %v185
  %v187 = vpop.f32.mrb[0].mxu0
  %188 = vmatprep.mubr.f32.mxu0 0.0
  %189 = vmatmul.mubr.f32.gmra.mrb[0].mxu0 %v57
  %v190 = vpop.f32.mrb[0].mxu0
  %v191 = vadd.f32 0.0, %v190
  %v192 = vpop.f32.mrb[0].mxu0
  %193 = vmatprep.mubr.f32.mxu0 0.0
  %194 = vmatmul.mubr.f32.gmra.mrb[0].mxu0 %v60
  %v195 = vpop.f32.mrb[0].mxu0
  %v196 = vadd.f32 0.0, %v195
  %v197 = vpop.f32.mrb[0].mxu0
  %198 = vmatprep.mubr.f32.mxu0 0.0
  %199 = vmatmul.mubr.f32.gmra.mrb[0].mxu0 %v63
  %v200 = vpop.f32.mrb[0].mxu0
  %v201 = vadd.f32 0.0, %v200
  %v202 = vpop.f32.mrb[0].mxu0
  %203 = vmatprep.mubr.f32.mxu0 0.0
  %204 = vmatmul.mubr.f32.gmra.mrb[0].mxu0 %v66
  %v205 = vpop.f32.mrb[0].mxu0
  %v206 = vadd.f32 0.0, %v205
  %v207 = vpop.f32.mrb[0].mxu0
  %208 = vmatprep.mubr.f32.mxu0 0.0
  %209 = vmatmul.mubr.f32.gmra.mrb[0].mxu0 %v69
  %v210 = vpop.f32.mrb[0].mxu0
  %v211 = vadd.f32 0.0, %v210
  %v212 = vpop.f32.mrb[0].mxu0
  %213 = vmatprep.mubr.f32.mxu0 0.0
  %214 = vmatmul.mubr.f32.gmra.mrb[0].mxu0 %v72
  %v215 = vpop.f32.mrb[0].mxu0
  %v216 = vadd.f32 0.0, %v215
  %v217 = vpop.f32.mrb[0].mxu0
  %218 = vmatprep.mubr.f32.mxu0 0.0
  %219 = vmatmul.mubr.f32.gmra.mrb[0].mxu0 %v75
  %v220 = vpop.f32.mrb[0].mxu0
  %v221 = vadd.f32 0.0, %v220
  %v222 = vpop.f32.mrb[0].mxu0
  %223 = vmatprep.mubr.f32.mxu0 0.0
  %224 = vmatmul.mubr.f32.gmra.mrb[0].mxu0 %v78
  %v225 = vpop.f32.mrb[0].mxu0
  %v226 = vadd.f32 0.0, %v225
  %v227 = vpop.f32.mrb[0].mxu0
  %228 = vdwg.mxu0
  %vm229 = vcmask 64512
  %230 = vst.msk [vmem:[%s2] sm:$0xff] %vm229, %v151
  %231 = vst.msk [vmem:[%s2 + $0x8] sm:$0xff] %vm229, %v156
  %232 = vst.msk [vmem:[%s2 + $0x10] sm:$0xff] %vm229, %v161
  %233 = vst.msk [vmem:[%s2 + $0x18] sm:$0xff] %vm229, %v166
  %234 = vst.msk [vmem:[%s2 + $0x20] sm:$0xff] %vm229, %v171
  %235 = vst.msk [vmem:[%s2 + $0x28] sm:$0xff] %vm229, %v176
  %236 = vst.msk [vmem:[%s2 + $0x30] sm:$0xff] %vm229, %v181
  %237 = vst.msk [vmem:[%s2 + $0x38] sm:$0xff] %vm229, %v186
  %238 = vst.msk [vmem:[%s2 + $0x40] sm:$0xff] %vm229, %v191
  %239 = vst.msk [vmem:[%s2 + $0x48] sm:$0xff] %vm229, %v196
  %240 = vst.msk [vmem:[%s2 + $0x50] sm:$0xff] %vm229, %v201
  %241 = vst.msk [vmem:[%s2 + $0x58] sm:$0xff] %vm229, %v206
  %242 = vst.msk [vmem:[%s2 + $0x60] sm:$0xff] %vm229, %v211
  %243 = vst.msk [vmem:[%s2 + $0x68] sm:$0xff] %vm229, %v216
  %244 = vst.msk [vmem:[%s2 + $0x70] sm:$0xff] %vm229, %v221
  %245 = vst.msk [vmem:[%s2 + $0x78] sm:$0xff] %vm229, %v226
  %v246 = vsel %vm229, %v151, 0.0
  %v247 = vsel %vm229, %v156, 0.0
  %v248 = vadd.f32 %v246, %v247
  %v249 = vsel %vm229, %v161, 0.0
  %v250 = vadd.f32 %v248, %v249
  %v251 = vsel %vm229, %v166, 0.0
  %v252 = vadd.f32 %v250, %v251
  %v253 = vsel %vm229, %v171, 0.0
  %v254 = vadd.f32 %v252, %v253
  %v255 = vsel %vm229, %v176, 0.0
  %v256 = vadd.f32 %v254, %v255
  %v257 = vsel %vm229, %v181, 0.0
  %v258 = vadd.f32 %v256, %v257
  %v259 = vsel %vm229, %v186, 0.0
  %v260 = vadd.f32 %v258, %v259
  %v261 = vsel %vm229, %v191, 0.0
  %v262 = vadd.f32 %v260, %v261
  %v263 = vsel %vm229, %v196, 0.0
  %v264 = vadd.f32 %v262, %v263
  %v265 = vsel %vm229, %v201, 0.0
  %v266 = vadd.f32 %v264, %v265
  %v267 = vsel %vm229, %v206, 0.0
  %v268 = vadd.f32 %v266, %v267
  %v269 = vsel %vm229, %v211, 0.0
  %v270 = vadd.f32 %v268, %v269
  %v271 = vsel %vm229, %v216, 0.0
  %v272 = vadd.f32 %v270, %v271
  %v273 = vsel %vm229, %v221, 0.0
  %v274 = vadd.f32 %v272, %v273
  %v275 = vsel %vm229, %v226, 0.0
  %v276 = vadd.f32 %v274, %v275
  %v277 = vrot.slane %v276, 4
  %v278 = vadd.f32 %v276, %v277
  %v279 = vrot.slane %v278, 2
  %v280 = vadd.f32 %v278, %v279
  %v281 = vrot.slane %v280, 1
  %v282 = vadd.f32 %v280, %v281
  %vm283 = vcmask 57344
  %284 = vst.msk [vmem:[%s3] sm:$0x1] %vm283, %v282
  %v285 = vmul.f32 %v151, %v151
  %v286 = vmul.f32 %v156, %v156
  %v287 = vmul.f32 %v161, %v161
  %v288 = vmul.f32 %v166, %v166
  %v289 = vmul.f32 %v171, %v171
  %v290 = vmul.f32 %v176, %v176
  %v291 = vmul.f32 %v181, %v181
  %v292 = vmul.f32 %v186, %v186
  %v293 = vmul.f32 %v191, %v191
  %v294 = vmul.f32 %v196, %v196
  %v295 = vmul.f32 %v201, %v201
  %v296 = vmul.f32 %v206, %v206
  %v297 = vmul.f32 %v211, %v211
  %v298 = vmul.f32 %v216, %v216
  %v299 = vmul.f32 %v221, %v221
  %v300 = vmul.f32 %v226, %v226
  %v301 = vsel %vm229, %v285, 0.0
  %v302 = vsel %vm229, %v286, 0.0
  %v303 = vadd.f32 %v301, %v302
  %v304 = vsel %vm229, %v287, 0.0
  %v305 = vadd.f32 %v303, %v304
  %v306 = vsel %vm229, %v288, 0.0
  %v307 = vadd.f32 %v305, %v306
  %v308 = vsel %vm229, %v289, 0.0
  %v309 = vadd.f32 %v307, %v308
  %v310 = vsel %vm229, %v290, 0.0
  %v311 = vadd.f32 %v309, %v310
  %v312 = vsel %vm229, %v291, 0.0
  %v313 = vadd.f32 %v311, %v312
  %v314 = vsel %vm229, %v292, 0.0
  %v315 = vadd.f32 %v313, %v314
  %v316 = vsel %vm229, %v293, 0.0
  %v317 = vadd.f32 %v315, %v316
  %v318 = vsel %vm229, %v294, 0.0
  %v319 = vadd.f32 %v317, %v318
  %v320 = vsel %vm229, %v295, 0.0
  %v321 = vadd.f32 %v319, %v320
  %v322 = vsel %vm229, %v296, 0.0
  %v323 = vadd.f32 %v321, %v322
  %v324 = vsel %vm229, %v297, 0.0
  %v325 = vadd.f32 %v323, %v324
  %v326 = vsel %vm229, %v298, 0.0
  %v327 = vadd.f32 %v325, %v326
  %v328 = vsel %vm229, %v299, 0.0
  %v329 = vadd.f32 %v327, %v328
  %v330 = vsel %vm229, %v300, 0.0
  %v331 = vadd.f32 %v329, %v330
  %v332 = vrot.slane %v331, 4
  %v333 = vadd.f32 %v331, %v332
  %v334 = vrot.slane %v333, 2
  %v335 = vadd.f32 %v333, %v334
  %v336 = vrot.slane %v335, 1
  %v337 = vadd.f32 %v335, %v336
  %338 = vst.msk [vmem:[%s4] sm:$0x1] %vm283, %v337
  // Predicated region
  $region10: #{_unnamed_function_.8} parent=0 // pred_check
    _
  $region11: #{_unnamed_function_.8} parent=0 // pred_check_branch
    %340 = sbr.rel (0) target = $region13
  $region12: #{_unnamed_function_.8} parent=0 // pred_region
    _
  $region13: #{_unnamed_function_.8} parent=0 // pred_fallthru
    _
  // Predicated region
  $region14: #{_unnamed_function_.8} parent=0 // pred_check
    _
  $region15: #{_unnamed_function_.8} parent=0 // pred_check_branch
    %342 = sbr.rel (0) target = $region17
  $region16: #{_unnamed_function_.8} parent=0 // pred_region
    _
  $region17: #{_unnamed_function_.8} parent=0 // pred_fallthru
    _
  // Predicated region
  $region18: #{_unnamed_function_.8} parent=0 // pred_check
    _
  $region19: #{_unnamed_function_.8} parent=0 // pred_check_branch
    %344 = sbr.rel (0) target = $region21
  $region20: #{_unnamed_function_.8} parent=0 // pred_region
    _
  $region21: #{_unnamed_function_.8} parent=0 // pred_fallthru
    _
  // Predicated region
  $region22: #{_unnamed_function_.8} parent=0 // pred_check
    _
  $region23: #{_unnamed_function_.8} parent=0 // pred_check_branch
    %346 = sbr.rel (0) target = $region25
  $region24: #{_unnamed_function_.8} parent=0 // pred_region
    _
  $region25: #{_unnamed_function_.8} parent=0 // pred_fallthru
    _
  // Predicated region
  $region26: #{_unnamed_function_.8} parent=0 // pred_check
    _
  $region27: #{_unnamed_function_.8} parent=0 // pred_check_branch
    %348 = sbr.rel (0) target = $region29
  $region28: #{_unnamed_function_.8} parent=0 // pred_region
    _
  $region29: #{_unnamed_function_.8} parent=0 // pred_fallthru
    _
  // Predicated region
  $region30: #{_unnamed_function_.8} parent=0 // pred_check
    _
  $region31: #{_unnamed_function_.8} parent=0 // pred_check_branch
    %350 = sbr.rel (0) target = $region33
  $region32: #{_unnamed_function_.8} parent=0 // pred_region
    _
  $region33: #{_unnamed_function_.8} parent=0 // pred_fallthru
    _

// kernel: _unnamed_function_.6
$region0: #{_unnamed_function_.6}
  #allocation0 [shape = 'u32[]', space=smem, size = 0x4, offset = 0x4, fixed_abs, tag = 'smem constant byte address 0x4 - core index']
  #allocation1 [shape = 'u32[144,128]{1,0:T(1,128)}', space=vmem, size = 0x12000, scoped, tag = 'internal scratch']
  #allocation2 [shape = 'f32[9,9,4]{2,1,0:T(8,128)}', space=vmem, size = 0x12000, scoped, tag = 'scratch operand']
  #allocation3 [shape = 'f32[9,8,4]{2,1,0:T(8,128)}', space=vmem, size = 0x9000, scoped, tag = 'scratch operand']
  #allocation4 [shape = 'f32[8,9,4]{2,1,0:T(8,128)}', space=vmem, size = 0x10000, scoped, tag = 'scratch operand']
  #allocation5 [shape = 'f32[8,8,4]{2,1,0:T(8,128)}', space=vmem, size = 0x8000, scoped, tag = 'scratch operand']
  %s0 = inlined_call_operand.vmem [shape: f32[2,8,8,4], index: 0, kind: input, shape index: {}]
  %s1 = inlined_call_operand.vmem [shape: f32[2,8,8,4], index: 1, kind: input, shape index: {}]
  %s2 = inlined_call_operand.vmem [shape: f32[2,8,8,4], index: 2, kind: input, shape index: {}]
  %s3 = inlined_call_operand.vmem [shape: f32[2,8,8,4], index: 3, kind: input, shape index: {}]
  %s4 = inlined_call_operand.vmem [shape: f32[1,4], index: 4, kind: input, shape index: {}]
  %s5 = inlined_call_operand.vmem [shape: f32[1,4], index: 5, kind: input, shape index: {}]
  %s6 = inlined_call_operand.vmem [shape: f32[9,4,4], index: 6, kind: input, shape index: {}]
  %s7 = inlined_call_operand.vmem [shape: f32[2,64,4], index: 7, kind: output, shape index: {0}]
  %s8 = inlined_call_operand.vmem [shape: f32[2,1,4], index: 8, kind: output, shape index: {1}]
  %s9 = inlined_call_operand.vmem [shape: f32[2,1,4], index: 9, kind: output, shape index: {2}]
  %10 = xla_tuple %s7, %s8, %s9
  %s11 = sld [smem:[#allocation0]]
  $region77: #{_unnamed_function_.6} parent=0
    _
  %s13 = ssub.s32 1, %s11
  %s14 = scalar_select 0, %s13, %s11
  loop: start=0, step=1, limit=4
  $region2: #{_unnamed_function_.6} parent=0 // loop_pre_header
    _
  $region3: #{_unnamed_function_.6} parent=0 // loop_header
    %s16 = sphi 0, %s20
    %p17 = scmp.ge.s32.totalorder %s16, 4
    %s26 = sphi 0, %s28
    %s29 = sphi 0, %s26
    %s30 = sphi 0, %s29
    %s46 = sphi 0, %s30
    %s52 = sphi 0, %s54
    %s55 = sphi 0, %s52
    %s56 = sphi 0, %s55
    %s72 = sphi 0, %s56
    %s78 = sphi 0, %s80
    %s81 = sphi 0, %s78
    %s82 = sphi 0, %s81
    %s98 = sphi 0, %s82
    %s104 = sphi 0, %s106
    %s107 = sphi 0, %s104
    %s108 = sphi 0, %s107
    %s124 = sphi 0, %s108
    %s128 = sphi 0, %s128
    %s130 = sphi 0, %s128
    %s131 = sphi 0, %s130
    %s145 = sphi 0, %s131
    %s149 = sphi 0, %s149
    %s151 = sphi 0, %s149
    %s152 = sphi 0, %s151
    %s166 = sphi 0, %s152
    %s170 = sphi 0, %s170
    %s172 = sphi 0, %s170
    %s173 = sphi 0, %s172
    %s187 = sphi 0, %s173
    %s193 = sphi 0, %s195
    %s196 = sphi 0, %s193
    %s197 = sphi 0, %s196
    %s213 = sphi 0, %s197
    %s219 = sphi 0, %s221
    %s222 = sphi 0, %s219
    %s223 = sphi 0, %s222
    %s239 = sphi 0, %s223
    %s245 = sphi 0, %s247
    %s248 = sphi 0, %s245
    %s249 = sphi 0, %s248
    %s265 = sphi 0, %s249
  $region4: #{_unnamed_function_.6} parent=0 // loop_header_branch
    %19 = sbr.rel (%p17) target = $region8
  $region5: #{_unnamed_function_.6} parent=0 // loop_body
    %s21 = ssub.s32 %s16, 1
    %s22 = ssub.s32 %s16, 2
    %s23 = sadd.s32 %s16, 1
    %s24 = ssub.s32 %s16, %s23
    %p25 = scmp.eq.s32.totalorder %s24, 0
    %s27 = sadd.s32 %s26, 1
    %s28 = scalar_select %p25, %s26, %s27
    %p31 = pneg %p25
    %p32 = scmp.eq.s32.totalorder %s16, 1
    %p33 = por %p31, %p32
    %p34 = scmp.ne.s32.totalorder %s26, %s29
    %p35 = scmp.eq.s32.totalorder %s16, 0
    %p36 = por %p34, %p35
    %p37 = scmp.ne.s32.totalorder %s26, %s29
    %p38 = scmp.eq.s32.totalorder %s21, 1
    %p39 = por %p37, %p38
    %p40 = scmp.ne.s32.totalorder %s29, %s30
    %p41 = scmp.eq.s32.totalorder %s21, 0
    %p42 = por %p40, %p41
    %p43 = scmp.ne.s32.totalorder %s29, %s30
    %p44 = scmp.eq.s32.totalorder %s22, 1
    %p45 = por %p43, %p44
    %p47 = scmp.ne.s32.totalorder %s30, %s46
    %p48 = scmp.eq.s32.totalorder %s22, 0
    %p49 = por %p47, %p48
    %s50 = ssub.s32 %s16, %s23
    %p51 = scmp.eq.s32.totalorder %s50, 0
    %s53 = sadd.s32 %s52, 1
    %s54 = scalar_select %p51, %s52, %s53
    %p57 = pneg %p51
    %p58 = scmp.eq.s32.totalorder %s16, 1
    %p59 = por %p57, %p58
    %p60 = scmp.ne.s32.totalorder %s52, %s55
    %p61 = scmp.eq.s32.totalorder %s16, 0
    %p62 = por %p60, %p61
    %p63 = scmp.ne.s32.totalorder %s52, %s55
    %p64 = scmp.eq.s32.totalorder %s21, 1
    %p65 = por %p63, %p64
    %p66 = scmp.ne.s32.totalorder %s55, %s56
    %p67 = scmp.eq.s32.totalorder %s21, 0
    %p68 = por %p66, %p67
    %p69 = scmp.ne.s32.totalorder %s55, %s56
    %p70 = scmp.eq.s32.totalorder %s22, 1
    %p71 = por %p69, %p70
    %p73 = scmp.ne.s32.totalorder %s56, %s72
    %p74 = scmp.eq.s32.totalorder %s22, 0
    %p75 = por %p73, %p74
    %s76 = ssub.s32 %s16, %s23
    %p77 = scmp.eq.s32.totalorder %s76, 0
    %s79 = sadd.s32 %s78, 1
    %s80 = scalar_select %p77, %s78, %s79
    %p83 = pneg %p77
    %p84 = scmp.eq.s32.totalorder %s16, 1
    %p85 = por %p83, %p84
    %p86 = scmp.ne.s32.totalorder %s78, %s81
    %p87 = scmp.eq.s32.totalorder %s16, 0
    %p88 = por %p86, %p87
    %p89 = scmp.ne.s32.totalorder %s78, %s81
    %p90 = scmp.eq.s32.totalorder %s21, 1
    %p91 = por %p89, %p90
    %p92 = scmp.ne.s32.totalorder %s81, %s82
    %p93 = scmp.eq.s32.totalorder %s21, 0
    %p94 = por %p92, %p93
    %p95 = scmp.ne.s32.totalorder %s81, %s82
    %p96 = scmp.eq.s32.totalorder %s22, 1
    %p97 = por %p95, %p96
    %p99 = scmp.ne.s32.totalorder %s82, %s98
    %p100 = scmp.eq.s32.totalorder %s22, 0
    %p101 = por %p99, %p100
    %s102 = ssub.s32 %s16, %s23
    %p103 = scmp.eq.s32.totalorder %s102, 0
    %s105 = sadd.s32 %s104, 1
    %s106 = scalar_select %p103, %s104, %s105
    %p109 = pneg %p103
    %p110 = scmp.eq.s32.totalorder %s16, 1
    %p111 = por %p109, %p110
    %p112 = scmp.ne.s32.totalorder %s104, %s107
    %p113 = scmp.eq.s32.totalorder %s16, 0
    %p114 = por %p112, %p113
    %p115 = scmp.ne.s32.totalorder %s104, %s107
    %p116 = scmp.eq.s32.totalorder %s21, 1
    %p117 = por %p115, %p116
    %p118 = scmp.ne.s32.totalorder %s107, %s108
    %p119 = scmp.eq.s32.totalorder %s21, 0
    %p120 = por %p118, %p119
    %p121 = scmp.ne.s32.totalorder %s107, %s108
    %p122 = scmp.eq.s32.totalorder %s22, 1
    %p123 = por %p121, %p122
    %p125 = scmp.ne.s32.totalorder %s108, %s124
    %p126 = scmp.eq.s32.totalorder %s22, 0
    %p127 = por %p125, %p126
    %s129 = sadd.s32 %s128, 1
    %p132 = scmp.eq.s32.totalorder %s16, 1
    %p133 = scmp.ne.s32.totalorder %s128, %s130
    %p134 = scmp.eq.s32.totalorder %s16, 0
    %p135 = por %p133, %p134
    %p136 = scmp.ne.s32.totalorder %s128, %s130
    %p137 = scmp.eq.s32.totalorder %s21, 1
    %p138 = por %p136, %p137
    %p139 = scmp.ne.s32.totalorder %s130, %s131
    %p140 = scmp.eq.s32.totalorder %s21, 0
    %p141 = por %p139, %p140
    %p142 = scmp.ne.s32.totalorder %s130, %s131
    %p143 = scmp.eq.s32.totalorder %s22, 1
    %p144 = por %p142, %p143
    %p146 = scmp.ne.s32.totalorder %s131, %s145
    %p147 = scmp.eq.s32.totalorder %s22, 0
    %p148 = por %p146, %p147
    %s150 = sadd.s32 %s149, 1
    %p153 = scmp.eq.s32.totalorder %s16, 1
    %p154 = scmp.ne.s32.totalorder %s149, %s151
    %p155 = scmp.eq.s32.totalorder %s16, 0
    %p156 = por %p154, %p155
    %p157 = scmp.ne.s32.totalorder %s149, %s151
    %p158 = scmp.eq.s32.totalorder %s21, 1
    %p159 = por %p157, %p158
    %p160 = scmp.ne.s32.totalorder %s151, %s152
    %p161 = scmp.eq.s32.totalorder %s21, 0
    %p162 = por %p160, %p161
    %p163 = scmp.ne.s32.totalorder %s151, %s152
    %p164 = scmp.eq.s32.totalorder %s22, 1
    %p165 = por %p163, %p164
    %p167 = scmp.ne.s32.totalorder %s152, %s166
    %p168 = scmp.eq.s32.totalorder %s22, 0
    %p169 = por %p167, %p168
    %s171 = sadd.s32 %s170, 1
    %p174 = scmp.eq.s32.totalorder %s16, 1
    %p175 = scmp.ne.s32.totalorder %s170, %s172
    %p176 = scmp.eq.s32.totalorder %s16, 0
    %p177 = por %p175, %p176
    %p178 = scmp.ne.s32.totalorder %s170, %s172
    %p179 = scmp.eq.s32.totalorder %s21, 1
    %p180 = por %p178, %p179
    %p181 = scmp.ne.s32.totalorder %s172, %s173
    %p182 = scmp.eq.s32.totalorder %s21, 0
    %p183 = por %p181, %p182
    %p184 = scmp.ne.s32.totalorder %s172, %s173
    %p185 = scmp.eq.s32.totalorder %s22, 1
    %p186 = por %p184, %p185
    %p188 = scmp.ne.s32.totalorder %s173, %s187
    %p189 = scmp.eq.s32.totalorder %s22, 0
    %p190 = por %p188, %p189
    %s191 = ssub.s32 %s16, %s23
    %p192 = scmp.eq.s32.totalorder %s191, 0
    %s194 = sadd.s32 %s193, 1
    %s195 = scalar_select %p192, %s193, %s194
    %p198 = pneg %p192
    %p199 = scmp.eq.s32.totalorder %s16, 1
    %p200 = por %p198, %p199
    %p201 = scmp.ne.s32.totalorder %s193, %s196
    %p202 = scmp.eq.s32.totalorder %s16, 0
    %p203 = por %p201, %p202
    %p204 = scmp.ne.s32.totalorder %s193, %s196
    %p205 = scmp.eq.s32.totalorder %s21, 1
    %p206 = por %p204, %p205
    %p207 = scmp.ne.s32.totalorder %s196, %s197
    %p208 = scmp.eq.s32.totalorder %s21, 0
    %p209 = por %p207, %p208
    %p210 = scmp.ne.s32.totalorder %s196, %s197
    %p211 = scmp.eq.s32.totalorder %s22, 1
    %p212 = por %p210, %p211
    %p214 = scmp.ne.s32.totalorder %s197, %s213
    %p215 = scmp.eq.s32.totalorder %s22, 0
    %p216 = por %p214, %p215
    %s217 = ssub.s32 %s16, %s23
    %p218 = scmp.eq.s32.totalorder %s217, 0
    %s220 = sadd.s32 %s219, 1
    %s221 = scalar_select %p218, %s219, %s220
    %p224 = pneg %p218
    %p225 = scmp.eq.s32.totalorder %s16, 1
    %p226 = por %p224, %p225
    %p227 = scmp.ne.s32.totalorder %s219, %s222
    %p228 = scmp.eq.s32.totalorder %s16, 0
    %p229 = por %p227, %p228
    %p230 = scmp.ne.s32.totalorder %s219, %s222
    %p231 = scmp.eq.s32.totalorder %s21, 1
    %p232 = por %p230, %p231
    %p233 = scmp.ne.s32.totalorder %s222, %s223
    %p234 = scmp.eq.s32.totalorder %s21, 0
    %p235 = por %p233, %p234
    %p236 = scmp.ne.s32.totalorder %s222, %s223
    %p237 = scmp.eq.s32.totalorder %s22, 1
    %p238 = por %p236, %p237
    %p240 = scmp.ne.s32.totalorder %s223, %s239
    %p241 = scmp.eq.s32.totalorder %s22, 0
    %p242 = por %p240, %p241
    %s243 = ssub.s32 %s16, %s23
    %p244 = scmp.eq.s32.totalorder %s243, 0
    %s246 = sadd.s32 %s245, 1
    %s247 = scalar_select %p244, %s245, %s246
    %p250 = pneg %p244
    %p251 = scmp.eq.s32.totalorder %s16, 1
    %p252 = por %p250, %p251
    %p253 = scmp.ne.s32.totalorder %s245, %s248
    %p254 = scmp.eq.s32.totalorder %s16, 0
    %p255 = por %p253, %p254
    %p256 = scmp.ne.s32.totalorder %s245, %s248
    %p257 = scmp.eq.s32.totalorder %s21, 1
    %p258 = por %p256, %p257
    %p259 = scmp.ne.s32.totalorder %s248, %s249
    %p260 = scmp.eq.s32.totalorder %s21, 0
    %p261 = por %p259, %p260
    %p262 = scmp.ne.s32.totalorder %s248, %s249
    %p263 = scmp.eq.s32.totalorder %s22, 1
    %p264 = por %p262, %p263
    %p266 = scmp.ne.s32.totalorder %s249, %s265
    %p267 = scmp.eq.s32.totalorder %s22, 0
    %p268 = por %p266, %p267
    %p269 = scmp.le.s32.totalorder 1, %s16
    %p270 = scmp.lt.s32.totalorder %s16, 3
    %p271 = pnand %p269, %p270
    %p272 = pneg %p271
    // Predicated region
    $region9: #{_unnamed_function_.6} parent=5 // pred_check
      _
    $region10: #{_unnamed_function_.6} parent=5 // pred_check_branch
      %274 = sbr.rel (%p271) target = $region12
    $region11: #{_unnamed_function_.6} parent=5 // pred_region
      %s275 = ssub.s32 %s16, 1
      // Predicated region
      $region13: #{_unnamed_function_.6} parent=11 // pred_check
        %p276 = pneg %p141
      $region14: #{_unnamed_function_.6} parent=11 // pred_check_branch
        %278 = sbr.rel (%p276) target = $region16
      $region15: #{_unnamed_function_.6} parent=11 // pred_region
        _
      $region16: #{_unnamed_function_.6} parent=11 // pred_fallthru
        _
      // Predicated region
      $region17: #{_unnamed_function_.6} parent=11 // pred_check
        %p279 = pneg %p162
      $region18: #{_unnamed_function_.6} parent=11 // pred_check_branch
        %281 = sbr.rel (%p279) target = $region20
      $region19: #{_unnamed_function_.6} parent=11 // pred_region
        _
      $region20: #{_unnamed_function_.6} parent=11 // pred_fallthru
        _
      // Predicated region
      $region21: #{_unnamed_function_.6} parent=11 // pred_check
        %p282 = pneg %p183
      $region22: #{_unnamed_function_.6} parent=11 // pred_check_branch
        %284 = sbr.rel (%p282) target = $region24
      $region23: #{_unnamed_function_.6} parent=11 // pred_region
        _
      $region24: #{_unnamed_function_.6} parent=11 // pred_fallthru
        _
    $region12: #{_unnamed_function_.6} parent=5 // pred_fallthru
      _
    %p285 = scmp.lt.s32.totalorder %s16, 2
    // Predicated region
    $region25: #{_unnamed_function_.6} parent=5 // pred_check
      %p286 = pneg %p285
    $region26: #{_unnamed_function_.6} parent=5 // pred_check_branch
      %288 = sbr.rel (%p286) target = $region28
    $region27: #{_unnamed_function_.6} parent=5 // pred_region
      // Predicated region
      $region29: #{_unnamed_function_.6} parent=27 // pred_check
        %p289 = pneg %p36
      $region30: #{_unnamed_function_.6} parent=27 // pred_check_branch
        %291 = sbr.rel (%p289) target = $region32
      $region31: #{_unnamed_function_.6} parent=27 // pred_region
        %p292 = scmp.lt.s32.totalorder %s16, 1
        %s293 = scalar_select %p292, %s16, 1
        %s294 = smul.addr %s293, 8
        %s295 = smul.addr %s294, 8
        %s296 = scalar_lea.vmem %s0, %s295
      $region32: #{_unnamed_function_.6} parent=27 // pred_fallthru
        _
      // Predicated region
      $region33: #{_unnamed_function_.6} parent=27 // pred_check
        %p297 = pneg %p62
      $region34: #{_unnamed_function_.6} parent=27 // pred_check_branch
        %299 = sbr.rel (%p297) target = $region36
      $region35: #{_unnamed_function_.6} parent=27 // pred_region
        %p300 = scmp.lt.s32.totalorder %s16, 1
        %s301 = scalar_select %p300, %s16, 1
        %s302 = smul.addr %s301, 8
        %s303 = smul.addr %s302, 8
        %s304 = scalar_lea.vmem %s1, %s303
      $region36: #{_unnamed_function_.6} parent=27 // pred_fallthru
        _
      // Predicated region
      $region37: #{_unnamed_function_.6} parent=27 // pred_check
        %p305 = pneg %p88
      $region38: #{_unnamed_function_.6} parent=27 // pred_check_branch
        %307 = sbr.rel (%p305) target = $region40
      $region39: #{_unnamed_function_.6} parent=27 // pred_region
        %p308 = scmp.lt.s32.totalorder %s16, 1
        %s309 = scalar_select %p308, %s16, 1
        %s310 = smul.addr %s309, 8
        %s311 = smul.addr %s310, 8
        %s312 = scalar_lea.vmem %s2, %s311
      $region40: #{_unnamed_function_.6} parent=27 // pred_fallthru
        _
      // Predicated region
      $region41: #{_unnamed_function_.6} parent=27 // pred_check
        %p313 = pneg %p114
      $region42: #{_unnamed_function_.6} parent=27 // pred_check_branch
        %315 = sbr.rel (%p313) target = $region44
      $region43: #{_unnamed_function_.6} parent=27 // pred_region
        %p316 = scmp.lt.s32.totalorder %s16, 1
        %s317 = scalar_select %p316, %s16, 1
        %s318 = smul.addr %s317, 8
        %s319 = smul.addr %s318, 8
        %s320 = scalar_lea.vmem %s3, %s319
      $region44: #{_unnamed_function_.6} parent=27 // pred_fallthru
        _
    $region28: #{_unnamed_function_.6} parent=5 // pred_fallthru
      _
    %p321 = scmp.le.s32.totalorder 1, %s16
    %p322 = scmp.lt.s32.totalorder %s16, 3
    %p323 = pnand %p321, %p322
    %p324 = pneg %p323
    // Predicated region
    $region45: #{_unnamed_function_.6} parent=5 // pred_check
      _
    $region46: #{_unnamed_function_.6} parent=5 // pred_check_branch
      %326 = sbr.rel (%p323) target = $region48
    $region47: #{_unnamed_function_.6} parent=5 // pred_region
      %s327 = ssub.s32 %s16, 1
      %p328 = scmp.lt.s32.totalorder %s21, 1
      %s329 = scalar_select %p328, %s21, 1
      %s330 = smul.addr %s329, 8
      %s331 = smul.addr %s330, 8
      %s332 = scalar_lea.vmem %s0, %s331
      %p333 = pneg %p42
      %p334 = pneg %p39
      %p335 = scmp.lt.s32.totalorder %s21, 1
      %s336 = scalar_select %p335, %s21, 1
      %s337 = smul.addr %s336, 8
      %s338 = smul.addr %s337, 8
      %s339 = scalar_lea.vmem %s1, %s338
      %p340 = pneg %p68
      %p341 = pneg %p65
      %p342 = scmp.lt.s32.totalorder %s21, 1
      %s343 = scalar_select %p342, %s21, 1
      %s344 = smul.addr %s343, 8
      %s345 = smul.addr %s344, 8
      %s346 = scalar_lea.vmem %s2, %s345
      %p347 = pneg %p94
      %p348 = pneg %p91
      %p349 = scmp.lt.s32.totalorder %s21, 1
      %s350 = scalar_select %p349, %s21, 1
      %s351 = smul.addr %s350, 8
      %s352 = smul.addr %s351, 8
      %s353 = scalar_lea.vmem %s3, %s352
      %p354 = pneg %p120
      %p355 = pneg %p117
      %p356 = pneg %p141
      %p357 = pneg %p138
      %p358 = pneg %p162
      %p359 = pneg %p159
      %p360 = pneg %p183
      %p361 = pneg %p180
      %p362 = pneg %p209
      %p363 = pneg %p206
      %p364 = scmp.lt.s32.totalorder %s21, 1
      %s365 = scalar_select %p364, %s21, 1
      %s366 = smul.addr %s365, 8
      %s367 = smul.addr %s366, 8
      %s368 = scalar_lea.vmem %s7, %s367
      %p369 = pneg %p235
      %p370 = pneg %p232
      %p371 = scmp.lt.s32.totalorder %s21, 1
      %s372 = scalar_select %p371, %s21, 1
      %s373 = scalar_lea.vmem %s8, %s372
      %p374 = pneg %p261
      %p375 = pneg %p258
      %p376 = scmp.lt.s32.totalorder %s21, 1
      %s377 = scalar_select %p376, %s21, 1
      %s378 = scalar_lea.vmem %s9, %s377
      %p379 = scmp.lt.s32.totalorder %s21, 1
      %s380 = scalar_select %p379, %s21, 1
      %s381 = smul.addr %s380, 8
      %s382 = smul.addr %s381, 8
      %s383 = scalar_lea.vmem %s0, %s382
      %p384 = scmp.lt.s32.totalorder %s21, 1
      %s385 = scalar_select %p384, %s21, 1
      %s386 = smul.addr %s385, 8
      %s387 = smul.addr %s386, 8
      %s388 = scalar_lea.vmem %s1, %s387
      %p389 = scmp.lt.s32.totalorder %s21, 1
      %s390 = scalar_select %p389, %s21, 1
      %s391 = smul.addr %s390, 8
      %s392 = smul.addr %s391, 8
      %s393 = scalar_lea.vmem %s2, %s392
      %p394 = scmp.lt.s32.totalorder %s21, 1
      %s395 = scalar_select %p394, %s21, 1
      %s396 = smul.addr %s395, 8
      %s397 = smul.addr %s396, 8
      %s398 = scalar_lea.vmem %s3, %s397
      %p399 = scmp.lt.s32.totalorder %s21, 1
      %s400 = scalar_select %p399, %s21, 1
      %s401 = smul.addr %s400, 8
      %s402 = smul.addr %s401, 8
      %s403 = scalar_lea.vmem %s7, %s402
      %p404 = scmp.lt.s32.totalorder %s21, 1
      %s405 = scalar_select %p404, %s21, 1
      %s406 = scalar_lea.vmem %s8, %s405
      %p407 = scmp.lt.s32.totalorder %s21, 1
      %s408 = scalar_select %p407, %s21, 1
      %s409 = scalar_lea.vmem %s9, %s408
      %v410 = vld [vmem:[%s4] sm:$0x1]
      %v411 = vld [vmem:[%s5] sm:$0x1]
      %vm412 = vcmask 31744
      %413 = vst.msk [vmem:[#allocation2] sm:$0xff] %vm412, 0.0
      %vm414 = vcmask 24576
      %415 = vst.msk [vmem:[#allocation2 + $0x8] sm:$0x1] %vm414, 0.0
      %416 = vst.msk [vmem:[#allocation2 + $0x10] sm:$0xff] %vm412, 0.0
      %417 = vst.msk [vmem:[#allocation2 + $0x18] sm:$0x1] %vm414, 0.0
      %418 = vst.msk [vmem:[#allocation2 + $0x20] sm:$0xff] %vm412, 0.0
      %419 = vst.msk [vmem:[#allocation2 + $0x28] sm:$0x1] %vm414, 0.0
      %420 = vst.msk [vmem:[#allocation2 + $0x30] sm:$0xff] %vm412, 0.0
      %421 = vst.msk [vmem:[#allocation2 + $0x38] sm:$0x1] %vm414, 0.0
      %422 = vst.msk [vmem:[#allocation2 + $0x40] sm:$0xff] %vm412, 0.0
      %423 = vst.msk [vmem:[#allocation2 + $0x48] sm:$0x1] %vm414, 0.0
      %424 = vst.msk [vmem:[#allocation2 + $0x50] sm:$0xff] %vm412, 0.0
      %425 = vst.msk [vmem:[#allocation2 + $0x58] sm:$0x1] %vm414, 0.0
      %426 = vst.msk [vmem:[#allocation2 + $0x60] sm:$0xff] %vm412, 0.0
      %427 = vst.msk [vmem:[#allocation2 + $0x68] sm:$0x1] %vm414, 0.0
      %428 = vst.msk [vmem:[#allocation2 + $0x70] sm:$0xff] %vm412, 0.0
      %429 = vst.msk [vmem:[#allocation2 + $0x78] sm:$0x1] %vm414, 0.0
      %430 = vst.msk [vmem:[#allocation2 + $0x80] sm:$0xff] %vm412, 0.0
      %431 = vst.msk [vmem:[#allocation2 + $0x88] sm:$0x1] %vm414, 0.0
      %432 = vst.msk [vmem:[#allocation3] sm:$0xff] %vm412, 0.0
      %433 = vst.msk [vmem:[#allocation3 + $0x8] sm:$0xff] %vm412, 0.0
      %434 = vst.msk [vmem:[#allocation3 + $0x10] sm:$0xff] %vm412, 0.0
      %435 = vst.msk [vmem:[#allocation3 + $0x18] sm:$0xff] %vm412, 0.0
      %436 = vst.msk [vmem:[#allocation3 + $0x20] sm:$0xff] %vm412, 0.0
      %437 = vst.msk [vmem:[#allocation3 + $0x28] sm:$0xff] %vm412, 0.0
      %438 = vst.msk [vmem:[#allocation3 + $0x30] sm:$0xff] %vm412, 0.0
      %439 = vst.msk [vmem:[#allocation3 + $0x38] sm:$0xff] %vm412, 0.0
      %440 = vst.msk [vmem:[#allocation3 + $0x40] sm:$0xff] %vm412, 0.0
      %441 = vst.msk [vmem:[#allocation4] sm:$0xff] %vm412, 0.0
      %442 = vst.msk [vmem:[#allocation4 + $0x8] sm:$0x1] %vm414, 0.0
      %443 = vst.msk [vmem:[#allocation4 + $0x10] sm:$0xff] %vm412, 0.0
      %444 = vst.msk [vmem:[#allocation4 + $0x18] sm:$0x1] %vm414, 0.0
      %445 = vst.msk [vmem:[#allocation4 + $0x20] sm:$0xff] %vm412, 0.0
      %446 = vst.msk [vmem:[#allocation4 + $0x28] sm:$0x1] %vm414, 0.0
      %447 = vst.msk [vmem:[#allocation4 + $0x30] sm:$0xff] %vm412, 0.0
      %448 = vst.msk [vmem:[#allocation4 + $0x38] sm:$0x1] %vm414, 0.0
      %449 = vst.msk [vmem:[#allocation4 + $0x40] sm:$0xff] %vm412, 0.0
      %450 = vst.msk [vmem:[#allocation4 + $0x48] sm:$0x1] %vm414, 0.0
      %451 = vst.msk [vmem:[#allocation4 + $0x50] sm:$0xff] %vm412, 0.0
      %452 = vst.msk [vmem:[#allocation4 + $0x58] sm:$0x1] %vm414, 0.0
      %453 = vst.msk [vmem:[#allocation4 + $0x60] sm:$0xff] %vm412, 0.0
      %454 = vst.msk [vmem:[#allocation4 + $0x68] sm:$0x1] %vm414, 0.0
      %455 = vst.msk [vmem:[#allocation4 + $0x70] sm:$0xff] %vm412, 0.0
      %456 = vst.msk [vmem:[#allocation4 + $0x78] sm:$0x1] %vm414, 0.0
      %v457 = vld [vmem:[%s383] sm:$0xff]
      %v458 = vld [vmem:[%s383 + $0x8] sm:$0xff]
      %v459 = vld [vmem:[%s383 + $0x10] sm:$0xff]
      %v460 = vld [vmem:[%s383 + $0x18] sm:$0xff]
      %v461 = vld [vmem:[%s383 + $0x20] sm:$0xff]
      %v462 = vld [vmem:[%s383 + $0x28] sm:$0xff]
      %v463 = vld [vmem:[%s383 + $0x30] sm:$0xff]
      %v464 = vld [vmem:[%s383 + $0x38] sm:$0xff]
      %v466 = vlaneseq
      %v467 = vshrl.u32 %v466, 7
      %v468 = vsub.s32 0, %v467
      %v469 = vrot.slane %v410, %v468
      %v471 = vmul.f32 %v457, %v469
      %v472 = vmul.f32 %v458, %v469
      %v473 = vmul.f32 %v459, %v469
      %v474 = vmul.f32 %v460, %v469
      %v475 = vmul.f32 %v461, %v469
      %v476 = vmul.f32 %v462, %v469
      %v477 = vmul.f32 %v463, %v469
      %v478 = vmul.f32 %v464, %v469
      %v480 = vlaneseq
      %v481 = vshrl.u32 %v480, 7
      %v482 = vsub.s32 0, %v481
      %v483 = vrot.slane %v411, %v482
      %v485 = vadd.f32 %v471, %v483
      %v486 = vadd.f32 %v472, %v483
      %v487 = vadd.f32 %v473, %v483
      %v488 = vadd.f32 %v474, %v483
      %v489 = vadd.f32 %v475, %v483
      %v490 = vadd.f32 %v476, %v483
      %v491 = vadd.f32 %v477, %v483
      %v492 = vadd.f32 %v478, %v483
      %v493 = vmax.f32 %v485, 0.014
      %v494 = vmax.f32 %v486, 0.014
      %v495 = vmax.f32 %v487, 0.014
      %v496 = vmax.f32 %v488, 0.014
      %v497 = vmax.f32 %v489, 0.014
      %v498 = vmax.f32 %v490, 0.014
      %v499 = vmax.f32 %v491, 0.014
      %v500 = vmax.f32 %v492, 0.014
      %s501 = scalar_lea.vmem [#allocation2], 16
      %502 = vst.msk [vmem:[%s501 + $0x1] sm:$0xff] %vm412, %v493
      %503 = vst.msk [vmem:[%s501 + $0x11] sm:$0xff] %vm412, %v494
      %504 = vst.msk [vmem:[%s501 + $0x21] sm:$0xff] %vm412, %v495
      %505 = vst.msk [vmem:[%s501 + $0x31] sm:$0xff] %vm412, %v496
      %506 = vst.msk [vmem:[%s501 + $0x41] sm:$0xff] %vm412, %v497
      %507 = vst.msk [vmem:[%s501 + $0x51] sm:$0xff] %vm412, %v498
      %508 = vst.msk [vmem:[%s501 + $0x61] sm:$0xff] %vm412, %v499
      %509 = vst.msk [vmem:[%s501 + $0x71] sm:$0xff] %vm412, %v500
      %v510 = vld [vmem:[%s388] sm:$0xff]
      %v511 = vld [vmem:[%s388 + $0x8] sm:$0xff]
      %v512 = vld [vmem:[%s388 + $0x10] sm:$0xff]
      %v513 = vld [vmem:[%s388 + $0x18] sm:$0xff]
      %v514 = vld [vmem:[%s388 + $0x20] sm:$0xff]
      %v515 = vld [vmem:[%s388 + $0x28] sm:$0xff]
      %v516 = vld [vmem:[%s388 + $0x30] sm:$0xff]
      %v517 = vld [vmem:[%s388 + $0x38] sm:$0xff]
      %v518 = vmul.f32 %v510, %v469
      %v519 = vmul.f32 %v511, %v469
      %v520 = vmul.f32 %v512, %v469
      %v521 = vmul.f32 %v513, %v469
      %v522 = vmul.f32 %v514, %v469
      %v523 = vmul.f32 %v515, %v469
      %v524 = vmul.f32 %v516, %v469
      %v525 = vmul.f32 %v517, %v469
      %v526 = vadd.f32 %v518, %v483
      %v527 = vadd.f32 %v519, %v483
      %v528 = vadd.f32 %v520, %v483
      %v529 = vadd.f32 %v521, %v483
      %v530 = vadd.f32 %v522, %v483
      %v531 = vadd.f32 %v523, %v483
      %v532 = vadd.f32 %v524, %v483
      %v533 = vadd.f32 %v525, %v483
      %v534 = vmax.f32 %v526, 0.014
      %v535 = vmax.f32 %v527, 0.014
      %v536 = vmax.f32 %v528, 0.014
      %v537 = vmax.f32 %v529, 0.014
      %v538 = vmax.f32 %v530, 0.014
      %v539 = vmax.f32 %v531, 0.014
      %v540 = vmax.f32 %v532, 0.014
      %v541 = vmax.f32 %v533, 0.014
      %s542 = scalar_lea.vmem [#allocation3], 8
      %543 = vst.msk [vmem:[%s542] sm:$0xff] %vm412, %v534
      %544 = vst.msk [vmem:[%s542 + $0x8] sm:$0xff] %vm412, %v535
      %545 = vst.msk [vmem:[%s542 + $0x10] sm:$0xff] %vm412, %v536
      %546 = vst.msk [vmem:[%s542 + $0x18] sm:$0xff] %vm412, %v537
      %547 = vst.msk [vmem:[%s542 + $0x20] sm:$0xff] %vm412, %v538
      %548 = vst.msk [vmem:[%s542 + $0x28] sm:$0xff] %vm412, %v539
      %549 = vst.msk [vmem:[%s542 + $0x30] sm:$0xff] %vm412, %v540
      %550 = vst.msk [vmem:[%s542 + $0x38] sm:$0xff] %vm412, %v541
      %v551 = vld [vmem:[%s393] sm:$0xff]
      %v552 = vld [vmem:[%s393 + $0x8] sm:$0xff]
      %v553 = vld [vmem:[%s393 + $0x10] sm:$0xff]
      %v554 = vld [vmem:[%s393 + $0x18] sm:$0xff]
      %v555 = vld [vmem:[%s393 + $0x20] sm:$0xff]
      %v556 = vld [vmem:[%s393 + $0x28] sm:$0xff]
      %v557 = vld [vmem:[%s393 + $0x30] sm:$0xff]
      %v558 = vld [vmem:[%s393 + $0x38] sm:$0xff]
      %v559 = vmul.f32 %v551, %v469
      %v560 = vmul.f32 %v552, %v469
      %v561 = vmul.f32 %v553, %v469
      %v562 = vmul.f32 %v554, %v469
      %v563 = vmul.f32 %v555, %v469
      %v564 = vmul.f32 %v556, %v469
      %v565 = vmul.f32 %v557, %v469
      %v566 = vmul.f32 %v558, %v469
      %v567 = vadd.f32 %v559, %v483
      %v568 = vadd.f32 %v560, %v483
      %v569 = vadd.f32 %v561, %v483
      %v570 = vadd.f32 %v562, %v483
      %v571 = vadd.f32 %v563, %v483
      %v572 = vadd.f32 %v564, %v483
      %v573 = vadd.f32 %v565, %v483
      %v574 = vadd.f32 %v566, %v483
      %v575 = vmax.f32 %v567, 0.014
      %v576 = vmax.f32 %v568, 0.014
      %v577 = vmax.f32 %v569, 0.014
      %v578 = vmax.f32 %v570, 0.014
      %v579 = vmax.f32 %v571, 0.014
      %v580 = vmax.f32 %v572, 0.014
      %v581 = vmax.f32 %v573, 0.014
      %v582 = vmax.f32 %v574, 0.014
      %583 = vst.msk [vmem:[#allocation4 + $0x1] sm:$0xff] %vm412, %v575
      %584 = vst.msk [vmem:[#allocation4 + $0x11] sm:$0xff] %vm412, %v576
      %585 = vst.msk [vmem:[#allocation4 + $0x21] sm:$0xff] %vm412, %v577
      %586 = vst.msk [vmem:[#allocation4 + $0x31] sm:$0xff] %vm412, %v578
      %587 = vst.msk [vmem:[#allocation4 + $0x41] sm:$0xff] %vm412, %v579
      %588 = vst.msk [vmem:[#allocation4 + $0x51] sm:$0xff] %vm412, %v580
      %589 = vst.msk [vmem:[#allocation4 + $0x61] sm:$0xff] %vm412, %v581
      %590 = vst.msk [vmem:[#allocation4 + $0x71] sm:$0xff] %vm412, %v582
      %v591 = vld [vmem:[%s398] sm:$0xff]
      %v592 = vld [vmem:[%s398 + $0x8] sm:$0xff]
      %v593 = vld [vmem:[%s398 + $0x10] sm:$0xff]
      %v594 = vld [vmem:[%s398 + $0x18] sm:$0xff]
      %v595 = vld [vmem:[%s398 + $0x20] sm:$0xff]
      %v596 = vld [vmem:[%s398 + $0x28] sm:$0xff]
      %v597 = vld [vmem:[%s398 + $0x30] sm:$0xff]
      %v598 = vld [vmem:[%s398 + $0x38] sm:$0xff]
      %v599 = vmul.f32 %v591, %v469
      %v600 = vmul.f32 %v592, %v469
      %v601 = vmul.f32 %v593, %v469
      %v602 = vmul.f32 %v594, %v469
      %v603 = vmul.f32 %v595, %v469
      %v604 = vmul.f32 %v596, %v469
      %v605 = vmul.f32 %v597, %v469
      %v606 = vmul.f32 %v598, %v469
      %v607 = vadd.f32 %v599, %v483
      %v608 = vadd.f32 %v600, %v483
      %v609 = vadd.f32 %v601, %v483
      %v610 = vadd.f32 %v602, %v483
      %v611 = vadd.f32 %v603, %v483
      %v612 = vadd.f32 %v604, %v483
      %v613 = vadd.f32 %v605, %v483
      %v614 = vadd.f32 %v606, %v483
      %v615 = vmax.f32 %v607, 0.014
      %v616 = vmax.f32 %v608, 0.014
      %v617 = vmax.f32 %v609, 0.014
      %v618 = vmax.f32 %v610, 0.014
      %v619 = vmax.f32 %v611, 0.014
      %v620 = vmax.f32 %v612, 0.014
      %v621 = vmax.f32 %v613, 0.014
      %v622 = vmax.f32 %v614, 0.014
      %623 = vst.msk [vmem:[#allocation5] sm:$0xff] %vm412, %v615
      %624 = vst.msk [vmem:[#allocation5 + $0x8] sm:$0xff] %vm412, %v616
      %625 = vst.msk [vmem:[#allocation5 + $0x10] sm:$0xff] %vm412, %v617
      %626 = vst.msk [vmem:[#allocation5 + $0x18] sm:$0xff] %vm412, %v618
      %627 = vst.msk [vmem:[#allocation5 + $0x20] sm:$0xff] %vm412, %v619
      %628 = vst.msk [vmem:[#allocation5 + $0x28] sm:$0xff] %vm412, %v620
      %629 = vst.msk [vmem:[#allocation5 + $0x30] sm:$0xff] %vm412, %v621
      %630 = vst.msk [vmem:[#allocation5 + $0x38] sm:$0xff] %vm412, %v622
      %v631 = vld [vmem:[#allocation2] sm:$0xff]
      %v632 = vld [vmem:[#allocation2 + $0x10] sm:$0xff]
      %v633 = vld [vmem:[#allocation2 + $0x20] sm:$0xff]
      %v634 = vld [vmem:[#allocation2 + $0x30] sm:$0xff]
      %v635 = vld [vmem:[#allocation2 + $0x40] sm:$0xff]
      %v636 = vld [vmem:[#allocation2 + $0x50] sm:$0xff]
      %v637 = vld [vmem:[#allocation2 + $0x60] sm:$0xff]
      %v638 = vld [vmem:[#allocation2 + $0x70] sm:$0xff]
      %v639 = vld [vmem:[%s6] sm:$0xf]
      %v640 = vld [vmem:[#allocation3] sm:$0xff]
      %v641 = vld [vmem:[#allocation3 + $0x8] sm:$0xff]
      %v642 = vld [vmem:[#allocation3 + $0x10] sm:$0xff]
      %v643 = vld [vmem:[#allocation3 + $0x18] sm:$0xff]
      %v644 = vld [vmem:[#allocation3 + $0x20] sm:$0xff]
      %v645 = vld [vmem:[#allocation3 + $0x28] sm:$0xff]
      %v646 = vld [vmem:[#allocation3 + $0x30] sm:$0xff]
      %v647 = vld [vmem:[#allocation3 + $0x38] sm:$0xff]
      %s648 = scalar_lea.vmem %s6, 4
      %v649 = vld [vmem:[%s648] sm:$0xf]
      %v651 = vsel %vm412, %v640, 0
      %v654 = vsel %vm412, %v641, 0
      %v657 = vsel %vm412, %v642, 0
      %v660 = vsel %vm412, %v643, 0
      %v663 = vsel %vm412, %v644, 0
      %v666 = vsel %vm412, %v645, 0
      %v669 = vsel %vm412, %v646, 0
      %v672 = vsel %vm412, %v647, 0
      %vm674 = vcmask 1043456
      %v676 = vsel %vm674, %v649, 0
      %678 = vmatprep.subr.mxu0 0.0
      %679 = vmatpush1.msra.mxu0 %v676
      %680 = vmatprep.subr.mxu0 0.0
      %681 = vmatpush1.msra.mxu0 0.0
      %682 = vmatprep.subr.mxu0 0.0
      %683 = vmatpush1.msra.mxu0 0.0
      %684 = vmatprep.subr.mxu0 0.0
      %685 = vmatpush1.msra.mxu0 0.0
      %686 = vmatprep.subr.mxu0 0.0
      %687 = vmatpush1.msra.mxu0 0.0
      %688 = vmatprep.subr.mxu0 0.0
      %689 = vmatpush1.msra.mxu0 0.0
      %690 = vmatprep.subr.mxu0 0.0
      %691 = vmatpush1.msra.mxu0 0.0
      %692 = vmatprep.subr.mxu0 0.0
      %693 = vmatpush1.msra.mxu0 0.0
      %694 = vmatprep.subr.mxu0 0.0
      %695 = vmatpush1.msra.mxu0 0.0
      %696 = vmatprep.subr.mxu0 0.0
      %697 = vmatpush1.msra.mxu0 0.0
      %698 = vmatprep.subr.mxu0 0.0
      %699 = vmatpush1.msra.mxu0 0.0
      %700 = vmatprep.subr.mxu0 0.0
      %701 = vmatpush1.msra.mxu0 0.0
      %702 = vmatprep.subr.mxu0 0.0
      %703 = vmatpush1.msra.mxu0 0.0
      %704 = vmatprep.subr.mxu0 0.0
      %705 = vmatpush1.msra.mxu0 0.0
      %706 = vmatprep.subr.mxu0 0.0
      %707 = vmatpush1.msra.mxu0 0.0
      %708 = vmatprep.subr.mxu0 0.0
      %709 = vmatpush1.msra.mxu0 0.0
      %710 = vmatprep.subr.mxu0 0.0
      %711 = vmatpush1.msra.mxu0 0.0
      %712 = vmatprep.subr.mxu0 0.0
      %713 = vmatpush1.msra.mxu0 0.0
      %714 = vmatprep.subr.mxu0 0.0
      %715 = vmatpush1.msra.mxu0 0.0
      %716 = vmatprep.subr.mxu0 0.0
      %717 = vmatpush1.msra.mxu0 0.0
      %718 = vmatprep.subr.mxu0 0.0
      %719 = vmatpush1.msra.mxu0 0.0
      %720 = vmatprep.subr.mxu0 0.0
      %721 = vmatpush1.msra.mxu0 0.0
      %722 = vmatprep.subr.mxu0 0.0
      %723 = vmatpush1.msra.mxu0 0.0
      %724 = vmatprep.subr.mxu0 0.0
      %725 = vmatpush1.msra.mxu0 0.0
      %726 = vmatprep.subr.mxu0 0.0
      %727 = vmatpush1.msra.mxu0 0.0
      %728 = vmatprep.subr.mxu0 0.0
      %729 = vmatpush1.msra.mxu0 0.0
      %730 = vmatprep.subr.mxu0 0.0
      %731 = vmatpush1.msra.mxu0 0.0
      %732 = vmatprep.subr.mxu0 0.0
      %733 = vmatpush1.msra.mxu0 0.0
      %734 = vmatprep.subr.mxu0 0.0
      %735 = vmatpush1.msra.mxu0 0.0
      %736 = vmatprep.subr.mxu0 0.0
      %737 = vmatpush1.msra.mxu0 0.0
      %738 = vmatprep.subr.mxu0 0.0
      %739 = vmatpush1.msra.mxu0 0.0
      %740 = vmatprep.subr.mxu0 0.0
      %741 = vmatpush1.msra.mxu0 0.0
      %742 = vmatprep.mubr.f32.mxu0 0.0
      %743 = vmatmul.mubr.f32.gmra.mrb[0].mxu0 %v651
      %v744 = vpop.f32.mrb[0].mxu0
      %v745 = vadd.f32 0.0, %v744
      %v746 = vpop.f32.mrb[0].mxu0
      %747 = vmatprep.mubr.f32.mxu0 0.0
      %748 = vmatmul.mubr.f32.gmra.mrb[0].mxu0 %v654
      %v749 = vpop.f32.mrb[0].mxu0
      %v750 = vadd.f32 0.0, %v749
      %v751 = vpop.f32.mrb[0].mxu0
      %752 = vmatprep.mubr.f32.mxu0 0.0
      %753 = vmatmul.mubr.f32.gmra.mrb[0].mxu0 %v657
      %v754 = vpop.f32.mrb[0].mxu0
      %v755 = vadd.f32 0.0, %v754
      %v756 = vpop.f32.mrb[0].mxu0
      %757 = vmatprep.mubr.f32.mxu0 0.0
      %758 = vmatmul.mubr.f32.gmra.mrb[0].mxu0 %v660
      %v759 = vpop.f32.mrb[0].mxu0
      %v760 = vadd.f32 0.0, %v759
      %v761 = vpop.f32.mrb[0].mxu0
      %762 = vmatprep.mubr.f32.mxu0 0.0
      %763 = vmatmul.mubr.f32.gmra.mrb[0].mxu0 %v663
      %v764 = vpop.f32.mrb[0].mxu0
      %v765 = vadd.f32 0.0, %v764
      %v766 = vpop.f32.mrb[0].mxu0
      %767 = vmatprep.mubr.f32.mxu0 0.0
      %768 = vmatmul.mubr.f32.gmra.mrb[0].mxu0 %v666
      %v769 = vpop.f32.mrb[0].mxu0
      %v770 = vadd.f32 0.0, %v769
      %v771 = vpop.f32.mrb[0].mxu0
      %772 = vmatprep.mubr.f32.mxu0 0.0
      %773 = vmatmul.mubr.f32.gmra.mrb[0].mxu0 %v669
      %v774 = vpop.f32.mrb[0].mxu0
      %v775 = vadd.f32 0.0, %v774
      %v776 = vpop.f32.mrb[0].mxu0
      %777 = vmatprep.mubr.f32.mxu0 0.0
      %778 = vmatmul.mubr.f32.gmra.mrb[0].mxu0 %v672
      %v779 = vpop.f32.mrb[0].mxu0
      %v780 = vadd.f32 0.0, %v779
      %v781 = vpop.f32.mrb[0].mxu0
      %782 = vdwg.mxu0
      %v784 = vsel %vm412, %v631, 0
      %v787 = vsel %vm412, %v632, 0
      %v790 = vsel %vm412, %v633, 0
      %v793 = vsel %vm412, %v634, 0
      %v796 = vsel %vm412, %v635, 0
      %v799 = vsel %vm412, %v636, 0
      %v802 = vsel %vm412, %v637, 0
      %v805 = vsel %vm412, %v638, 0
      %v808 = vsel %vm674, %v639, 0
      %810 = vmatprep.subr.mxu0 0.0
      %811 = vmatpush1.msra.mxu0 %v808
      %812 = vmatprep.subr.mxu0 0.0
      %813 = vmatpush1.msra.mxu0 0.0
      %814 = vmatprep.subr.mxu0 0.0
      %815 = vmatpush1.msra.mxu0 0.0
      %816 = vmatprep.subr.mxu0 0.0
      %817 = vmatpush1.msra.mxu0 0.0
      %818 = vmatprep.subr.mxu0 0.0
      %819 = vmatpush1.msra.mxu0 0.0
      %820 = vmatprep.subr.mxu0 0.0
      %821 = vmatpush1.msra.mxu0 0.0
      %822 = vmatprep.subr.mxu0 0.0
      %823 = vmatpush1.msra.mxu0 0.0
      %824 = vmatprep.subr.mxu0 0.0
      %825 = vmatpush1.msra.mxu0 0.0
      %826 = vmatprep.subr.mxu0 0.0
      %827 = vmatpush1.msra.mxu0 0.0
      %828 = vmatprep.subr.mxu0 0.0
      %829 = vmatpush1.msra.mxu0 0.0
      %830 = vmatprep.subr.mxu0 0.0
      %831 = vmatpush1.msra.mxu0 0.0
      %832 = vmatprep.subr.mxu0 0.0
      %833 = vmatpush1.msra.mxu0 0.0
      %834 = vmatprep.subr.mxu0 0.0
      %835 = vmatpush1.msra.mxu0 0.0
      %836 = vmatprep.subr.mxu0 0.0
      %837 = vmatpush1.msra.mxu0 0.0
      %838 = vmatprep.subr.mxu0 0.0
      %839 = vmatpush1.msra.mxu0 0.0
      %840 = vmatprep.subr.mxu0 0.0
      %841 = vmatpush1.msra.mxu0 0.0
      %842 = vmatprep.subr.mxu0 0.0
      %843 = vmatpush1.msra.mxu0 0.0
      %844 = vmatprep.subr.mxu0 0.0
      %845 = vmatpush1.msra.mxu0 0.0
      %846 = vmatprep.subr.mxu0 0.0
      %847 = vmatpush1.msra.mxu0 0.0
      %848 = vmatprep.subr.mxu0 0.0
      %849 = vmatpush1.msra.mxu0 0.0
      %850 = vmatprep.subr.mxu0 0.0
      %851 = vmatpush1.msra.mxu0 0.0
      %852 = vmatprep.subr.mxu0 0.0
      %853 = vmatpush1.msra.mxu0 0.0
      %854 = vmatprep.subr.mxu0 0.0
      %855 = vmatpush1.msra.mxu0 0.0
      %856 = vmatprep.subr.mxu0 0.0
      %857 = vmatpush1.msra.mxu0 0.0
      %858 = vmatprep.subr.mxu0 0.0
      %859 = vmatpush1.msra.mxu0 0.0
      %860 = vmatprep.subr.mxu0 0.0
      %861 = vmatpush1.msra.mxu0 0.0
      %862 = vmatprep.subr.mxu0 0.0
      %863 = vmatpush1.msra.mxu0 0.0
      %864 = vmatprep.subr.mxu0 0.0
      %865 = vmatpush1.msra.mxu0 0.0
      %866 = vmatprep.subr.mxu0 0.0
      %867 = vmatpush1.msra.mxu0 0.0
      %868 = vmatprep.subr.mxu0 0.0
      %869 = vmatpush1.msra.mxu0 0.0
      %870 = vmatprep.subr.mxu0 0.0
      %871 = vmatpush1.msra.mxu0 0.0
      %872 = vmatprep.subr.mxu0 0.0
      %873 = vmatpush1.msra.mxu0 0.0
      %874 = vmatprep.mubr.f32.mxu0 0.0
      %875 = vmatmul.mubr.f32.gmra.mrb[0].mxu0 %v784
      %v876 = vpop.f32.mrb[0].mxu0
      %v877 = vadd.f32 %v745, %v876
      %v878 = vpop.f32.mrb[0].mxu0
      %879 = vmatprep.mubr.f32.mxu0 0.0
      %880 = vmatmul.mubr.f32.gmra.mrb[0].mxu0 %v787
      %v881 = vpop.f32.mrb[0].mxu0
      %v882 = vadd.f32 %v750, %v881
      %v883 = vpop.f32.mrb[0].mxu0
      %884 = vmatprep.mubr.f32.mxu0 0.0
      %885 = vmatmul.mubr.f32.gmra.mrb[0].mxu0 %v790
      %v886 = vpop.f32.mrb[0].mxu0
      %v887 = vadd.f32 %v755, %v886
      %v888 = vpop.f32.mrb[0].mxu0
      %889 = vmatprep.mubr.f32.mxu0 0.0
      %890 = vmatmul.mubr.f32.gmra.mrb[0].mxu0 %v793
      %v891 = vpop.f32.mrb[0].mxu0
      %v892 = vadd.f32 %v760, %v891
      %v893 = vpop.f32.mrb[0].mxu0
      %894 = vmatprep.mubr.f32.mxu0 0.0
      %895 = vmatmul.mubr.f32.gmra.mrb[0].mxu0 %v796
      %v896 = vpop.f32.mrb[0].mxu0
      %v897 = vadd.f32 %v765, %v896
      %v898 = vpop.f32.mrb[0].mxu0
      %899 = vmatprep.mubr.f32.mxu0 0.0
      %900 = vmatmul.mubr.f32.gmra.mrb[0].mxu0 %v799
      %v901 = vpop.f32.mrb[0].mxu0
      %v902 = vadd.f32 %v770, %v901
      %v903 = vpop.f32.mrb[0].mxu0
      %904 = vmatprep.mubr.f32.mxu0 0.0
      %905 = vmatmul.mubr.f32.gmra.mrb[0].mxu0 %v802
      %v906 = vpop.f32.mrb[0].mxu0
      %v907 = vadd.f32 %v775, %v906
      %v908 = vpop.f32.mrb[0].mxu0
      %909 = vmatprep.mubr.f32.mxu0 0.0
      %910 = vmatmul.mubr.f32.gmra.mrb[0].mxu0 %v805
      %v911 = vpop.f32.mrb[0].mxu0
      %v912 = vadd.f32 %v780, %v911
      %v913 = vpop.f32.mrb[0].mxu0
      %914 = vdwg.mxu0
      %v915 = vld [vmem:[#allocation2 + $0x1] sm:$0xff]
      %v916 = vld [vmem:[#allocation2 + $0x11] sm:$0xff]
      %v917 = vld [vmem:[#allocation2 + $0x21] sm:$0xff]
      %v918 = vld [vmem:[#allocation2 + $0x31] sm:$0xff]
      %v919 = vld [vmem:[#allocation2 + $0x41] sm:$0xff]
      %v920 = vld [vmem:[#allocation2 + $0x51] sm:$0xff]
      %v921 = vld [vmem:[#allocation2 + $0x61] sm:$0xff]
      %v922 = vld [vmem:[#allocation2 + $0x71] sm:$0xff]
      %s923 = scalar_lea.vmem %s6, 8
      %v924 = vld [vmem:[%s923] sm:$0xf]
      %v926 = vsel %vm412, %v915, 0
      %v929 = vsel %vm412, %v916, 0
      %v932 = vsel %vm412, %v917, 0
      %v935 = vsel %vm412, %v918, 0
      %v938 = vsel %vm412, %v919, 0
      %v941 = vsel %vm412, %v920, 0
      %v944 = vsel %vm412, %v921, 0
      %v947 = vsel %vm412, %v922, 0
      %v950 = vsel %vm674, %v924, 0
      %952 = vmatprep.subr.mxu0 0.0
      %953 = vmatpush1.msra.mxu0 %v950
      %954 = vmatprep.subr.mxu0 0.0
      %955 = vmatpush1.msra.mxu0 0.0
      %956 = vmatprep.subr.mxu0 0.0
      %957 = vmatpush1.msra.mxu0 0.0
      %958 = vmatprep.subr.mxu0 0.0
      %959 = vmatpush1.msra.mxu0 0.0
      %960 = vmatprep.subr.mxu0 0.0
      %961 = vmatpush1.msra.mxu0 0.0
      %962 = vmatprep.subr.mxu0 0.0
      %963 = vmatpush1.msra.mxu0 0.0
      %964 = vmatprep.subr.mxu0 0.0
      %965 = vmatpush1.msra.mxu0 0.0
      %966 = vmatprep.subr.mxu0 0.0
      %967 = vmatpush1.msra.mxu0 0.0
      %968 = vmatprep.subr.mxu0 0.0
      %969 = vmatpush1.msra.mxu0 0.0
      %970 = vmatprep.subr.mxu0 0.0
      %971 = vmatpush1.msra.mxu0 0.0
      %972 = vmatprep.subr.mxu0 0.0
      %973 = vmatpush1.msra.mxu0 0.0
      %974 = vmatprep.subr.mxu0 0.0
      %975 = vmatpush1.msra.mxu0 0.0
      %976 = vmatprep.subr.mxu0 0.0
      %977 = vmatpush1.msra.mxu0 0.0
      %978 = vmatprep.subr.mxu0 0.0
      %979 = vmatpush1.msra.mxu0 0.0
      %980 = vmatprep.subr.mxu0 0.0
      %981 = vmatpush1.msra.mxu0 0.0
      %982 = vmatprep.subr.mxu0 0.0
      %983 = vmatpush1.msra.mxu0 0.0
      %984 = vmatprep.subr.mxu0 0.0
      %985 = vmatpush1.msra.mxu0 0.0
      %986 = vmatprep.subr.mxu0 0.0
      %987 = vmatpush1.msra.mxu0 0.0
      %988 = vmatprep.subr.mxu0 0.0
      %989 = vmatpush1.msra.mxu0 0.0
      %990 = vmatprep.subr.mxu0 0.0
      %991 = vmatpush1.msra.mxu0 0.0
      %992 = vmatprep.subr.mxu0 0.0
      %993 = vmatpush1.msra.mxu0 0.0
      %994 = vmatprep.subr.mxu0 0.0
      %995 = vmatpush1.msra.mxu0 0.0
      %996 = vmatprep.subr.mxu0 0.0
      %997 = vmatpush1.msra.mxu0 0.0
      %998 = vmatprep.subr.mxu0 0.0
      %999 = vmatpush1.msra.mxu0 0.0
      %1000 = vmatprep.subr.mxu0 0.0
      %1001 = vmatpush1.msra.mxu0 0.0
      %1002 = vmatprep.subr.mxu0 0.0
      %1003 = vmatpush1.msra.mxu0 0.0
      %1004 = vmatprep.subr.mxu0 0.0
      %1005 = vmatpush1.msra.mxu0 0.0
      %1006 = vmatprep.subr.mxu0 0.0
      %1007 = vmatpush1.msra.mxu0 0.0
      %1008 = vmatprep.subr.mxu0 0.0
      %1009 = vmatpush1.msra.mxu0 0.0
      %1010 = vmatprep.subr.mxu0 0.0
      %1011 = vmatpush1.msra.mxu0 0.0
      %1012 = vmatprep.subr.mxu0 0.0
      %1013 = vmatpush1.msra.mxu0 0.0
      %1014 = vmatprep.subr.mxu0 0.0
      %1015 = vmatpush1.msra.mxu0 0.0
      %1016 = vmatprep.mubr.f32.mxu0 0.0
      %1017 = vmatmul.mubr.f32.gmra.mrb[0].mxu0 %v926
      %v1018 = vpop.f32.mrb[0].mxu0
      %v1019 = vadd.f32 0.0, %v1018
      %v1020 = vpop.f32.mrb[0].mxu0
      %1021 = vmatprep.mubr.f32.mxu0 0.0
      %1022 = vmatmul.mubr.f32.gmra.mrb[0].mxu0 %v929
      %v1023 = vpop.f32.mrb[0].mxu0
      %v1024 = vadd.f32 0.0, %v1023
      %v1025 = vpop.f32.mrb[0].mxu0
      %1026 = vmatprep.mubr.f32.mxu0 0.0
      %1027 = vmatmul.mubr.f32.gmra.mrb[0].mxu0 %v932
      %v1028 = vpop.f32.mrb[0].mxu0
      %v1029 = vadd.f32 0.0, %v1028
      %v1030 = vpop.f32.mrb[0].mxu0
      %1031 = vmatprep.mubr.f32.mxu0 0.0
      %1032 = vmatmul.mubr.f32.gmra.mrb[0].mxu0 %v935
      %v1033 = vpop.f32.mrb[0].mxu0
      %v1034 = vadd.f32 0.0, %v1033
      %v1035 = vpop.f32.mrb[0].mxu0
      %1036 = vmatprep.mubr.f32.mxu0 0.0
      %1037 = vmatmul.mubr.f32.gmra.mrb[0].mxu0 %v938
      %v1038 = vpop.f32.mrb[0].mxu0
      %v1039 = vadd.f32 0.0, %v1038
      %v1040 = vpop.f32.mrb[0].mxu0
      %1041 = vmatprep.mubr.f32.mxu0 0.0
      %1042 = vmatmul.mubr.f32.gmra.mrb[0].mxu0 %v941
      %v1043 = vpop.f32.mrb[0].mxu0
      %v1044 = vadd.f32 0.0, %v1043
      %v1045 = vpop.f32.mrb[0].mxu0
      %1046 = vmatprep.mubr.f32.mxu0 0.0
      %1047 = vmatmul.mubr.f32.gmra.mrb[0].mxu0 %v944
      %v1048 = vpop.f32.mrb[0].mxu0
      %v1049 = vadd.f32 0.0, %v1048
      %v1050 = vpop.f32.mrb[0].mxu0
      %1051 = vmatprep.mubr.f32.mxu0 0.0
      %1052 = vmatmul.mubr.f32.gmra.mrb[0].mxu0 %v947
      %v1053 = vpop.f32.mrb[0].mxu0
      %v1054 = vadd.f32 0.0, %v1053
      %v1055 = vpop.f32.mrb[0].mxu0
      %1056 = vdwg.mxu0
      %v1057 = vadd.f32 %v877, %v1019
      %v1058 = vadd.f32 %v882, %v1024
      %v1059 = vadd.f32 %v887, %v1029
      %v1060 = vadd.f32 %v892, %v1034
      %v1061 = vadd.f32 %v897, %v1039
      %v1062 = vadd.f32 %v902, %v1044
      %v1063 = vadd.f32 %v907, %v1049
      %v1064 = vadd.f32 %v912, %v1054
      %v1065 = vld [vmem:[#allocation4] sm:$0xff]
      %v1066 = vld [vmem:[#allocation4 + $0x10] sm:$0xff]
      %v1067 = vld [vmem:[#allocation4 + $0x20] sm:$0xff]
      %v1068 = vld [vmem:[#allocation4 + $0x30] sm:$0xff]
      %v1069 = vld [vmem:[#allocation4 + $0x40] sm:$0xff]
      %v1070 = vld [vmem:[#allocation4 + $0x50] sm:$0xff]
      %v1071 = vld [vmem:[#allocation4 + $0x60] sm:$0xff]
      %v1072 = vld [vmem:[#allocation4 + $0x70] sm:$0xff]
      %s1073 = scalar_lea.vmem %s6, 12
      %v1074 = vld [vmem:[%s1073] sm:$0xf]
      %v1076 = vsel %vm412, %v1065, 0
      %v1079 = vsel %vm412, %v1066, 0
      %v1082 = vsel %vm412, %v1067, 0
      %v1085 = vsel %vm412, %v1068, 0
      %v1088 = vsel %vm412, %v1069, 0
      %v1091 = vsel %vm412, %v1070, 0
      %v1094 = vsel %vm412, %v1071, 0
      %v1097 = vsel %vm412, %v1072, 0
      %v1100 = vsel %vm674, %v1074, 0
      %1102 = vmatprep.subr.mxu0 0.0
      %1103 = vmatpush1.msra.mxu0 %v1100
      %1104 = vmatprep.subr.mxu0 0.0
      %1105 = vmatpush1.msra.mxu0 0.0
      %1106 = vmatprep.subr.mxu0 0.0
      %1107 = vmatpush1.msra.mxu0 0.0
      %1108 = vmatprep.subr.mxu0 0.0
      %1109 = vmatpush1.msra.mxu0 0.0
      %1110 = vmatprep.subr.mxu0 0.0
      %1111 = vmatpush1.msra.mxu0 0.0
      %1112 = vmatprep.subr.mxu0 0.0
      %1113 = vmatpush1.msra.mxu0 0.0
      %1114 = vmatprep.subr.mxu0 0.0
      %1115 = vmatpush1.msra.mxu0 0.0
      %1116 = vmatprep.subr.mxu0 0.0
      %1117 = vmatpush1.msra.mxu0 0.0
      %1118 = vmatprep.subr.mxu0 0.0
      %1119 = vmatpush1.msra.mxu0 0.0
      %1120 = vmatprep.subr.mxu0 0.0
      %1121 = vmatpush1.msra.mxu0 0.0
      %1122 = vmatprep.subr.mxu0 0.0
      %1123 = vmatpush1.msra.mxu0 0.0
      %1124 = vmatprep.subr.mxu0 0.0
      %1125 = vmatpush1.msra.mxu0 0.0
      %1126 = vmatprep.subr.mxu0 0.0
      %1127 = vmatpush1.msra.mxu0 0.0
      %1128 = vmatprep.subr.mxu0 0.0
      %1129 = vmatpush1.msra.mxu0 0.0
      %1130 = vmatprep.subr.mxu0 0.0
      %1131 = vmatpush1.msra.mxu0 0.0
      %1132 = vmatprep.subr.mxu0 0.0
      %1133 = vmatpush1.msra.mxu0 0.0
      %1134 = vmatprep.subr.mxu0 0.0
      %1135 = vmatpush1.msra.mxu0 0.0
      %1136 = vmatprep.subr.mxu0 0.0
      %1137 = vmatpush1.msra.mxu0 0.0
      %1138 = vmatprep.subr.mxu0 0.0
      %1139 = vmatpush1.msra.mxu0 0.0
      %1140 = vmatprep.subr.mxu0 0.0
      %1141 = vmatpush1.msra.mxu0 0.0
      %1142 = vmatprep.subr.mxu0 0.0
      %1143 = vmatpush1.msra.mxu0 0.0
      %1144 = vmatprep.subr.mxu0 0.0
      %1145 = vmatpush1.msra.mxu0 0.0
      %1146 = vmatprep.subr.mxu0 0.0
      %1147 = vmatpush1.msra.mxu0 0.0
      %1148 = vmatprep.subr.mxu0 0.0
      %1149 = vmatpush1.msra.mxu0 0.0
      %1150 = vmatprep.subr.mxu0 0.0
      %1151 = vmatpush1.msra.mxu0 0.0
      %1152 = vmatprep.subr.mxu0 0.0
      %1153 = vmatpush1.msra.mxu0 0.0
      %1154 = vmatprep.subr.mxu0 0.0
      %1155 = vmatpush1.msra.mxu0 0.0
      %1156 = vmatprep.subr.mxu0 0.0
      %1157 = vmatpush1.msra.mxu0 0.0
      %1158 = vmatprep.subr.mxu0 0.0
      %1159 = vmatpush1.msra.mxu0 0.0
      %1160 = vmatprep.subr.mxu0 0.0
      %1161 = vmatpush1.msra.mxu0 0.0
      %1162 = vmatprep.subr.mxu0 0.0
      %1163 = vmatpush1.msra.mxu0 0.0
      %1164 = vmatprep.subr.mxu0 0.0
      %1165 = vmatpush1.msra.mxu0 0.0
      %1166 = vmatprep.mubr.f32.mxu0 0.0
      %1167 = vmatmul.mubr.f32.gmra.mrb[0].mxu0 %v1076
      %v1168 = vpop.f32.mrb[0].mxu0
      %v1169 = vadd.f32 0.0, %v1168
      %v1170 = vpop.f32.mrb[0].mxu0
      %1171 = vmatprep.mubr.f32.mxu0 0.0
      %1172 = vmatmul.mubr.f32.gmra.mrb[0].mxu0 %v1079
      %v1173 = vpop.f32.mrb[0].mxu0
      %v1174 = vadd.f32 0.0, %v1173
      %v1175 = vpop.f32.mrb[0].mxu0
      %1176 = vmatprep.mubr.f32.mxu0 0.0
      %1177 = vmatmul.mubr.f32.gmra.mrb[0].mxu0 %v1082
      %v1178 = vpop.f32.mrb[0].mxu0
      %v1179 = vadd.f32 0.0, %v1178
      %v1180 = vpop.f32.mrb[0].mxu0
      %1181 = vmatprep.mubr.f32.mxu0 0.0
      %1182 = vmatmul.mubr.f32.gmra.mrb[0].mxu0 %v1085
      %v1183 = vpop.f32.mrb[0].mxu0
      %v1184 = vadd.f32 0.0, %v1183
      %v1185 = vpop.f32.mrb[0].mxu0
      %1186 = vmatprep.mubr.f32.mxu0 0.0
      %1187 = vmatmul.mubr.f32.gmra.mrb[0].mxu0 %v1088
      %v1188 = vpop.f32.mrb[0].mxu0
      %v1189 = vadd.f32 0.0, %v1188
      %v1190 = vpop.f32.mrb[0].mxu0
      %1191 = vmatprep.mubr.f32.mxu0 0.0
      %1192 = vmatmul.mubr.f32.gmra.mrb[0].mxu0 %v1091
      %v1193 = vpop.f32.mrb[0].mxu0
      %v1194 = vadd.f32 0.0, %v1193
      %v1195 = vpop.f32.mrb[0].mxu0
      %1196 = vmatprep.mubr.f32.mxu0 0.0
      %1197 = vmatmul.mubr.f32.gmra.mrb[0].mxu0 %v1094
      %v1198 = vpop.f32.mrb[0].mxu0
      %v1199 = vadd.f32 0.0, %v1198
      %v1200 = vpop.f32.mrb[0].mxu0
      %1201 = vmatprep.mubr.f32.mxu0 0.0
      %1202 = vmatmul.mubr.f32.gmra.mrb[0].mxu0 %v1097
      %v1203 = vpop.f32.mrb[0].mxu0
      %v1204 = vadd.f32 0.0, %v1203
      %v1205 = vpop.f32.mrb[0].mxu0
      %1206 = vdwg.mxu0
      %v1207 = vadd.f32 %v1057, %v1169
      %v1208 = vadd.f32 %v1058, %v1174
      %v1209 = vadd.f32 %v1059, %v1179
      %v1210 = vadd.f32 %v1060, %v1184
      %v1211 = vadd.f32 %v1061, %v1189
      %v1212 = vadd.f32 %v1062, %v1194
      %v1213 = vadd.f32 %v1063, %v1199
      %v1214 = vadd.f32 %v1064, %v1204
      %v1215 = vld [vmem:[#allocation5] sm:$0xff]
      %v1216 = vld [vmem:[#allocation5 + $0x8] sm:$0xff]
      %v1217 = vld [vmem:[#allocation5 + $0x10] sm:$0xff]
      %v1218 = vld [vmem:[#allocation5 + $0x18] sm:$0xff]
      %v1219 = vld [vmem:[#allocation5 + $0x20] sm:$0xff]
      %v1220 = vld [vmem:[#allocation5 + $0x28] sm:$0xff]
      %v1221 = vld [vmem:[#allocation5 + $0x30] sm:$0xff]
      %v1222 = vld [vmem:[#allocation5 + $0x38] sm:$0xff]
      %s1223 = scalar_lea.vmem %s6, 16
      %v1224 = vld [vmem:[%s1223] sm:$0xf]
      %v1226 = vsel %vm412, %v1215, 0
      %v1229 = vsel %vm412, %v1216, 0
      %v1232 = vsel %vm412, %v1217, 0
      %v1235 = vsel %vm412, %v1218, 0
      %v1238 = vsel %vm412, %v1219, 0
      %v1241 = vsel %vm412, %v1220, 0
      %v1244 = vsel %vm412, %v1221, 0
      %v1247 = vsel %vm412, %v1222, 0
      %v1250 = vsel %vm674, %v1224, 0
      %1252 = vmatprep.subr.mxu0 0.0
      %1253 = vmatpush1.msra.mxu0 %v1250
      %1254 = vmatprep.subr.mxu0 0.0
      %1255 = vmatpush1.msra.mxu0 0.0
      %1256 = vmatprep.subr.mxu0 0.0
      %1257 = vmatpush1.msra.mxu0 0.0
      %1258 = vmatprep.subr.mxu0 0.0
      %1259 = vmatpush1.msra.mxu0 0.0
      %1260 = vmatprep.subr.mxu0 0.0
      %1261 = vmatpush1.msra.mxu0 0.0
      %1262 = vmatprep.subr.mxu0 0.0
      %1263 = vmatpush1.msra.mxu0 0.0
      %1264 = vmatprep.subr.mxu0 0.0
      %1265 = vmatpush1.msra.mxu0 0.0
      %1266 = vmatprep.subr.mxu0 0.0
      %1267 = vmatpush1.msra.mxu0 0.0
      %1268 = vmatprep.subr.mxu0 0.0
      %1269 = vmatpush1.msra.mxu0 0.0
      %1270 = vmatprep.subr.mxu0 0.0
      %1271 = vmatpush1.msra.mxu0 0.0
      %1272 = vmatprep.subr.mxu0 0.0
      %1273 = vmatpush1.msra.mxu0 0.0
      %1274 = vmatprep.subr.mxu0 0.0
      %1275 = vmatpush1.msra.mxu0 0.0
      %1276 = vmatprep.subr.mxu0 0.0
      %1277 = vmatpush1.msra.mxu0 0.0
      %1278 = vmatprep.subr.mxu0 0.0
      %1279 = vmatpush1.msra.mxu0 0.0
      %1280 = vmatprep.subr.mxu0 0.0
      %1281 = vmatpush1.msra.mxu0 0.0
      %1282 = vmatprep.subr.mxu0 0.0
      %1283 = vmatpush1.msra.mxu0 0.0
      %1284 = vmatprep.subr.mxu0 0.0
      %1285 = vmatpush1.msra.mxu0 0.0
      %1286 = vmatprep.subr.mxu0 0.0
      %1287 = vmatpush1.msra.mxu0 0.0
      %1288 = vmatprep.subr.mxu0 0.0
      %1289 = vmatpush1.msra.mxu0 0.0
      %1290 = vmatprep.subr.mxu0 0.0
      %1291 = vmatpush1.msra.mxu0 0.0
      %1292 = vmatprep.subr.mxu0 0.0
      %1293 = vmatpush1.msra.mxu0 0.0
      %1294 = vmatprep.subr.mxu0 0.0
      %1295 = vmatpush1.msra.mxu0 0.0
      %1296 = vmatprep.subr.mxu0 0.0
      %1297 = vmatpush1.msra.mxu0 0.0
      %1298 = vmatprep.subr.mxu0 0.0
      %1299 = vmatpush1.msra.mxu0 0.0
      %1300 = vmatprep.subr.mxu0 0.0
      %1301 = vmatpush1.msra.mxu0 0.0
      %1302 = vmatprep.subr.mxu0 0.0
      %1303 = vmatpush1.msra.mxu0 0.0
      %1304 = vmatprep.subr.mxu0 0.0
      %1305 = vmatpush1.msra.mxu0 0.0
      %1306 = vmatprep.subr.mxu0 0.0
      %1307 = vmatpush1.msra.mxu0 0.0
      %1308 = vmatprep.subr.mxu0 0.0
      %1309 = vmatpush1.msra.mxu0 0.0
      %1310 = vmatprep.subr.mxu0 0.0
      %1311 = vmatpush1.msra.mxu0 0.0
      %1312 = vmatprep.subr.mxu0 0.0
      %1313 = vmatpush1.msra.mxu0 0.0
      %1314 = vmatprep.subr.mxu0 0.0
      %1315 = vmatpush1.msra.mxu0 0.0
      %1316 = vmatprep.mubr.f32.mxu0 0.0
      %1317 = vmatmul.mubr.f32.gmra.mrb[0].mxu0 %v1226
      %v1318 = vpop.f32.mrb[0].mxu0
      %v1319 = vadd.f32 0.0, %v1318
      %v1320 = vpop.f32.mrb[0].mxu0
      %1321 = vmatprep.mubr.f32.mxu0 0.0
      %1322 = vmatmul.mubr.f32.gmra.mrb[0].mxu0 %v1229
      %v1323 = vpop.f32.mrb[0].mxu0
      %v1324 = vadd.f32 0.0, %v1323
      %v1325 = vpop.f32.mrb[0].mxu0
      %1326 = vmatprep.mubr.f32.mxu0 0.0
      %1327 = vmatmul.mubr.f32.gmra.mrb[0].mxu0 %v1232
      %v1328 = vpop.f32.mrb[0].mxu0
      %v1329 = vadd.f32 0.0, %v1328
      %v1330 = vpop.f32.mrb[0].mxu0
      %1331 = vmatprep.mubr.f32.mxu0 0.0
      %1332 = vmatmul.mubr.f32.gmra.mrb[0].mxu0 %v1235
      %v1333 = vpop.f32.mrb[0].mxu0
      %v1334 = vadd.f32 0.0, %v1333
      %v1335 = vpop.f32.mrb[0].mxu0
      %1336 = vmatprep.mubr.f32.mxu0 0.0
      %1337 = vmatmul.mubr.f32.gmra.mrb[0].mxu0 %v1238
      %v1338 = vpop.f32.mrb[0].mxu0
      %v1339 = vadd.f32 0.0, %v1338
      %v1340 = vpop.f32.mrb[0].mxu0
      %1341 = vmatprep.mubr.f32.mxu0 0.0
      %1342 = vmatmul.mubr.f32.gmra.mrb[0].mxu0 %v1241
      %v1343 = vpop.f32.mrb[0].mxu0
      %v1344 = vadd.f32 0.0, %v1343
      %v1345 = vpop.f32.mrb[0].mxu0
      %1346 = vmatprep.mubr.f32.mxu0 0.0
      %1347 = vmatmul.mubr.f32.gmra.mrb[0].mxu0 %v1244
      %v1348 = vpop.f32.mrb[0].mxu0
      %v1349 = vadd.f32 0.0, %v1348
      %v1350 = vpop.f32.mrb[0].mxu0
      %1351 = vmatprep.mubr.f32.mxu0 0.0
      %1352 = vmatmul.mubr.f32.gmra.mrb[0].mxu0 %v1247
      %v1353 = vpop.f32.mrb[0].mxu0
      %v1354 = vadd.f32 0.0, %v1353
      %v1355 = vpop.f32.mrb[0].mxu0
      %1356 = vdwg.mxu0
      %v1357 = vadd.f32 %v1207, %v1319
      %v1358 = vadd.f32 %v1208, %v1324
      %v1359 = vadd.f32 %v1209, %v1329
      %v1360 = vadd.f32 %v1210, %v1334
      %v1361 = vadd.f32 %v1211, %v1339
      %v1362 = vadd.f32 %v1212, %v1344
      %v1363 = vadd.f32 %v1213, %v1349
      %v1364 = vadd.f32 %v1214, %v1354
      %v1365 = vld [vmem:[#allocation4 + $0x1] sm:$0xff]
      %v1366 = vld [vmem:[#allocation4 + $0x11] sm:$0xff]
      %v1367 = vld [vmem:[#allocation4 + $0x21] sm:$0xff]
      %v1368 = vld [vmem:[#allocation4 + $0x31] sm:$0xff]
      %v1369 = vld [vmem:[#allocation4 + $0x41] sm:$0xff]
      %v1370 = vld [vmem:[#allocation4 + $0x51] sm:$0xff]
      %v1371 = vld [vmem:[#allocation4 + $0x61] sm:$0xff]
      %v1372 = vld [vmem:[#allocation4 + $0x71] sm:$0xff]
      %s1373 = scalar_lea.vmem %s6, 20
      %v1374 = vld [vmem:[%s1373] sm:$0xf]
      %v1376 = vsel %vm412, %v1365, 0
      %v1379 = vsel %vm412, %v1366, 0
      %v1382 = vsel %vm412, %v1367, 0
      %v1385 = vsel %vm412, %v1368, 0
      %v1388 = vsel %vm412, %v1369, 0
      %v1391 = vsel %vm412, %v1370, 0
      %v1394 = vsel %vm412, %v1371, 0
      %v1397 = vsel %vm412, %v1372, 0
      %v1400 = vsel %vm674, %v1374, 0
      %1402 = vmatprep.subr.mxu0 0.0
      %1403 = vmatpush1.msra.mxu0 %v1400
      %1404 = vmatprep.subr.mxu0 0.0
      %1405 = vmatpush1.msra.mxu0 0.0
      %1406 = vmatprep.subr.mxu0 0.0
      %1407 = vmatpush1.msra.mxu0 0.0
      %1408 = vmatprep.subr.mxu0 0.0
      %1409 = vmatpush1.msra.mxu0 0.0
      %1410 = vmatprep.subr.mxu0 0.0
      %1411 = vmatpush1.msra.mxu0 0.0
      %1412 = vmatprep.subr.mxu0 0.0
      %1413 = vmatpush1.msra.mxu0 0.0
      %1414 = vmatprep.subr.mxu0 0.0
      %1415 = vmatpush1.msra.mxu0 0.0
      %1416 = vmatprep.subr.mxu0 0.0
      %1417 = vmatpush1.msra.mxu0 0.0
      %1418 = vmatprep.subr.mxu0 0.0
      %1419 = vmatpush1.msra.mxu0 0.0
      %1420 = vmatprep.subr.mxu0 0.0
      %1421 = vmatpush1.msra.mxu0 0.0
      %1422 = vmatprep.subr.mxu0 0.0
      %1423 = vmatpush1.msra.mxu0 0.0
      %1424 = vmatprep.subr.mxu0 0.0
      %1425 = vmatpush1.msra.mxu0 0.0
      %1426 = vmatprep.subr.mxu0 0.0
      %1427 = vmatpush1.msra.mxu0 0.0
      %1428 = vmatprep.subr.mxu0 0.0
      %1429 = vmatpush1.msra.mxu0 0.0
      %1430 = vmatprep.subr.mxu0 0.0
      %1431 = vmatpush1.msra.mxu0 0.0
      %1432 = vmatprep.subr.mxu0 0.0
      %1433 = vmatpush1.msra.mxu0 0.0
      %1434 = vmatprep.subr.mxu0 0.0
      %1435 = vmatpush1.msra.mxu0 0.0
      %1436 = vmatprep.subr.mxu0 0.0
      %1437 = vmatpush1.msra.mxu0 0.0
      %1438 = vmatprep.subr.mxu0 0.0
      %1439 = vmatpush1.msra.mxu0 0.0
      %1440 = vmatprep.subr.mxu0 0.0
      %1441 = vmatpush1.msra.mxu0 0.0
      %1442 = vmatprep.subr.mxu0 0.0
      %1443 = vmatpush1.msra.mxu0 0.0
      %1444 = vmatprep.subr.mxu0 0.0
      %1445 = vmatpush1.msra.mxu0 0.0
      %1446 = vmatprep.subr.mxu0 0.0
      %1447 = vmatpush1.msra.mxu0 0.0
      %1448 = vmatprep.subr.mxu0 0.0
      %1449 = vmatpush1.msra.mxu0 0.0
      %1450 = vmatprep.subr.mxu0 0.0
      %1451 = vmatpush1.msra.mxu0 0.0
      %1452 = vmatprep.subr.mxu0 0.0
      %1453 = vmatpush1.msra.mxu0 0.0
      %1454 = vmatprep.subr.mxu0 0.0
      %1455 = vmatpush1.msra.mxu0 0.0
      %1456 = vmatprep.subr.mxu0 0.0
      %1457 = vmatpush1.msra.mxu0 0.0
      %1458 = vmatprep.subr.mxu0 0.0
      %1459 = vmatpush1.msra.mxu0 0.0
      %1460 = vmatprep.subr.mxu0 0.0
      %1461 = vmatpush1.msra.mxu0 0.0
      %1462 = vmatprep.subr.mxu0 0.0
      %1463 = vmatpush1.msra.mxu0 0.0
      %1464 = vmatprep.subr.mxu0 0.0
      %1465 = vmatpush1.msra.mxu0 0.0
      %1466 = vmatprep.mubr.f32.mxu0 0.0
      %1467 = vmatmul.mubr.f32.gmra.mrb[0].mxu0 %v1376
      %v1468 = vpop.f32.mrb[0].mxu0
      %v1469 = vadd.f32 0.0, %v1468
      %v1470 = vpop.f32.mrb[0].mxu0
      %1471 = vmatprep.mubr.f32.mxu0 0.0
      %1472 = vmatmul.mubr.f32.gmra.mrb[0].mxu0 %v1379
      %v1473 = vpop.f32.mrb[0].mxu0
      %v1474 = vadd.f32 0.0, %v1473
      %v1475 = vpop.f32.mrb[0].mxu0
      %1476 = vmatprep.mubr.f32.mxu0 0.0
      %1477 = vmatmul.mubr.f32.gmra.mrb[0].mxu0 %v1382
      %v1478 = vpop.f32.mrb[0].mxu0
      %v1479 = vadd.f32 0.0, %v1478
      %v1480 = vpop.f32.mrb[0].mxu0
      %1481 = vmatprep.mubr.f32.mxu0 0.0
      %1482 = vmatmul.mubr.f32.gmra.mrb[0].mxu0 %v1385
      %v1483 = vpop.f32.mrb[0].mxu0
      %v1484 = vadd.f32 0.0, %v1483
      %v1485 = vpop.f32.mrb[0].mxu0
      %1486 = vmatprep.mubr.f32.mxu0 0.0
      %1487 = vmatmul.mubr.f32.gmra.mrb[0].mxu0 %v1388
      %v1488 = vpop.f32.mrb[0].mxu0
      %v1489 = vadd.f32 0.0, %v1488
      %v1490 = vpop.f32.mrb[0].mxu0
      %1491 = vmatprep.mubr.f32.mxu0 0.0
      %1492 = vmatmul.mubr.f32.gmra.mrb[0].mxu0 %v1391
      %v1493 = vpop.f32.mrb[0].mxu0
      %v1494 = vadd.f32 0.0, %v1493
      %v1495 = vpop.f32.mrb[0].mxu0
      %1496 = vmatprep.mubr.f32.mxu0 0.0
      %1497 = vmatmul.mubr.f32.gmra.mrb[0].mxu0 %v1394
      %v1498 = vpop.f32.mrb[0].mxu0
      %v1499 = vadd.f32 0.0, %v1498
      %v1500 = vpop.f32.mrb[0].mxu0
      %1501 = vmatprep.mubr.f32.mxu0 0.0
      %1502 = vmatmul.mubr.f32.gmra.mrb[0].mxu0 %v1397
      %v1503 = vpop.f32.mrb[0].mxu0
      %v1504 = vadd.f32 0.0, %v1503
      %v1505 = vpop.f32.mrb[0].mxu0
      %1506 = vdwg.mxu0
      %v1507 = vadd.f32 %v1357, %v1469
      %v1508 = vadd.f32 %v1358, %v1474
      %v1509 = vadd.f32 %v1359, %v1479
      %v1510 = vadd.f32 %v1360, %v1484
      %v1511 = vadd.f32 %v1361, %v1489
      %v1512 = vadd.f32 %v1362, %v1494
      %v1513 = vadd.f32 %v1363, %v1499
      %v1514 = vadd.f32 %v1364, %v1504
      %v1515 = vld [vmem:[%s501] sm:$0xff]
      %v1516 = vld [vmem:[%s501 + $0x10] sm:$0xff]
      %v1517 = vld [vmem:[%s501 + $0x20] sm:$0xff]
      %v1518 = vld [vmem:[%s501 + $0x30] sm:$0xff]
      %v1519 = vld [vmem:[%s501 + $0x40] sm:$0xff]
      %v1520 = vld [vmem:[%s501 + $0x50] sm:$0xff]
      %v1521 = vld [vmem:[%s501 + $0x60] sm:$0xff]
      %v1522 = vld [vmem:[%s501 + $0x70] sm:$0xff]
      %s1523 = scalar_lea.vmem %s6, 24
      %v1524 = vld [vmem:[%s1523] sm:$0xf]
      %v1526 = vsel %vm412, %v1515, 0
      %v1529 = vsel %vm412, %v1516, 0
      %v1532 = vsel %vm412, %v1517, 0
      %v1535 = vsel %vm412, %v1518, 0
      %v1538 = vsel %vm412, %v1519, 0
      %v1541 = vsel %vm412, %v1520, 0
      %v1544 = vsel %vm412, %v1521, 0
      %v1547 = vsel %vm412, %v1522, 0
      %v1550 = vsel %vm674, %v1524, 0
      %1552 = vmatprep.subr.mxu0 0.0
      %1553 = vmatpush1.msra.mxu0 %v1550
      %1554 = vmatprep.subr.mxu0 0.0
      %1555 = vmatpush1.msra.mxu0 0.0
      %1556 = vmatprep.subr.mxu0 0.0
      %1557 = vmatpush1.msra.mxu0 0.0
      %1558 = vmatprep.subr.mxu0 0.0
      %1559 = vmatpush1.msra.mxu0 0.0
      %1560 = vmatprep.subr.mxu0 0.0
      %1561 = vmatpush1.msra.mxu0 0.0
      %1562 = vmatprep.subr.mxu0 0.0
      %1563 = vmatpush1.msra.mxu0 0.0
      %1564 = vmatprep.subr.mxu0 0.0
      %1565 = vmatpush1.msra.mxu0 0.0
      %1566 = vmatprep.subr.mxu0 0.0
      %1567 = vmatpush1.msra.mxu0 0.0
      %1568 = vmatprep.subr.mxu0 0.0
      %1569 = vmatpush1.msra.mxu0 0.0
      %1570 = vmatprep.subr.mxu0 0.0
      %1571 = vmatpush1.msra.mxu0 0.0
      %1572 = vmatprep.subr.mxu0 0.0
      %1573 = vmatpush1.msra.mxu0 0.0
      %1574 = vmatprep.subr.mxu0 0.0
      %1575 = vmatpush1.msra.mxu0 0.0
      %1576 = vmatprep.subr.mxu0 0.0
      %1577 = vmatpush1.msra.mxu0 0.0
      %1578 = vmatprep.subr.mxu0 0.0
      %1579 = vmatpush1.msra.mxu0 0.0
      %1580 = vmatprep.subr.mxu0 0.0
      %1581 = vmatpush1.msra.mxu0 0.0
      %1582 = vmatprep.subr.mxu0 0.0
      %1583 = vmatpush1.msra.mxu0 0.0
      %1584 = vmatprep.subr.mxu0 0.0
      %1585 = vmatpush1.msra.mxu0 0.0
      %1586 = vmatprep.subr.mxu0 0.0
      %1587 = vmatpush1.msra.mxu0 0.0
      %1588 = vmatprep.subr.mxu0 0.0
      %1589 = vmatpush1.msra.mxu0 0.0
      %1590 = vmatprep.subr.mxu0 0.0
      %1591 = vmatpush1.msra.mxu0 0.0
      %1592 = vmatprep.subr.mxu0 0.0
      %1593 = vmatpush1.msra.mxu0 0.0
      %1594 = vmatprep.subr.mxu0 0.0
      %1595 = vmatpush1.msra.mxu0 0.0
      %1596 = vmatprep.subr.mxu0 0.0
      %1597 = vmatpush1.msra.mxu0 0.0
      %1598 = vmatprep.subr.mxu0 0.0
      %1599 = vmatpush1.msra.mxu0 0.0
      %1600 = vmatprep.subr.mxu0 0.0
      %1601 = vmatpush1.msra.mxu0 0.0
      %1602 = vmatprep.subr.mxu0 0.0
      %1603 = vmatpush1.msra.mxu0 0.0
      %1604 = vmatprep.subr.mxu0 0.0
      %1605 = vmatpush1.msra.mxu0 0.0
      %1606 = vmatprep.subr.mxu0 0.0
      %1607 = vmatpush1.msra.mxu0 0.0
      %1608 = vmatprep.subr.mxu0 0.0
      %1609 = vmatpush1.msra.mxu0 0.0
      %1610 = vmatprep.subr.mxu0 0.0
      %1611 = vmatpush1.msra.mxu0 0.0
      %1612 = vmatprep.subr.mxu0 0.0
      %1613 = vmatpush1.msra.mxu0 0.0
      %1614 = vmatprep.subr.mxu0 0.0
      %1615 = vmatpush1.msra.mxu0 0.0
      %1616 = vmatprep.mubr.f32.mxu0 0.0
      %1617 = vmatmul.mubr.f32.gmra.mrb[0].mxu0 %v1526
      %v1618 = vpop.f32.mrb[0].mxu0
      %v1619 = vadd.f32 0.0, %v1618
      %v1620 = vpop.f32.mrb[0].mxu0
      %1621 = vmatprep.mubr.f32.mxu0 0.0
      %1622 = vmatmul.mubr.f32.gmra.mrb[0].mxu0 %v1529
      %v1623 = vpop.f32.mrb[0].mxu0
      %v1624 = vadd.f32 0.0, %v1623
      %v1625 = vpop.f32.mrb[0].mxu0
      %1626 = vmatprep.mubr.f32.mxu0 0.0
      %1627 = vmatmul.mubr.f32.gmra.mrb[0].mxu0 %v1532
      %v1628 = vpop.f32.mrb[0].mxu0
      %v1629 = vadd.f32 0.0, %v1628
      %v1630 = vpop.f32.mrb[0].mxu0
      %1631 = vmatprep.mubr.f32.mxu0 0.0
      %1632 = vmatmul.mubr.f32.gmra.mrb[0].mxu0 %v1535
      %v1633 = vpop.f32.mrb[0].mxu0
      %v1634 = vadd.f32 0.0, %v1633
      %v1635 = vpop.f32.mrb[0].mxu0
      %1636 = vmatprep.mubr.f32.mxu0 0.0
      %1637 = vmatmul.mubr.f32.gmra.mrb[0].mxu0 %v1538
      %v1638 = vpop.f32.mrb[0].mxu0
      %v1639 = vadd.f32 0.0, %v1638
      %v1640 = vpop.f32.mrb[0].mxu0
      %1641 = vmatprep.mubr.f32.mxu0 0.0
      %1642 = vmatmul.mubr.f32.gmra.mrb[0].mxu0 %v1541
      %v1643 = vpop.f32.mrb[0].mxu0
      %v1644 = vadd.f32 0.0, %v1643
      %v1645 = vpop.f32.mrb[0].mxu0
      %1646 = vmatprep.mubr.f32.mxu0 0.0
      %1647 = vmatmul.mubr.f32.gmra.mrb[0].mxu0 %v1544
      %v1648 = vpop.f32.mrb[0].mxu0
      %v1649 = vadd.f32 0.0, %v1648
      %v1650 = vpop.f32.mrb[0].mxu0
      %1651 = vmatprep.mubr.f32.mxu0 0.0
      %1652 = vmatmul.mubr.f32.gmra.mrb[0].mxu0 %v1547
      %v1653 = vpop.f32.mrb[0].mxu0
      %v1654 = vadd.f32 0.0, %v1653
      %v1655 = vpop.f32.mrb[0].mxu0
      %1656 = vdwg.mxu0
      %v1657 = vadd.f32 %v1507, %v1619
      %v1658 = vadd.f32 %v1508, %v1624
      %v1659 = vadd.f32 %v1509, %v1629
      %v1660 = vadd.f32 %v1510, %v1634
      %v1661 = vadd.f32 %v1511, %v1639
      %v1662 = vadd.f32 %v1512, %v1644
      %v1663 = vadd.f32 %v1513, %v1649
      %v1664 = vadd.f32 %v1514, %v1654
      %v1665 = vld [vmem:[%s542] sm:$0xff]
      %v1666 = vld [vmem:[%s542 + $0x8] sm:$0xff]
      %v1667 = vld [vmem:[%s542 + $0x10] sm:$0xff]
      %v1668 = vld [vmem:[%s542 + $0x18] sm:$0xff]
      %v1669 = vld [vmem:[%s542 + $0x20] sm:$0xff]
      %v1670 = vld [vmem:[%s542 + $0x28] sm:$0xff]
      %v1671 = vld [vmem:[%s542 + $0x30] sm:$0xff]
      %v1672 = vld [vmem:[%s542 + $0x38] sm:$0xff]
      %s1673 = scalar_lea.vmem %s6, 28
      %v1674 = vld [vmem:[%s1673] sm:$0xf]
      %v1676 = vsel %vm412, %v1665, 0
      %v1679 = vsel %vm412, %v1666, 0
      %v1682 = vsel %vm412, %v1667, 0
      %v1685 = vsel %vm412, %v1668, 0
      %v1688 = vsel %vm412, %v1669, 0
      %v1691 = vsel %vm412, %v1670, 0
      %v1694 = vsel %vm412, %v1671, 0
      %v1697 = vsel %vm412, %v1672, 0
      %v1700 = vsel %vm674, %v1674, 0
      %1702 = vmatprep.subr.mxu0 0.0
      %1703 = vmatpush1.msra.mxu0 %v1700
      %1704 = vmatprep.subr.mxu0 0.0
      %1705 = vmatpush1.msra.mxu0 0.0
      %1706 = vmatprep.subr.mxu0 0.0
      %1707 = vmatpush1.msra.mxu0 0.0
      %1708 = vmatprep.subr.mxu0 0.0
      %1709 = vmatpush1.msra.mxu0 0.0
      %1710 = vmatprep.subr.mxu0 0.0
      %1711 = vmatpush1.msra.mxu0 0.0
      %1712 = vmatprep.subr.mxu0 0.0
      %1713 = vmatpush1.msra.mxu0 0.0
      %1714 = vmatprep.subr.mxu0 0.0
      %1715 = vmatpush1.msra.mxu0 0.0
      %1716 = vmatprep.subr.mxu0 0.0
      %1717 = vmatpush1.msra.mxu0 0.0
      %1718 = vmatprep.subr.mxu0 0.0
      %1719 = vmatpush1.msra.mxu0 0.0
      %1720 = vmatprep.subr.mxu0 0.0
      %1721 = vmatpush1.msra.mxu0 0.0
      %1722 = vmatprep.subr.mxu0 0.0
      %1723 = vmatpush1.msra.mxu0 0.0
      %1724 = vmatprep.subr.mxu0 0.0
      %1725 = vmatpush1.msra.mxu0 0.0
      %1726 = vmatprep.subr.mxu0 0.0
      %1727 = vmatpush1.msra.mxu0 0.0
      %1728 = vmatprep.subr.mxu0 0.0
      %1729 = vmatpush1.msra.mxu0 0.0
      %1730 = vmatprep.subr.mxu0 0.0
      %1731 = vmatpush1.msra.mxu0 0.0
      %1732 = vmatprep.subr.mxu0 0.0
      %1733 = vmatpush1.msra.mxu0 0.0
      %1734 = vmatprep.subr.mxu0 0.0
      %1735 = vmatpush1.msra.mxu0 0.0
      %1736 = vmatprep.subr.mxu0 0.0
      %1737 = vmatpush1.msra.mxu0 0.0
      %1738 = vmatprep.subr.mxu0 0.0
      %1739 = vmatpush1.msra.mxu0 0.0
      %1740 = vmatprep.subr.mxu0 0.0
      %1741 = vmatpush1.msra.mxu0 0.0
      %1742 = vmatprep.subr.mxu0 0.0
      %1743 = vmatpush1.msra.mxu0 0.0
      %1744 = vmatprep.subr.mxu0 0.0
      %1745 = vmatpush1.msra.mxu0 0.0
      %1746 = vmatprep.subr.mxu0 0.0
      %1747 = vmatpush1.msra.mxu0 0.0
      %1748 = vmatprep.subr.mxu0 0.0
      %1749 = vmatpush1.msra.mxu0 0.0
      %1750 = vmatprep.subr.mxu0 0.0
      %1751 = vmatpush1.msra.mxu0 0.0
      %1752 = vmatprep.subr.mxu0 0.0
      %1753 = vmatpush1.msra.mxu0 0.0
      %1754 = vmatprep.subr.mxu0 0.0
      %1755 = vmatpush1.msra.mxu0 0.0
      %1756 = vmatprep.subr.mxu0 0.0
      %1757 = vmatpush1.msra.mxu0 0.0
      %1758 = vmatprep.subr.mxu0 0.0
      %1759 = vmatpush1.msra.mxu0 0.0
      %1760 = vmatprep.subr.mxu0 0.0
      %1761 = vmatpush1.msra.mxu0 0.0
      %1762 = vmatprep.subr.mxu0 0.0
      %1763 = vmatpush1.msra.mxu0 0.0
      %1764 = vmatprep.subr.mxu0 0.0
      %1765 = vmatpush1.msra.mxu0 0.0
      %1766 = vmatprep.mubr.f32.mxu0 0.0
      %1767 = vmatmul.mubr.f32.gmra.mrb[0].mxu0 %v1676
      %v1768 = vpop.f32.mrb[0].mxu0
      %v1769 = vadd.f32 0.0, %v1768
      %v1770 = vpop.f32.mrb[0].mxu0
      %1771 = vmatprep.mubr.f32.mxu0 0.0
      %1772 = vmatmul.mubr.f32.gmra.mrb[0].mxu0 %v1679
      %v1773 = vpop.f32.mrb[0].mxu0
      %v1774 = vadd.f32 0.0, %v1773
      %v1775 = vpop.f32.mrb[0].mxu0
      %1776 = vmatprep.mubr.f32.mxu0 0.0
      %1777 = vmatmul.mubr.f32.gmra.mrb[0].mxu0 %v1682
      %v1778 = vpop.f32.mrb[0].mxu0
      %v1779 = vadd.f32 0.0, %v1778
      %v1780 = vpop.f32.mrb[0].mxu0
      %1781 = vmatprep.mubr.f32.mxu0 0.0
      %1782 = vmatmul.mubr.f32.gmra.mrb[0].mxu0 %v1685
      %v1783 = vpop.f32.mrb[0].mxu0
      %v1784 = vadd.f32 0.0, %v1783
      %v1785 = vpop.f32.mrb[0].mxu0
      %1786 = vmatprep.mubr.f32.mxu0 0.0
      %1787 = vmatmul.mubr.f32.gmra.mrb[0].mxu0 %v1688
      %v1788 = vpop.f32.mrb[0].mxu0
      %v1789 = vadd.f32 0.0, %v1788
      %v1790 = vpop.f32.mrb[0].mxu0
      %1791 = vmatprep.mubr.f32.mxu0 0.0
      %1792 = vmatmul.mubr.f32.gmra.mrb[0].mxu0 %v1691
      %v1793 = vpop.f32.mrb[0].mxu0
      %v1794 = vadd.f32 0.0, %v1793
      %v1795 = vpop.f32.mrb[0].mxu0
      %1796 = vmatprep.mubr.f32.mxu0 0.0
      %1797 = vmatmul.mubr.f32.gmra.mrb[0].mxu0 %v1694
      %v1798 = vpop.f32.mrb[0].mxu0
      %v1799 = vadd.f32 0.0, %v1798
      %v1800 = vpop.f32.mrb[0].mxu0
      %1801 = vmatprep.mubr.f32.mxu0 0.0
      %1802 = vmatmul.mubr.f32.gmra.mrb[0].mxu0 %v1697
      %v1803 = vpop.f32.mrb[0].mxu0
      %v1804 = vadd.f32 0.0, %v1803
      %v1805 = vpop.f32.mrb[0].mxu0
      %1806 = vdwg.mxu0
      %v1807 = vadd.f32 %v1657, %v1769
      %v1808 = vadd.f32 %v1658, %v1774
      %v1809 = vadd.f32 %v1659, %v1779
      %v1810 = vadd.f32 %v1660, %v1784
      %v1811 = vadd.f32 %v1661, %v1789
      %v1812 = vadd.f32 %v1662, %v1794
      %v1813 = vadd.f32 %v1663, %v1799
      %v1814 = vadd.f32 %v1664, %v1804
      %v1815 = vld [vmem:[%s501 + $0x1] sm:$0xff]
      %v1816 = vld [vmem:[%s501 + $0x11] sm:$0xff]
      %v1817 = vld [vmem:[%s501 + $0x21] sm:$0xff]
      %v1818 = vld [vmem:[%s501 + $0x31] sm:$0xff]
      %v1819 = vld [vmem:[%s501 + $0x41] sm:$0xff]
      %v1820 = vld [vmem:[%s501 + $0x51] sm:$0xff]
      %v1821 = vld [vmem:[%s501 + $0x61] sm:$0xff]
      %v1822 = vld [vmem:[%s501 + $0x71] sm:$0xff]
      %s1823 = scalar_lea.vmem %s6, 32
      %v1824 = vld [vmem:[%s1823] sm:$0xf]
      %v1826 = vsel %vm412, %v1815, 0
      %v1829 = vsel %vm412, %v1816, 0
      %v1832 = vsel %vm412, %v1817, 0
      %v1835 = vsel %vm412, %v1818, 0
      %v1838 = vsel %vm412, %v1819, 0
      %v1841 = vsel %vm412, %v1820, 0
      %v1844 = vsel %vm412, %v1821, 0
      %v1847 = vsel %vm412, %v1822, 0
      %v1850 = vsel %vm674, %v1824, 0
      %1852 = vmatprep.subr.mxu0 0.0
      %1853 = vmatpush1.msra.mxu0 %v1850
      %1854 = vmatprep.subr.mxu0 0.0
      %1855 = vmatpush1.msra.mxu0 0.0
      %1856 = vmatprep.subr.mxu0 0.0
      %1857 = vmatpush1.msra.mxu0 0.0
      %1858 = vmatprep.subr.mxu0 0.0
      %1859 = vmatpush1.msra.mxu0 0.0
      %1860 = vmatprep.subr.mxu0 0.0
      %1861 = vmatpush1.msra.mxu0 0.0
      %1862 = vmatprep.subr.mxu0 0.0
      %1863 = vmatpush1.msra.mxu0 0.0
      %1864 = vmatprep.subr.mxu0 0.0
      %1865 = vmatpush1.msra.mxu0 0.0
      %1866 = vmatprep.subr.mxu0 0.0
      %1867 = vmatpush1.msra.mxu0 0.0
      %1868 = vmatprep.subr.mxu0 0.0
      %1869 = vmatpush1.msra.mxu0 0.0
      %1870 = vmatprep.subr.mxu0 0.0
      %1871 = vmatpush1.msra.mxu0 0.0
      %1872 = vmatprep.subr.mxu0 0.0
      %1873 = vmatpush1.msra.mxu0 0.0
      %1874 = vmatprep.subr.mxu0 0.0
      %1875 = vmatpush1.msra.mxu0 0.0
      %1876 = vmatprep.subr.mxu0 0.0
      %1877 = vmatpush1.msra.mxu0 0.0
      %1878 = vmatprep.subr.mxu0 0.0
      %1879 = vmatpush1.msra.mxu0 0.0
      %1880 = vmatprep.subr.mxu0 0.0
      %1881 = vmatpush1.msra.mxu0 0.0
      %1882 = vmatprep.subr.mxu0 0.0
      %1883 = vmatpush1.msra.mxu0 0.0
      %1884 = vmatprep.subr.mxu0 0.0
      %1885 = vmatpush1.msra.mxu0 0.0
      %1886 = vmatprep.subr.mxu0 0.0
      %1887 = vmatpush1.msra.mxu0 0.0
      %1888 = vmatprep.subr.mxu0 0.0
      %1889 = vmatpush1.msra.mxu0 0.0
      %1890 = vmatprep.subr.mxu0 0.0
      %1891 = vmatpush1.msra.mxu0 0.0
      %1892 = vmatprep.subr.mxu0 0.0
      %1893 = vmatpush1.msra.mxu0 0.0
      %1894 = vmatprep.subr.mxu0 0.0
      %1895 = vmatpush1.msra.mxu0 0.0
      %1896 = vmatprep.subr.mxu0 0.0
      %1897 = vmatpush1.msra.mxu0 0.0
      %1898 = vmatprep.subr.mxu0 0.0
      %1899 = vmatpush1.msra.mxu0 0.0
      %1900 = vmatprep.subr.mxu0 0.0
      %1901 = vmatpush1.msra.mxu0 0.0
      %1902 = vmatprep.subr.mxu0 0.0
      %1903 = vmatpush1.msra.mxu0 0.0
      %1904 = vmatprep.subr.mxu0 0.0
      %1905 = vmatpush1.msra.mxu0 0.0
      %1906 = vmatprep.subr.mxu0 0.0
      %1907 = vmatpush1.msra.mxu0 0.0
      %1908 = vmatprep.subr.mxu0 0.0
      %1909 = vmatpush1.msra.mxu0 0.0
      %1910 = vmatprep.subr.mxu0 0.0
      %1911 = vmatpush1.msra.mxu0 0.0
      %1912 = vmatprep.subr.mxu0 0.0
      %1913 = vmatpush1.msra.mxu0 0.0
      %1914 = vmatprep.subr.mxu0 0.0
      %1915 = vmatpush1.msra.mxu0 0.0
      %1916 = vmatprep.mubr.f32.mxu0 0.0
      %1917 = vmatmul.mubr.f32.gmra.mrb[0].mxu0 %v1826
      %v1918 = vpop.f32.mrb[0].mxu0
      %v1919 = vadd.f32 0.0, %v1918
      %v1920 = vpop.f32.mrb[0].mxu0
      %1921 = vmatprep.mubr.f32.mxu0 0.0
      %1922 = vmatmul.mubr.f32.gmra.mrb[0].mxu0 %v1829
      %v1923 = vpop.f32.mrb[0].mxu0
      %v1924 = vadd.f32 0.0, %v1923
      %v1925 = vpop.f32.mrb[0].mxu0
      %1926 = vmatprep.mubr.f32.mxu0 0.0
      %1927 = vmatmul.mubr.f32.gmra.mrb[0].mxu0 %v1832
      %v1928 = vpop.f32.mrb[0].mxu0
      %v1929 = vadd.f32 0.0, %v1928
      %v1930 = vpop.f32.mrb[0].mxu0
      %1931 = vmatprep.mubr.f32.mxu0 0.0
      %1932 = vmatmul.mubr.f32.gmra.mrb[0].mxu0 %v1835
      %v1933 = vpop.f32.mrb[0].mxu0
      %v1934 = vadd.f32 0.0, %v1933
      %v1935 = vpop.f32.mrb[0].mxu0
      %1936 = vmatprep.mubr.f32.mxu0 0.0
      %1937 = vmatmul.mubr.f32.gmra.mrb[0].mxu0 %v1838
      %v1938 = vpop.f32.mrb[0].mxu0
      %v1939 = vadd.f32 0.0, %v1938
      %v1940 = vpop.f32.mrb[0].mxu0
      %1941 = vmatprep.mubr.f32.mxu0 0.0
      %1942 = vmatmul.mubr.f32.gmra.mrb[0].mxu0 %v1841
      %v1943 = vpop.f32.mrb[0].mxu0
      %v1944 = vadd.f32 0.0, %v1943
      %v1945 = vpop.f32.mrb[0].mxu0
      %1946 = vmatprep.mubr.f32.mxu0 0.0
      %1947 = vmatmul.mubr.f32.gmra.mrb[0].mxu0 %v1844
      %v1948 = vpop.f32.mrb[0].mxu0
      %v1949 = vadd.f32 0.0, %v1948
      %v1950 = vpop.f32.mrb[0].mxu0
      %1951 = vmatprep.mubr.f32.mxu0 0.0
      %1952 = vmatmul.mubr.f32.gmra.mrb[0].mxu0 %v1847
      %v1953 = vpop.f32.mrb[0].mxu0
      %v1954 = vadd.f32 0.0, %v1953
      %v1955 = vpop.f32.mrb[0].mxu0
      %1956 = vdwg.mxu0
      %v1957 = vadd.f32 %v1807, %v1919
      %v1958 = vadd.f32 %v1808, %v1924
      %v1959 = vadd.f32 %v1809, %v1929
      %v1960 = vadd.f32 %v1810, %v1934
      %v1961 = vadd.f32 %v1811, %v1939
      %v1962 = vadd.f32 %v1812, %v1944
      %v1963 = vadd.f32 %v1813, %v1949
      %v1964 = vadd.f32 %v1814, %v1954
      %1965 = vst.msk [vmem:[%s403] sm:$0xff] %vm412, %v1957
      %1966 = vst.msk [vmem:[%s403 + $0x8] sm:$0xff] %vm412, %v1958
      %1967 = vst.msk [vmem:[%s403 + $0x10] sm:$0xff] %vm412, %v1959
      %1968 = vst.msk [vmem:[%s403 + $0x18] sm:$0xff] %vm412, %v1960
      %1969 = vst.msk [vmem:[%s403 + $0x20] sm:$0xff] %vm412, %v1961
      %1970 = vst.msk [vmem:[%s403 + $0x28] sm:$0xff] %vm412, %v1962
      %1971 = vst.msk [vmem:[%s403 + $0x30] sm:$0xff] %vm412, %v1963
      %1972 = vst.msk [vmem:[%s403 + $0x38] sm:$0xff] %vm412, %v1964
      %v1973 = vsel %vm412, %v1957, 0.0
      %v1974 = vsel %vm412, %v1958, 0.0
      %v1975 = vadd.f32 %v1973, %v1974
      %v1976 = vsel %vm412, %v1959, 0.0
      %v1977 = vadd.f32 %v1975, %v1976
      %v1978 = vsel %vm412, %v1960, 0.0
      %v1979 = vadd.f32 %v1977, %v1978
      %v1980 = vsel %vm412, %v1961, 0.0
      %v1981 = vadd.f32 %v1979, %v1980
      %v1982 = vsel %vm412, %v1962, 0.0
      %v1983 = vadd.f32 %v1981, %v1982
      %v1984 = vsel %vm412, %v1963, 0.0
      %v1985 = vadd.f32 %v1983, %v1984
      %v1986 = vsel %vm412, %v1964, 0.0
      %v1987 = vadd.f32 %v1985, %v1986
      %v1988 = vrot.slane %v1987, 4
      %v1989 = vadd.f32 %v1987, %v1988
      %v1990 = vrot.slane %v1989, 2
      %v1991 = vadd.f32 %v1989, %v1990
      %v1992 = vrot.slane %v1991, 1
      %v1993 = vadd.f32 %v1991, %v1992
      %v1994 = vadd.f32 %v1993, 0.0
      %v1995 = vmul.f32 %v1957, %v1957
      %v1996 = vmul.f32 %v1958, %v1958
      %v1997 = vmul.f32 %v1959, %v1959
      %v1998 = vmul.f32 %v1960, %v1960
      %v1999 = vmul.f32 %v1961, %v1961
      %v2000 = vmul.f32 %v1962, %v1962
      %v2001 = vmul.f32 %v1963, %v1963
      %v2002 = vmul.f32 %v1964, %v1964
      %v2003 = vsel %vm412, %v1995, 0.0
      %v2004 = vsel %vm412, %v1996, 0.0
      %v2005 = vadd.f32 %v2003, %v2004
      %v2006 = vsel %vm412, %v1997, 0.0
      %v2007 = vadd.f32 %v2005, %v2006
      %v2008 = vsel %vm412, %v1998, 0.0
      %v2009 = vadd.f32 %v2007, %v2008
      %v2010 = vsel %vm412, %v1999, 0.0
      %v2011 = vadd.f32 %v2009, %v2010
      %v2012 = vsel %vm412, %v2000, 0.0
      %v2013 = vadd.f32 %v2011, %v2012
      %v2014 = vsel %vm412, %v2001, 0.0
      %v2015 = vadd.f32 %v2013, %v2014
      %v2016 = vsel %vm412, %v2002, 0.0
      %v2017 = vadd.f32 %v2015, %v2016
      %v2018 = vrot.slane %v2017, 4
      %v2019 = vadd.f32 %v2017, %v2018
      %v2020 = vrot.slane %v2019, 2
      %v2021 = vadd.f32 %v2019, %v2020
      %v2022 = vrot.slane %v2021, 1
      %v2023 = vadd.f32 %v2021, %v2022
      %v2024 = vadd.f32 %v2023, 0.0
      %2025 = vst.msk [vmem:[%s406] sm:$0x1] %vm414, %v1994
      %2026 = vst.msk [vmem:[%s409] sm:$0x1] %vm414, %v2024
      %p2027 = scmp.lt.s32.totalorder %s21, 1
      %s2028 = scalar_select %p2027, %s21, 1
      %s2029 = smul.addr %s2028, 8
      %s2030 = smul.addr %s2029, 8
      %s2031 = scalar_lea.vmem %s7, %s2030
      %p2032 = scmp.lt.s32.totalorder %s21, 1
      %s2033 = scalar_select %p2032, %s21, 1
      %s2034 = scalar_lea.vmem %s8, %s2033
      %p2035 = scmp.lt.s32.totalorder %s21, 1
      %s2036 = scalar_select %p2035, %s21, 1
      %s2037 = scalar_lea.vmem %s9, %s2036
      // Predicated region
      $region49: #{_unnamed_function_.6} parent=47 // pred_check
        %p2038 = pneg %p206
      $region50: #{_unnamed_function_.6} parent=47 // pred_check_branch
        %2040 = sbr.rel (%p2038) target = $region52
      $region51: #{_unnamed_function_.6} parent=47 // pred_region
        _
      $region52: #{_unnamed_function_.6} parent=47 // pred_fallthru
        _
      // Predicated region
      $region53: #{_unnamed_function_.6} parent=47 // pred_check
        %p2041 = pneg %p232
      $region54: #{_unnamed_function_.6} parent=47 // pred_check_branch
        %2043 = sbr.rel (%p2041) target = $region56
      $region55: #{_unnamed_function_.6} parent=47 // pred_region
        _
      $region56: #{_unnamed_function_.6} parent=47 // pred_fallthru
        _
      // Predicated region
      $region57: #{_unnamed_function_.6} parent=47 // pred_check
        %p2044 = pneg %p258
      $region58: #{_unnamed_function_.6} parent=47 // pred_check_branch
        %2046 = sbr.rel (%p2044) target = $region60
      $region59: #{_unnamed_function_.6} parent=47 // pred_region
        _
      $region60: #{_unnamed_function_.6} parent=47 // pred_fallthru
        _
    $region48: #{_unnamed_function_.6} parent=5 // pred_fallthru
      _
    %p2047 = scmp.le.s32.totalorder 2, %s16
    // Predicated region
    $region61: #{_unnamed_function_.6} parent=5 // pred_check
      %p2048 = pneg %p2047
    $region62: #{_unnamed_function_.6} parent=5 // pred_check_branch
      %2050 = sbr.rel (%p2048) target = $region64
    $region63: #{_unnamed_function_.6} parent=5 // pred_region
      %s2051 = ssub.s32 %s16, 2
      // Predicated region
      $region65: #{_unnamed_function_.6} parent=63 // pred_check
        %p2052 = pneg %p212
      $region66: #{_unnamed_function_.6} parent=63 // pred_check_branch
        %2054 = sbr.rel (%p2052) target = $region68
      $region67: #{_unnamed_function_.6} parent=63 // pred_region
        %p2055 = scmp.lt.s32.totalorder %s22, 1
        %s2056 = scalar_select %p2055, %s22, 1
        %s2057 = smul.addr %s2056, 8
        %s2058 = smul.addr %s2057, 8
        %s2059 = scalar_lea.vmem %s7, %s2058
      $region68: #{_unnamed_function_.6} parent=63 // pred_fallthru
        _
      // Predicated region
      $region69: #{_unnamed_function_.6} parent=63 // pred_check
        %p2060 = pneg %p238
      $region70: #{_unnamed_function_.6} parent=63 // pred_check_branch
        %2062 = sbr.rel (%p2060) target = $region72
      $region71: #{_unnamed_function_.6} parent=63 // pred_region
        %p2063 = scmp.lt.s32.totalorder %s22, 1
        %s2064 = scalar_select %p2063, %s22, 1
        %s2065 = scalar_lea.vmem %s8, %s2064
      $region72: #{_unnamed_function_.6} parent=63 // pred_fallthru
        _
      // Predicated region
      $region73: #{_unnamed_function_.6} parent=63 // pred_check
        %p2066 = pneg %p264
      $region74: #{_unnamed_function_.6} parent=63 // pred_check_branch
        %2068 = sbr.rel (%p2066) target = $region76
      $region75: #{_unnamed_function_.6} parent=63 // pred_region
        %p2069 = scmp.lt.s32.totalorder %s22, 1
        %s2070 = scalar_select %p2069, %s22, 1
        %s2071 = scalar_lea.vmem %s9, %s2070
      $region76: #{_unnamed_function_.6} parent=63 // pred_fallthru
        _
    $region64: #{_unnamed_function_.6} parent=5 // pred_fallthru
      _
  $region6: #{_unnamed_function_.6} parent=0 // loop_footer
    %s20 = sadd.s32 1, %s16
  $region7: #{_unnamed_function_.6} parent=0 // loop_footer_branch
    %15 = sbr.rel target = $region3
  $region8: #{_unnamed_function_.6} parent=0 // loop_exit
    _

// kernel: _unnamed_function_.9
$region0: #{_unnamed_function_.9}
  #allocation0 [shape = 'u32[]', space=smem, size = 0x4, offset = 0x4, fixed_abs, tag = 'smem constant byte address 0x4 - core index']
  #allocation1 [shape = 'u32[144,128]{1,0:T(1,128)}', space=vmem, size = 0x12000, scoped, tag = 'internal scratch']
  %s0 = inlined_call_operand.vmem [shape: f32[128,8], index: 0, kind: input, shape index: {}]
  %s1 = inlined_call_operand.vmem [shape: f32[1,8], index: 1, kind: input, shape index: {}]
  %s2 = inlined_call_operand.vmem [shape: f32[1,8], index: 2, kind: input, shape index: {}]
  %s3 = inlined_call_operand.vmem [shape: f32[128,8], index: 3, kind: input, shape index: {}]
  %s4 = inlined_call_operand.vmem [shape: f32[1,8], index: 4, kind: input, shape index: {}]
  %s5 = inlined_call_operand.vmem [shape: f32[1,8], index: 5, kind: input, shape index: {}]
  %s6 = inlined_call_operand.vmem [shape: f32[128,8], index: 6, kind: output, shape index: {}]
  %s7 = sld [smem:[#allocation0]]
  $region34: #{_unnamed_function_.9} parent=0
    _
  %s9 = ssub.s32 1, %s7
  %s10 = scalar_select 0, %s9, %s7
  // Predicated region
  $region2: #{_unnamed_function_.9} parent=0 // pred_check
    _
  $region3: #{_unnamed_function_.9} parent=0 // pred_check_branch
    %12 = sbr.rel (0) target = $region5
  $region4: #{_unnamed_function_.9} parent=0 // pred_region
    _
  $region5: #{_unnamed_function_.9} parent=0 // pred_fallthru
    _
  // Predicated region
  $region6: #{_unnamed_function_.9} parent=0 // pred_check
    _
  $region7: #{_unnamed_function_.9} parent=0 // pred_check_branch
    %14 = sbr.rel (0) target = $region9
  $region8: #{_unnamed_function_.9} parent=0 // pred_region
    _
  $region9: #{_unnamed_function_.9} parent=0 // pred_fallthru
    _
  // Predicated region
  $region10: #{_unnamed_function_.9} parent=0 // pred_check
    _
  $region11: #{_unnamed_function_.9} parent=0 // pred_check_branch
    %16 = sbr.rel (0) target = $region13
  $region12: #{_unnamed_function_.9} parent=0 // pred_region
    _
  $region13: #{_unnamed_function_.9} parent=0 // pred_fallthru
    _
  // Predicated region
  $region14: #{_unnamed_function_.9} parent=0 // pred_check
    _
  $region15: #{_unnamed_function_.9} parent=0 // pred_check_branch
    %18 = sbr.rel (0) target = $region17
  $region16: #{_unnamed_function_.9} parent=0 // pred_region
    _
  $region17: #{_unnamed_function_.9} parent=0 // pred_fallthru
    _
  // Predicated region
  $region18: #{_unnamed_function_.9} parent=0 // pred_check
    _
  $region19: #{_unnamed_function_.9} parent=0 // pred_check_branch
    %20 = sbr.rel (0) target = $region21
  $region20: #{_unnamed_function_.9} parent=0 // pred_region
    _
  $region21: #{_unnamed_function_.9} parent=0 // pred_fallthru
    _
  // Predicated region
  $region22: #{_unnamed_function_.9} parent=0 // pred_check
    _
  $region23: #{_unnamed_function_.9} parent=0 // pred_check_branch
    %22 = sbr.rel (0) target = $region25
  $region24: #{_unnamed_function_.9} parent=0 // pred_region
    _
  $region25: #{_unnamed_function_.9} parent=0 // pred_fallthru
    _
  %v23 = vld [vmem:[%s0] sm:$0xff]
  %v24 = vld [vmem:[%s0 + $0x8] sm:$0xff]
  %v25 = vld [vmem:[%s0 + $0x10] sm:$0xff]
  %v26 = vld [vmem:[%s0 + $0x18] sm:$0xff]
  %v27 = vld [vmem:[%s0 + $0x20] sm:$0xff]
  %v28 = vld [vmem:[%s0 + $0x28] sm:$0xff]
  %v29 = vld [vmem:[%s0 + $0x30] sm:$0xff]
  %v30 = vld [vmem:[%s0 + $0x38] sm:$0xff]
  %v31 = vld [vmem:[%s0 + $0x40] sm:$0xff]
  %v32 = vld [vmem:[%s0 + $0x48] sm:$0xff]
  %v33 = vld [vmem:[%s0 + $0x50] sm:$0xff]
  %v34 = vld [vmem:[%s0 + $0x58] sm:$0xff]
  %v35 = vld [vmem:[%s0 + $0x60] sm:$0xff]
  %v36 = vld [vmem:[%s0 + $0x68] sm:$0xff]
  %v37 = vld [vmem:[%s0 + $0x70] sm:$0xff]
  %v38 = vld [vmem:[%s0 + $0x78] sm:$0xff]
  %v39 = vld [vmem:[%s1] sm:$0x1]
  %v41 = vlaneseq
  %v42 = vshrl.u32 %v41, 7
  %v43 = vsub.s32 0, %v42
  %v44 = vrot.slane %v39, %v43
  %v46 = vmul.f32 %v23, %v44
  %v47 = vmul.f32 %v24, %v44
  %v48 = vmul.f32 %v25, %v44
  %v49 = vmul.f32 %v26, %v44
  %v50 = vmul.f32 %v27, %v44
  %v51 = vmul.f32 %v28, %v44
  %v52 = vmul.f32 %v29, %v44
  %v53 = vmul.f32 %v30, %v44
  %v54 = vmul.f32 %v31, %v44
  %v55 = vmul.f32 %v32, %v44
  %v56 = vmul.f32 %v33, %v44
  %v57 = vmul.f32 %v34, %v44
  %v58 = vmul.f32 %v35, %v44
  %v59 = vmul.f32 %v36, %v44
  %v60 = vmul.f32 %v37, %v44
  %v61 = vmul.f32 %v38, %v44
  %v62 = vld [vmem:[%s2] sm:$0x1]
  %v64 = vlaneseq
  %v65 = vshrl.u32 %v64, 7
  %v66 = vsub.s32 0, %v65
  %v67 = vrot.slane %v62, %v66
  %v69 = vadd.f32 %v46, %v67
  %v70 = vadd.f32 %v47, %v67
  %v71 = vadd.f32 %v48, %v67
  %v72 = vadd.f32 %v49, %v67
  %v73 = vadd.f32 %v50, %v67
  %v74 = vadd.f32 %v51, %v67
  %v75 = vadd.f32 %v52, %v67
  %v76 = vadd.f32 %v53, %v67
  %v77 = vadd.f32 %v54, %v67
  %v78 = vadd.f32 %v55, %v67
  %v79 = vadd.f32 %v56, %v67
  %v80 = vadd.f32 %v57, %v67
  %v81 = vadd.f32 %v58, %v67
  %v82 = vadd.f32 %v59, %v67
  %v83 = vadd.f32 %v60, %v67
  %v84 = vadd.f32 %v61, %v67
  %v85 = vld [vmem:[%s3] sm:$0xff]
  %v86 = vld [vmem:[%s3 + $0x8] sm:$0xff]
  %v87 = vld [vmem:[%s3 + $0x10] sm:$0xff]
  %v88 = vld [vmem:[%s3 + $0x18] sm:$0xff]
  %v89 = vld [vmem:[%s3 + $0x20] sm:$0xff]
  %v90 = vld [vmem:[%s3 + $0x28] sm:$0xff]
  %v91 = vld [vmem:[%s3 + $0x30] sm:$0xff]
  %v92 = vld [vmem:[%s3 + $0x38] sm:$0xff]
  %v93 = vld [vmem:[%s3 + $0x40] sm:$0xff]
  %v94 = vld [vmem:[%s3 + $0x48] sm:$0xff]
  %v95 = vld [vmem:[%s3 + $0x50] sm:$0xff]
  %v96 = vld [vmem:[%s3 + $0x58] sm:$0xff]
  %v97 = vld [vmem:[%s3 + $0x60] sm:$0xff]
  %v98 = vld [vmem:[%s3 + $0x68] sm:$0xff]
  %v99 = vld [vmem:[%s3 + $0x70] sm:$0xff]
  %v100 = vld [vmem:[%s3 + $0x78] sm:$0xff]
  %v101 = vld [vmem:[%s4] sm:$0x1]
  %v103 = vlaneseq
  %v104 = vshrl.u32 %v103, 7
  %v105 = vsub.s32 0, %v104
  %v106 = vrot.slane %v101, %v105
  %v108 = vmul.f32 %v85, %v106
  %v109 = vmul.f32 %v86, %v106
  %v110 = vmul.f32 %v87, %v106
  %v111 = vmul.f32 %v88, %v106
  %v112 = vmul.f32 %v89, %v106
  %v113 = vmul.f32 %v90, %v106
  %v114 = vmul.f32 %v91, %v106
  %v115 = vmul.f32 %v92, %v106
  %v116 = vmul.f32 %v93, %v106
  %v117 = vmul.f32 %v94, %v106
  %v118 = vmul.f32 %v95, %v106
  %v119 = vmul.f32 %v96, %v106
  %v120 = vmul.f32 %v97, %v106
  %v121 = vmul.f32 %v98, %v106
  %v122 = vmul.f32 %v99, %v106
  %v123 = vmul.f32 %v100, %v106
  %v124 = vld [vmem:[%s5] sm:$0x1]
  %v126 = vlaneseq
  %v127 = vshrl.u32 %v126, 7
  %v128 = vsub.s32 0, %v127
  %v129 = vrot.slane %v124, %v128
  %v131 = vadd.f32 %v108, %v129
  %v132 = vadd.f32 %v109, %v129
  %v133 = vadd.f32 %v110, %v129
  %v134 = vadd.f32 %v111, %v129
  %v135 = vadd.f32 %v112, %v129
  %v136 = vadd.f32 %v113, %v129
  %v137 = vadd.f32 %v114, %v129
  %v138 = vadd.f32 %v115, %v129
  %v139 = vadd.f32 %v116, %v129
  %v140 = vadd.f32 %v117, %v129
  %v141 = vadd.f32 %v118, %v129
  %v142 = vadd.f32 %v119, %v129
  %v143 = vadd.f32 %v120, %v129
  %v144 = vadd.f32 %v121, %v129
  %v145 = vadd.f32 %v122, %v129
  %v146 = vadd.f32 %v123, %v129
  %v147 = vadd.f32 %v69, %v131
  %v148 = vadd.f32 %v70, %v132
  %v149 = vadd.f32 %v71, %v133
  %v150 = vadd.f32 %v72, %v134
  %v151 = vadd.f32 %v73, %v135
  %v152 = vadd.f32 %v74, %v136
  %v153 = vadd.f32 %v75, %v137
  %v154 = vadd.f32 %v76, %v138
  %v155 = vadd.f32 %v77, %v139
  %v156 = vadd.f32 %v78, %v140
  %v157 = vadd.f32 %v79, %v141
  %v158 = vadd.f32 %v80, %v142
  %v159 = vadd.f32 %v81, %v143
  %v160 = vadd.f32 %v82, %v144
  %v161 = vadd.f32 %v83, %v145
  %v162 = vadd.f32 %v84, %v146
  %v163 = vmax.f32 %v147, 0.014
  %v164 = vmax.f32 %v148, 0.014
  %v165 = vmax.f32 %v149, 0.014
  %v166 = vmax.f32 %v150, 0.014
  %v167 = vmax.f32 %v151, 0.014
  %v168 = vmax.f32 %v152, 0.014
  %v169 = vmax.f32 %v153, 0.014
  %v170 = vmax.f32 %v154, 0.014
  %v171 = vmax.f32 %v155, 0.014
  %v172 = vmax.f32 %v156, 0.014
  %v173 = vmax.f32 %v157, 0.014
  %v174 = vmax.f32 %v158, 0.014
  %v175 = vmax.f32 %v159, 0.014
  %v176 = vmax.f32 %v160, 0.014
  %v177 = vmax.f32 %v161, 0.014
  %v178 = vmax.f32 %v162, 0.014
  %vm179 = vcmask 64512
  %180 = vst.msk [vmem:[%s6] sm:$0xff] %vm179, %v163
  %181 = vst.msk [vmem:[%s6 + $0x8] sm:$0xff] %vm179, %v164
  %182 = vst.msk [vmem:[%s6 + $0x10] sm:$0xff] %vm179, %v165
  %183 = vst.msk [vmem:[%s6 + $0x18] sm:$0xff] %vm179, %v166
  %184 = vst.msk [vmem:[%s6 + $0x20] sm:$0xff] %vm179, %v167
  %185 = vst.msk [vmem:[%s6 + $0x28] sm:$0xff] %vm179, %v168
  %186 = vst.msk [vmem:[%s6 + $0x30] sm:$0xff] %vm179, %v169
  %187 = vst.msk [vmem:[%s6 + $0x38] sm:$0xff] %vm179, %v170
  %188 = vst.msk [vmem:[%s6 + $0x40] sm:$0xff] %vm179, %v171
  %189 = vst.msk [vmem:[%s6 + $0x48] sm:$0xff] %vm179, %v172
  %190 = vst.msk [vmem:[%s6 + $0x50] sm:$0xff] %vm179, %v173
  %191 = vst.msk [vmem:[%s6 + $0x58] sm:$0xff] %vm179, %v174
  %192 = vst.msk [vmem:[%s6 + $0x60] sm:$0xff] %vm179, %v175
  %193 = vst.msk [vmem:[%s6 + $0x68] sm:$0xff] %vm179, %v176
  %194 = vst.msk [vmem:[%s6 + $0x70] sm:$0xff] %vm179, %v177
  %195 = vst.msk [vmem:[%s6 + $0x78] sm:$0xff] %vm179, %v178
  // Predicated region
  $region26: #{_unnamed_function_.9} parent=0 // pred_check
    _
  $region27: #{_unnamed_function_.9} parent=0 // pred_check_branch
    %197 = sbr.rel (0) target = $region29
  $region28: #{_unnamed_function_.9} parent=0 // pred_region
    _
  $region29: #{_unnamed_function_.9} parent=0 // pred_fallthru
    _
  // Predicated region
  $region30: #{_unnamed_function_.9} parent=0 // pred_check
    _
  $region31: #{_unnamed_function_.9} parent=0 // pred_check_branch
    %199 = sbr.rel (0) target = $region33
  $region32: #{_unnamed_function_.9} parent=0 // pred_region
    _
  $region33: #{_unnamed_function_.9} parent=0 // pred_fallthru
    _

</llo_original>
